<compile_context>
chip_gen: v5e
topology: v5e:2x2
jax: 0.10.0
libtpu: 0.0.40
codegen_flags: <defaults>
</compile_context>

<pallas_src>
import jax
import jax.numpy as jnp
from jax.experimental import pallas as pl
from jax.experimental.pallas import tpu as pltpu

# Faster R-CNN defaults (cfg.ANCHOR_SCALES / cfg.ANCHOR_RATIOS)
ANCHOR_SCALES = (8, 16, 32)
ANCHOR_RATIOS = (0.5, 1.0, 2.0)
NUM_ANCHORS = len(ANCHOR_SCALES) * len(ANCHOR_RATIOS)   # 9
HIDDEN = 512                                            # rpn_conv output depth
HEAD = 2 * NUM_ANCHORS + 4 * NUM_ANCHORS                # 54 = cls (2A) + bbox (4A)
HEAD_PAD = 128                                          # lane-dense output width


def _round_up(x, m):
    return (x + m - 1) // m * m


def _rpn_kernel(taps_ref, w3_ref, b3_ref, wh_ref, bh_ref, out_ref):
    """All refs are VMEM tiles.

    taps_ref : [TILE_HW, 9*C]   bf16 im2col rows for this row-tile
    w3_ref   : [9*C, 512]       bf16 3x3-conv weights (resident across grid)
    b3_ref   : [1, 512]         f32 conv bias
    wh_ref   : [512, 128]       bf16 fused head weights (cls | bbox | zero pad)
    bh_ref   : [1, 128]         f32 fused head bias
    out_ref  : [TILE_HW, 128]   f32 output slab: p0(A) | p1(A) | deltas(4A) | pad
    """
    A = NUM_ANCHORS

    # 3x3 conv (stride 1, pad 1) == one MXU GEMM over K = 9*C, f32 accumulation.
    acc = jnp.dot(taps_ref[...], w3_ref[...], preferred_element_type=jnp.float32)
    feat = jnp.maximum(acc + b3_ref[...], 0.0)                     # [T, 512] f32

    # Fused 1x1 convs: cls scores (2A) and bbox deltas (4A), lane-padded to 128.
    head = jnp.dot(feat.astype(wh_ref.dtype), wh_ref[...],
                   preferred_element_type=jnp.float32) + bh_ref[...]  # [T, 128]

    # Pairwise 2-class softmax: PyTorch's view(1, 2, A*H, W) pairs channel a
    # (class 0) with channel A + a (class 1) at every spatial location.
    s0 = head[:, :A]
    s1 = head[:, A:2 * A]
    m = jnp.maximum(s0, s1)
    e0 = jnp.exp(s0 - m)
    e1 = jnp.exp(s1 - m)
    inv = pl.reciprocal(e0 + e1, approx=True)

    # Single lane-dense store: [p0 | p1 | deltas + pad passthrough].
    out_ref[...] = jnp.concatenate([e0 * inv, e1 * inv, head[:, 2 * A:]], axis=-1)


def rpn_forward(base_feat, img_info, gt_boxes, params):
    """Mirrors RPN.forward (eval path). base_feat: NCHW [1, C, H, W], float32."""
    assert base_feat.shape[0] == 1, "Single batch only."
    del img_info, gt_boxes  # only used by ProposalLayer / AnchorTargetLayer
    _, C, H, W = base_feat.shape
    A = NUM_ANCHORS
    HW = H * W
    K = 9 * C

    # ---- glue: im2col in channels-last, spatially-flattened layout -------------
    x = jnp.transpose(base_feat[0], (1, 2, 0))                   # [H, W, C]
    xp = jnp.pad(x, ((1, 1), (1, 1), (0, 0)))                    # [H+2, W+2, C]
    taps = jnp.concatenate(
        [xp[dy:dy + H, dx:dx + W, :].reshape(HW, C)
         for dy in range(3) for dx in range(3)], axis=1)         # [HW, 9*C]
    # TODO(synk): for memory-bound (small-C) cases, replace the HBM-materialized
    # im2col with per-tile row-band gathers via manual DMA from the padded feature.

    # Row tiling: biggest tile that keeps double-buffering within a ~48 MiB
    # working set even at real feature sizes (and fits v7x's 64 MiB VMEM).
    TILE_HW = min(512, _round_up(HW, 8))
    HW_pad = _round_up(HW, TILE_HW)
    taps = jnp.pad(taps, ((0, HW_pad - HW), (0, 0))).astype(jnp.bfloat16)

    # ---- glue: parameter repacking (bf16 weights, f32 biases) ------------------
    w3_k = jnp.transpose(params["rpn_conv_w"], (2, 3, 1, 0)).reshape(K, HIDDEN)
    w3_k = w3_k.astype(jnp.bfloat16)                             # [9*C, 512]
    b3_k = params["rpn_conv_b"].reshape(1, HIDDEN).astype(jnp.float32)

    wc_k = jnp.transpose(params["rpn_cls_w"][:, :, 0, 0], (1, 0))   # [512, 2A]
    wb_k = jnp.transpose(params["rpn_bbox_w"][:, :, 0, 0], (1, 0))  # [512, 4A]
    wh_k = jnp.concatenate([wc_k, wb_k], axis=1)                    # [512, 54]
    wh_k = jnp.pad(wh_k, ((0, 0), (0, HEAD_PAD - HEAD))).astype(jnp.bfloat16)
    bh_k = jnp.concatenate([params["rpn_cls_b"], params["rpn_bbox_b"]])
    bh_k = jnp.pad(bh_k, (0, HEAD_PAD - HEAD)).reshape(1, HEAD_PAD)
    bh_k = bh_k.astype(jnp.float32)

    # ---- tiled, pipelined kernel call ------------------------------------------
    out = pl.pallas_call(
        _rpn_kernel,
        out_shape=jax.ShapeDtypeStruct((HW_pad, HEAD_PAD), jnp.float32),
        grid_spec=pltpu.PrefetchScalarGridSpec(
            num_scalar_prefetch=0,
            grid=(HW_pad // TILE_HW,),
            in_specs=[
                pl.BlockSpec((TILE_HW, K), lambda i: (i, 0)),        # taps (tiled)
                pl.BlockSpec((K, HIDDEN), lambda i: (0, 0)),         # w3   (resident)
                pl.BlockSpec((1, HIDDEN), lambda i: (0, 0)),         # b3   (resident)
                pl.BlockSpec((HIDDEN, HEAD_PAD), lambda i: (0, 0)),  # wh   (resident)
                pl.BlockSpec((1, HEAD_PAD), lambda i: (0, 0)),       # bh   (resident)
            ],
            out_specs=pl.BlockSpec((TILE_HW, HEAD_PAD), lambda i: (i, 0)),
        ),
        compiler_params=pltpu.CompilerParams(
            dimension_semantics=("parallel",),
            vmem_limit_bytes=48 * 1024 * 1024,
        ),
    )(taps, w3_k, b3_k, wh_k, bh_k)

    # ---- glue: unpack the lane-dense slab back to NCHW --------------------------
    out = out[:HW]
    probs_flat = out[:, :2 * A]                                  # [HW, 2A]
    deltas_flat = out[:, 2 * A:HEAD]                             # [HW, 4A]
    probs = jnp.transpose(probs_flat, (1, 0)).reshape(1, 2 * A, H, W)
    anchor_deltas = jnp.transpose(deltas_flat, (1, 0)).reshape(1, 4 * A, H, W)

    # TODO(synk): ProposalLayer (anchor grid + box decode + clip + NMS + top-k)
    # and AnchorTargetLayer (training losses) have no clean Pallas equivalent;
    # return probs / deltas and the eval-path zero losses.
    rpn_loss_cls = jnp.float32(0.0)
    rpn_loss_bbox = jnp.float32(0.0)
    return probs, anchor_deltas, rpn_loss_cls, rpn_loss_bbox


def _ref_forward(base_feat, params):
    """Pure-JAX f32 reference reproducing the PyTorch forward (eval path)."""
    A = NUM_ANCHORS
    _, _, H, W = base_feat.shape
    dn = ("NCHW", "OIHW", "NCHW")
    conv = jax.lax.conv_general_dilated(
        base_feat, params["rpn_conv_w"], (1, 1), ((1, 1), (1, 1)),
        dimension_numbers=dn) + params["rpn_conv_b"][None, :, None, None]
    conv = jax.nn.relu(conv)
    scores = jax.lax.conv_general_dilated(
        conv, params["rpn_cls_w"], (1, 1), ((0, 0), (0, 0)),
        dimension_numbers=dn) + params["rpn_cls_b"][None, :, None, None]
    scores_reshape = scores.reshape(1, 2, A * H, W)              # RPN.reshape(scores, 2)
    probs = jax.nn.softmax(scores_reshape, axis=1).reshape(1, 2 * A, H, W)
    deltas = jax.lax.conv_general_dilated(
        conv, params["rpn_bbox_w"], (1, 1), ((0, 0), (0, 0)),
        dimension_numbers=dn) + params["rpn_bbox_b"][None, :, None, None]
    return probs, deltas


if __name__ == "__main__":
    C, H, W = 32, 16, 16
    A = NUM_ANCHORS

    key = jax.random.PRNGKey(0)
    keys = jax.random.split(key, 7)
    base_feat = jax.random.normal(keys[0], (1, C, H, W), jnp.float32)
    img_info = jnp.array([H * 16.0, W * 16.0, 1.0], jnp.float32)
    gt_boxes = jnp.array([[1.0, 1.0, 8.0, 8.0, 1.0, 0.0]], jnp.float32)

    params = {
        "rpn_conv_w": 0.05 * jax.random.normal(keys[1], (HIDDEN, C, 3, 3), jnp.float32),
        "rpn_conv_b": 0.05 * jax.random.normal(keys[2], (HIDDEN,), jnp.float32),
        "rpn_cls_w": 0.05 * jax.random.normal(keys[3], (2 * A, HIDDEN, 1, 1), jnp.float32),
        "rpn_cls_b": 0.05 * jax.random.normal(keys[4], (2 * A,), jnp.float32),
        "rpn_bbox_w": 0.05 * jax.random.normal(keys[5], (4 * A, HIDDEN, 1, 1), jnp.float32),
        "rpn_bbox_b": 0.05 * jax.random.normal(keys[6], (4 * A,), jnp.float32),
    }

    probs, deltas, loss_cls, loss_bbox = jax.block_until_ready(
        rpn_forward(base_feat, img_info, gt_boxes, params))

    ref_probs, ref_deltas = _ref_forward(base_feat, params)

    assert probs.shape == (1, 2 * A, H, W)
    assert deltas.shape == (1, 4 * A, H, W)
    # bf16 inputs/weights with f32 accumulation -> slightly relaxed tolerance vs f32.
    assert jnp.allclose(probs, ref_probs, rtol=2e-2, atol=2e-2), "probs mismatch"
    assert jnp.allclose(deltas, ref_deltas, rtol=2e-2, atol=2e-2), "deltas mismatch"
    assert float(loss_cls) == 0.0 and float(loss_bbox) == 0.0

    print("KERNEL_OK")
</pallas_src>

<mosaic_0001>
module attributes {stable_mosaic.version = 11 : i64} {
  func.func @_rpn_kernel(%arg0: i32, %arg1: memref<256x288xbf16, #tpu.memory_space<vmem>>, %arg2: memref<288x512xbf16, #tpu.memory_space<vmem>>, %arg3: memref<1x512xf32, #tpu.memory_space<vmem>>, %arg4: memref<512x128xbf16, #tpu.memory_space<vmem>>, %arg5: memref<1x128xf32, #tpu.memory_space<vmem>>, %arg6: memref<256x128xf32, #tpu.memory_space<vmem>>) attributes {dimension_semantics = [#tpu.dimension_semantics<parallel>], iteration_bounds = array<i64: 1>, scalar_prefetch = 0 : i64, scratch_operands = 0 : i64, tpu.core_type = #tpu.core_type<tc>, window_params = [{transform_indices = @transform_0, window_bounds = array<i64: 256, 288>}, {pipeline_mode = #tpu.pipeline_mode<synchronous>, transform_indices = @transform_1, window_bounds = array<i64: 288, 512>}, {pipeline_mode = #tpu.pipeline_mode<synchronous>, transform_indices = @transform_2, window_bounds = array<i64: 1, 512>}, {pipeline_mode = #tpu.pipeline_mode<synchronous>, transform_indices = @transform_3, window_bounds = array<i64: 512, 128>}, {pipeline_mode = #tpu.pipeline_mode<synchronous>, transform_indices = @transform_4, window_bounds = array<i64: 1, 128>}, {transform_indices = @transform_5, window_bounds = array<i64: 256, 128>}]} {
    %c0 = arith.constant 0 : index
    %c0_0 = arith.constant 0 : index
    %0 = vector.load %arg1[%c0, %c0_0] : memref<256x288xbf16, #tpu.memory_space<vmem>>, vector<256x288xbf16>
    %c0_1 = arith.constant 0 : index
    %c0_2 = arith.constant 0 : index
    %1 = vector.load %arg2[%c0_1, %c0_2] : memref<288x512xbf16, #tpu.memory_space<vmem>>, vector<288x512xbf16>
    %cst = arith.constant dense<0.000000e+00> : vector<256x512xf32>
    %2 = tpu.matmul %0, %1, %cst {dimension_numbers = #tpu.dot_dimension_numbers<[1], [0], [0], [1], [0, 0, 1, 1], [], []>} : vector<256x288xbf16>, vector<288x512xbf16>, vector<256x512xf32> -> vector<256x512xf32>
    %c0_3 = arith.constant 0 : index
    %c0_4 = arith.constant 0 : index
    %3 = vector.load %arg3[%c0_3, %c0_4] : memref<1x512xf32, #tpu.memory_space<vmem>>, vector<1x512xf32>
    %4 = vector.broadcast %3 : vector<1x512xf32> to vector<256x512xf32>
    %5 = arith.addf %2, %4 : vector<256x512xf32>
    %cst_5 = arith.constant 0.000000e+00 : f32
    %6 = vector.broadcast %cst_5 : f32 to vector<256x512xf32>
    %7 = arith.maximumf %5, %6 : vector<256x512xf32>
    %8 = arith.truncf %7 : vector<256x512xf32> to vector<256x512xbf16>
    %c0_6 = arith.constant 0 : index
    %c0_7 = arith.constant 0 : index
    %9 = vector.load %arg4[%c0_6, %c0_7] : memref<512x128xbf16, #tpu.memory_space<vmem>>, vector<512x128xbf16>
    %cst_8 = arith.constant dense<0.000000e+00> : vector<256x128xf32>
    %10 = tpu.matmul %8, %9, %cst_8 {dimension_numbers = #tpu.dot_dimension_numbers<[1], [0], [0], [1], [0, 0, 1, 1], [], []>} : vector<256x512xbf16>, vector<512x128xbf16>, vector<256x128xf32> -> vector<256x128xf32>
    %c0_9 = arith.constant 0 : index
    %c0_10 = arith.constant 0 : index
    %11 = vector.load %arg5[%c0_9, %c0_10] : memref<1x128xf32, #tpu.memory_space<vmem>>, vector<1x128xf32>
    %12 = vector.broadcast %11 : vector<1x128xf32> to vector<256x128xf32>
    %13 = arith.addf %10, %12 : vector<256x128xf32>
    %14 = vector.extract_strided_slice %13 {offsets = [0, 0], sizes = [256, 9], strides = [1, 1]} : vector<256x128xf32> to vector<256x9xf32>
    %15 = vector.extract_strided_slice %13 {offsets = [0, 9], sizes = [256, 9], strides = [1, 1]} : vector<256x128xf32> to vector<256x9xf32>
    %16 = arith.maximumf %14, %15 : vector<256x9xf32>
    %17 = arith.subf %14, %16 : vector<256x9xf32>
    %18 = math.exp %17 : vector<256x9xf32>
    %19 = arith.subf %15, %16 : vector<256x9xf32>
    %20 = math.exp %19 : vector<256x9xf32>
    %21 = arith.addf %18, %20 : vector<256x9xf32>
    %22 = tpu.reciprocal %21 {approx = true} : vector<256x9xf32> -> vector<256x9xf32>
    %23 = arith.mulf %18, %22 : vector<256x9xf32>
    %24 = arith.mulf %20, %22 : vector<256x9xf32>
    %25 = vector.extract_strided_slice %13 {offsets = [0, 18], sizes = [256, 110], strides = [1, 1]} : vector<256x128xf32> to vector<256x110xf32>
    %26 = tpu.concatenate %23, %24, %25 in 1 : vector<256x9xf32>, vector<256x9xf32>, vector<256x110xf32> -> vector<256x128xf32>
    %c0_11 = arith.constant 0 : index
    %c0_12 = arith.constant 0 : index
    %27 = vector.load %arg6[%c0_11, %c0_12] : memref<256x128xf32, #tpu.memory_space<vmem>>, vector<256x128xf32>
    tpu.vector_store %arg6[%c0_11, %c0_12], %26 {strides = array<i32>} : memref<256x128xf32, #tpu.memory_space<vmem>>, vector<256x128xf32>,
    return
  }
  func.func @transform_0(%arg0: i32) -> (i32, i32) {
    %c0_i32 = arith.constant 0 : i32
    %c0_i32_0 = arith.constant 0 : i32
    return %arg0, %c0_i32 : i32, i32
  }
  func.func @transform_1(%arg0: i32) -> (i32, i32) {
    %c0_i32 = arith.constant 0 : i32
    %c0_i32_0 = arith.constant 0 : i32
    %c0_i32_1 = arith.constant 0 : i32
    return %c0_i32, %c0_i32_0 : i32, i32
  }
  func.func @transform_2(%arg0: i32) -> (i32, i32) {
    %c0_i32 = arith.constant 0 : i32
    %c0_i32_0 = arith.constant 0 : i32
    %c0_i32_1 = arith.constant 0 : i32
    return %c0_i32, %c0_i32_0 : i32, i32
  }
  func.func @transform_3(%arg0: i32) -> (i32, i32) {
    %c0_i32 = arith.constant 0 : i32
    %c0_i32_0 = arith.constant 0 : i32
    %c0_i32_1 = arith.constant 0 : i32
    return %c0_i32, %c0_i32_0 : i32, i32
  }
  func.func @transform_4(%arg0: i32) -> (i32, i32) {
    %c0_i32 = arith.constant 0 : i32
    %c0_i32_0 = arith.constant 0 : i32
    %c0_i32_1 = arith.constant 0 : i32
    return %c0_i32, %c0_i32_0 : i32, i32
  }
  func.func @transform_5(%arg0: i32) -> (i32, i32) {
    %c0_i32 = arith.constant 0 : i32
    %c0_i32_0 = arith.constant 0 : i32
    return %arg0, %c0_i32 : i32, i32
  }
}

</mosaic_0001>

<llo_original>
// kernel: tpu_custom_call.1
$region0: #{tpu_custom_call.1}
  #allocation0 [shape = 'u32[]', space=smem, size = 0x4, offset = 0x4, fixed_abs, tag = 'smem constant byte address 0x4 - core index']
  #allocation1 [shape = 'u32[72,128]{1,0:T(1,128)}', space=vmem, size = 0x9000, scoped, tag = 'internal scratch']
  %s0 = inlined_call_operand.vmem [shape: bf16[256,288], index: 0, kind: input, shape index: {}]
  %s1 = inlined_call_operand.vmem [shape: bf16[288,512], index: 1, kind: input, shape index: {}]
  %s2 = inlined_call_operand.vmem [shape: f32[1,512], index: 2, kind: input, shape index: {}]
  %s3 = inlined_call_operand.hbm [shape: bf16[512,128], index: 3, kind: input, shape index: {}]
  %s4 = inlined_call_operand.vmem [shape: f32[1,128], index: 4, kind: input, shape index: {}]
  %s5 = inlined_call_operand.hbm [shape: f32[256,128], index: 5, kind: output, shape index: {}]
  %s6 = sld [smem:[#allocation0]]
  $region34: #{tpu_custom_call.1} parent=0
    _
  %s8 = ssub.s32 1, %s6
  %s9 = scalar_select 0, %s8, %s6
  $region1: #{tpu_custom_call.1} parent=0
    #allocation2 [shape = 'u8[131072]{0}', space=vmem, size = 0x20000, scoped, tag = 'input window, operand 3, single buffered']
    #allocation3 [shape = 's32[1]{0}', space=sflag, size = 0x4, scoped, tag = 'scoped memory for tpu_custom_call.1']
    #allocation4 [shape = 's32[1]{0}', space=sflag, size = 0x4, scoped, tag = 'scoped memory for tpu_custom_call.1']
    #allocation5 [shape = 'u8[131072]{0}', space=vmem, size = 0x20000, scoped, tag = 'output window, operand 0, single buffered']
    %10 = vsyncpa [#allocation3], 0
    %11 = vsyncpa [#allocation4], 0
    // Predicated region
    $region2: #{tpu_custom_call.1} parent=1 // pred_check
      _
    $region3: #{tpu_custom_call.1} parent=1 // pred_check_branch
      %13 = sbr.rel (0) target = $region5
    $region4: #{tpu_custom_call.1} parent=1 // pred_region
      _
    $region5: #{tpu_custom_call.1} parent=1 // pred_fallthru
      _
    // Predicated region
    $region6: #{tpu_custom_call.1} parent=1 // pred_check
      _
    $region7: #{tpu_custom_call.1} parent=1 // pred_check_branch
      %15 = sbr.rel (0) target = $region9
    $region8: #{tpu_custom_call.1} parent=1 // pred_region
      _
    $region9: #{tpu_custom_call.1} parent=1 // pred_fallthru
      _
    // Predicated region
    $region10: #{tpu_custom_call.1} parent=1 // pred_check
      _
    $region11: #{tpu_custom_call.1} parent=1 // pred_check_branch
      %17 = sbr.rel (0) target = $region13
    $region12: #{tpu_custom_call.1} parent=1 // pred_region
      _
    $region13: #{tpu_custom_call.1} parent=1 // pred_fallthru
      _
    // Predicated region
    $region14: #{tpu_custom_call.1} parent=1 // pred_check
      _
    $region15: #{tpu_custom_call.1} parent=1 // pred_check_branch
      %19 = sbr.rel (0) target = $region17
    $region16: #{tpu_custom_call.1} parent=1 // pred_region
      %21 = vsyncadd [#allocation3], 0
      %s22 = sshll.u32 %s3, 4
      %s23 = int_to_ptr.hbm [resolvable:$true] %s22
      %s24 = sshll.u32 [#allocation2], 4
      %s25 = int_to_ptr.vmem [resolvable:$true] %s24
      %30 = dma.hbm_to_vmem [thread:$0]  %s23, 4096, %s25, [#allocation3], 64, 64, 4
    $region17: #{tpu_custom_call.1} parent=1 // pred_fallthru
      _
    // Predicated region
    $region18: #{tpu_custom_call.1} parent=1 // pred_check
      _
    $region19: #{tpu_custom_call.1} parent=1 // pred_check_branch
      %32 = sbr.rel (0) target = $region21
    $region20: #{tpu_custom_call.1} parent=1 // pred_region
      _
    $region21: #{tpu_custom_call.1} parent=1 // pred_fallthru
      _
    // Predicated region
    $region22: #{tpu_custom_call.1} parent=1 // pred_check
      _
    $region23: #{tpu_custom_call.1} parent=1 // pred_check_branch
      %34 = sbr.rel (0) target = $region25
    $region24: #{tpu_custom_call.1} parent=1 // pred_region
      %36 = dma.done [#allocation3], 4096
    $region25: #{tpu_custom_call.1} parent=1 // pred_fallthru
      _
    %v38 = vld [vmem:[%s0] sm:$0xff]
    %v39 = vld [vmem:[%s0 + $0x8] sm:$0xf]
    %v40 = vld [vmem:[%s0 + $0xc] sm:$0xff]
    %v41 = vld [vmem:[%s0 + $0x14] sm:$0xf]
    %v42 = vld [vmem:[%s0 + $0x18] sm:$0xff]
    %v43 = vld [vmem:[%s0 + $0x20] sm:$0xf]
    %v44 = vld [vmem:[%s0 + $0x24] sm:$0xff]
    %v45 = vld [vmem:[%s0 + $0x2c] sm:$0xf]
    %v46 = vld [vmem:[%s0 + $0x30] sm:$0xff]
    %v47 = vld [vmem:[%s0 + $0x38] sm:$0xf]
    %v48 = vld [vmem:[%s0 + $0x3c] sm:$0xff]
    %v49 = vld [vmem:[%s0 + $0x44] sm:$0xf]
    %v50 = vld [vmem:[%s0 + $0x48] sm:$0xff]
    %v51 = vld [vmem:[%s0 + $0x50] sm:$0xf]
    %v52 = vld [vmem:[%s0 + $0x54] sm:$0xff]
    %v53 = vld [vmem:[%s0 + $0x5c] sm:$0xf]
    %v54 = vld [vmem:[%s0 + $0x60] sm:$0xff]
    %v55 = vld [vmem:[%s0 + $0x68] sm:$0xf]
    %v56 = vld [vmem:[%s0 + $0x6c] sm:$0xff]
    %v57 = vld [vmem:[%s0 + $0x74] sm:$0xf]
    %v58 = vld [vmem:[%s0 + $0x78] sm:$0xff]
    %v59 = vld [vmem:[%s0 + $0x80] sm:$0xf]
    %v60 = vld [vmem:[%s0 + $0x84] sm:$0xff]
    %v61 = vld [vmem:[%s0 + $0x8c] sm:$0xf]
    %v62 = vld [vmem:[%s0 + $0x90] sm:$0xff]
    %v63 = vld [vmem:[%s0 + $0x98] sm:$0xf]
    %v64 = vld [vmem:[%s0 + $0x9c] sm:$0xff]
    %v65 = vld [vmem:[%s0 + $0xa4] sm:$0xf]
    %v66 = vld [vmem:[%s0 + $0xa8] sm:$0xff]
    %v67 = vld [vmem:[%s0 + $0xb0] sm:$0xf]
    %v68 = vld [vmem:[%s0 + $0xb4] sm:$0xff]
    %v69 = vld [vmem:[%s0 + $0xbc] sm:$0xf]
    %v70 = vld [vmem:[%s0 + $0xc0] sm:$0xff]
    %v71 = vld [vmem:[%s0 + $0xc8] sm:$0xf]
    %v72 = vld [vmem:[%s0 + $0xcc] sm:$0xff]
    %v73 = vld [vmem:[%s0 + $0xd4] sm:$0xf]
    %v74 = vld [vmem:[%s0 + $0xd8] sm:$0xff]
    %v75 = vld [vmem:[%s0 + $0xe0] sm:$0xf]
    %v76 = vld [vmem:[%s0 + $0xe4] sm:$0xff]
    %v77 = vld [vmem:[%s0 + $0xec] sm:$0xf]
    %v78 = vld [vmem:[%s0 + $0xf0] sm:$0xff]
    %v79 = vld [vmem:[%s0 + $0xf8] sm:$0xf]
    %v80 = vld [vmem:[%s0 + $0xfc] sm:$0xff]
    %v81 = vld [vmem:[%s0 + $0x104] sm:$0xf]
    %v82 = vld [vmem:[%s0 + $0x108] sm:$0xff]
    %v83 = vld [vmem:[%s0 + $0x110] sm:$0xf]
    %v84 = vld [vmem:[%s0 + $0x114] sm:$0xff]
    %v85 = vld [vmem:[%s0 + $0x11c] sm:$0xf]
    %v86 = vld [vmem:[%s0 + $0x120] sm:$0xff]
    %v87 = vld [vmem:[%s0 + $0x128] sm:$0xf]
    %v88 = vld [vmem:[%s0 + $0x12c] sm:$0xff]
    %v89 = vld [vmem:[%s0 + $0x134] sm:$0xf]
    %v90 = vld [vmem:[%s0 + $0x138] sm:$0xff]
    %v91 = vld [vmem:[%s0 + $0x140] sm:$0xf]
    %v92 = vld [vmem:[%s0 + $0x144] sm:$0xff]
    %v93 = vld [vmem:[%s0 + $0x14c] sm:$0xf]
    %v94 = vld [vmem:[%s0 + $0x150] sm:$0xff]
    %v95 = vld [vmem:[%s0 + $0x158] sm:$0xf]
    %v96 = vld [vmem:[%s0 + $0x15c] sm:$0xff]
    %v97 = vld [vmem:[%s0 + $0x164] sm:$0xf]
    %v98 = vld [vmem:[%s0 + $0x168] sm:$0xff]
    %v99 = vld [vmem:[%s0 + $0x170] sm:$0xf]
    %v100 = vld [vmem:[%s0 + $0x174] sm:$0xff]
    %v101 = vld [vmem:[%s0 + $0x17c] sm:$0xf]
    %v102 = vld [vmem:[%s1] sm:$0xff]
    %v103 = vld [vmem:[%s1 + $0x8] sm:$0xff]
    %v104 = vld [vmem:[%s1 + $0x10] sm:$0xff]
    %v105 = vld [vmem:[%s1 + $0x18] sm:$0xff]
    %v106 = vld [vmem:[%s1 + $0x20] sm:$0xff]
    %v107 = vld [vmem:[%s1 + $0x28] sm:$0xff]
    %v108 = vld [vmem:[%s1 + $0x30] sm:$0xff]
    %v109 = vld [vmem:[%s1 + $0x38] sm:$0xff]
    %v110 = vld [vmem:[%s1 + $0x40] sm:$0xff]
    %v111 = vld [vmem:[%s1 + $0x48] sm:$0xff]
    %v112 = vld [vmem:[%s1 + $0x50] sm:$0xff]
    %v113 = vld [vmem:[%s1 + $0x58] sm:$0xff]
    %v114 = vld [vmem:[%s1 + $0x60] sm:$0xff]
    %v115 = vld [vmem:[%s1 + $0x68] sm:$0xff]
    %v116 = vld [vmem:[%s1 + $0x70] sm:$0xff]
    %v117 = vld [vmem:[%s1 + $0x78] sm:$0xff]
    %v118 = vld [vmem:[%s1 + $0x80] sm:$0xff]
    %v119 = vld [vmem:[%s1 + $0x88] sm:$0xff]
    %v120 = vld [vmem:[%s1 + $0x90] sm:$0xff]
    %v121 = vld [vmem:[%s1 + $0x98] sm:$0xff]
    %v122 = vld [vmem:[%s1 + $0xa0] sm:$0xff]
    %v123 = vld [vmem:[%s1 + $0xa8] sm:$0xff]
    %v124 = vld [vmem:[%s1 + $0xb0] sm:$0xff]
    %v125 = vld [vmem:[%s1 + $0xb8] sm:$0xff]
    %v126 = vld [vmem:[%s1 + $0xc0] sm:$0xff]
    %v127 = vld [vmem:[%s1 + $0xc8] sm:$0xff]
    %v128 = vld [vmem:[%s1 + $0xd0] sm:$0xff]
    %v129 = vld [vmem:[%s1 + $0xd8] sm:$0xff]
    %v130 = vld [vmem:[%s1 + $0xe0] sm:$0xff]
    %v131 = vld [vmem:[%s1 + $0xe8] sm:$0xff]
    %v132 = vld [vmem:[%s1 + $0xf0] sm:$0xff]
    %v133 = vld [vmem:[%s1 + $0xf8] sm:$0xff]
    %v134 = vld [vmem:[%s1 + $0x100] sm:$0xff]
    %v135 = vld [vmem:[%s1 + $0x108] sm:$0xff]
    %v136 = vld [vmem:[%s1 + $0x110] sm:$0xff]
    %v137 = vld [vmem:[%s1 + $0x118] sm:$0xff]
    %v138 = vld [vmem:[%s1 + $0x120] sm:$0xff]
    %v139 = vld [vmem:[%s1 + $0x128] sm:$0xff]
    %v140 = vld [vmem:[%s1 + $0x130] sm:$0xff]
    %v141 = vld [vmem:[%s1 + $0x138] sm:$0xff]
    %v142 = vld [vmem:[%s1 + $0x140] sm:$0xff]
    %v143 = vld [vmem:[%s1 + $0x148] sm:$0xff]
    %v144 = vld [vmem:[%s1 + $0x150] sm:$0xff]
    %v145 = vld [vmem:[%s1 + $0x158] sm:$0xff]
    %v146 = vld [vmem:[%s1 + $0x160] sm:$0xff]
    %v147 = vld [vmem:[%s1 + $0x168] sm:$0xff]
    %v148 = vld [vmem:[%s1 + $0x170] sm:$0xff]
    %v149 = vld [vmem:[%s1 + $0x178] sm:$0xff]
    %v150 = vld [vmem:[%s1 + $0x180] sm:$0xff]
    %v151 = vld [vmem:[%s1 + $0x188] sm:$0xff]
    %v152 = vld [vmem:[%s1 + $0x190] sm:$0xff]
    %v153 = vld [vmem:[%s1 + $0x198] sm:$0xff]
    %v154 = vld [vmem:[%s1 + $0x1a0] sm:$0xff]
    %v155 = vld [vmem:[%s1 + $0x1a8] sm:$0xff]
    %v156 = vld [vmem:[%s1 + $0x1b0] sm:$0xff]
    %v157 = vld [vmem:[%s1 + $0x1b8] sm:$0xff]
    %v158 = vld [vmem:[%s1 + $0x1c0] sm:$0xff]
    %v159 = vld [vmem:[%s1 + $0x1c8] sm:$0xff]
    %v160 = vld [vmem:[%s1 + $0x1d0] sm:$0xff]
    %v161 = vld [vmem:[%s1 + $0x1d8] sm:$0xff]
    %v162 = vld [vmem:[%s1 + $0x1e0] sm:$0xff]
    %v163 = vld [vmem:[%s1 + $0x1e8] sm:$0xff]
    %v164 = vld [vmem:[%s1 + $0x1f0] sm:$0xff]
    %v165 = vld [vmem:[%s1 + $0x1f8] sm:$0xff]
    %v166 = vld [vmem:[%s1 + $0x200] sm:$0xff]
    %v167 = vld [vmem:[%s1 + $0x208] sm:$0xff]
    %v168 = vld [vmem:[%s1 + $0x210] sm:$0xff]
    %v169 = vld [vmem:[%s1 + $0x218] sm:$0xff]
    %v170 = vld [vmem:[%s1 + $0x220] sm:$0xff]
    %v171 = vld [vmem:[%s1 + $0x228] sm:$0xff]
    %v172 = vld [vmem:[%s1 + $0x230] sm:$0xff]
    %v173 = vld [vmem:[%s1 + $0x238] sm:$0xff]
    %v174 = vld [vmem:[%s2] sm:$0xf]
    %v176 = vperm.slane %v174, 0
    %v177 = vperm.slane %v174, 1
    %v178 = vperm.slane %v174, 2
    %v179 = vperm.slane %v174, 3
    %v248 = vunpack.c.l.b16 %v38
    %v249 = vunpack.c.h.b16 %v38
    %v250 = vunpack.c.l.b16 %v39
    %v251 = vunpack.c.l.b16 %v40
    %v252 = vunpack.c.h.b16 %v40
    %v253 = vunpack.c.l.b16 %v41
    %v254 = vunpack.c.l.b16 %v42
    %v255 = vunpack.c.h.b16 %v42
    %v256 = vunpack.c.l.b16 %v43
    %v257 = vunpack.c.l.b16 %v44
    %v258 = vunpack.c.h.b16 %v44
    %v259 = vunpack.c.l.b16 %v45
    %v260 = vunpack.c.l.b16 %v46
    %v261 = vunpack.c.h.b16 %v46
    %v262 = vunpack.c.l.b16 %v47
    %v263 = vunpack.c.l.b16 %v48
    %v264 = vunpack.c.h.b16 %v48
    %v265 = vunpack.c.l.b16 %v49
    %v266 = vunpack.c.l.b16 %v50
    %v267 = vunpack.c.h.b16 %v50
    %v268 = vunpack.c.l.b16 %v51
    %v269 = vunpack.c.l.b16 %v52
    %v270 = vunpack.c.h.b16 %v52
    %v271 = vunpack.c.l.b16 %v53
    %v272 = vunpack.c.l.b16 %v54
    %v273 = vunpack.c.h.b16 %v54
    %v274 = vunpack.c.l.b16 %v55
    %v275 = vunpack.c.l.b16 %v56
    %v276 = vunpack.c.h.b16 %v56
    %v277 = vunpack.c.l.b16 %v57
    %v278 = vunpack.c.l.b16 %v58
    %v279 = vunpack.c.h.b16 %v58
    %v280 = vunpack.c.l.b16 %v59
    %v281 = vunpack.c.l.b16 %v60
    %v282 = vunpack.c.h.b16 %v60
    %v283 = vunpack.c.l.b16 %v61
    %v284 = vunpack.c.l.b16 %v62
    %v285 = vunpack.c.h.b16 %v62
    %v286 = vunpack.c.l.b16 %v63
    %v287 = vunpack.c.l.b16 %v64
    %v288 = vunpack.c.h.b16 %v64
    %v289 = vunpack.c.l.b16 %v65
    %v290 = vunpack.c.l.b16 %v66
    %v291 = vunpack.c.h.b16 %v66
    %v292 = vunpack.c.l.b16 %v67
    %v293 = vunpack.c.l.b16 %v68
    %v294 = vunpack.c.h.b16 %v68
    %v295 = vunpack.c.l.b16 %v69
    %v296 = vunpack.c.l.b16 %v70
    %v297 = vunpack.c.h.b16 %v70
    %v298 = vunpack.c.l.b16 %v71
    %v299 = vunpack.c.l.b16 %v72
    %v300 = vunpack.c.h.b16 %v72
    %v301 = vunpack.c.l.b16 %v73
    %v302 = vunpack.c.l.b16 %v74
    %v303 = vunpack.c.h.b16 %v74
    %v304 = vunpack.c.l.b16 %v75
    %v305 = vunpack.c.l.b16 %v76
    %v306 = vunpack.c.h.b16 %v76
    %v307 = vunpack.c.l.b16 %v77
    %v308 = vunpack.c.l.b16 %v78
    %v309 = vunpack.c.h.b16 %v78
    %v310 = vunpack.c.l.b16 %v79
    %v311 = vunpack.c.l.b16 %v80
    %v312 = vunpack.c.h.b16 %v80
    %v313 = vunpack.c.l.b16 %v81
    %v314 = vunpack.c.l.b16 %v82
    %v315 = vunpack.c.h.b16 %v82
    %v316 = vunpack.c.l.b16 %v83
    %v317 = vunpack.c.l.b16 %v84
    %v318 = vunpack.c.h.b16 %v84
    %v319 = vunpack.c.l.b16 %v85
    %v320 = vunpack.c.l.b16 %v86
    %v321 = vunpack.c.h.b16 %v86
    %v322 = vunpack.c.l.b16 %v87
    %v323 = vunpack.c.l.b16 %v88
    %v324 = vunpack.c.h.b16 %v88
    %v325 = vunpack.c.l.b16 %v89
    %v326 = vunpack.c.l.b16 %v90
    %v327 = vunpack.c.h.b16 %v90
    %v328 = vunpack.c.l.b16 %v91
    %v329 = vunpack.c.l.b16 %v92
    %v330 = vunpack.c.h.b16 %v92
    %v331 = vunpack.c.l.b16 %v93
    %v332 = vunpack.c.l.b16 %v94
    %v333 = vunpack.c.h.b16 %v94
    %v334 = vunpack.c.l.b16 %v95
    %v335 = vunpack.c.l.b16 %v96
    %v336 = vunpack.c.h.b16 %v96
    %v337 = vunpack.c.l.b16 %v97
    %v338 = vunpack.c.l.b16 %v98
    %v339 = vunpack.c.h.b16 %v98
    %v340 = vunpack.c.l.b16 %v99
    %v341 = vunpack.c.l.b16 %v100
    %v342 = vunpack.c.h.b16 %v100
    %v343 = vunpack.c.l.b16 %v101
    %v344 = vpack.c.b16 %v251, %v248
    %v345 = vpack.c.b16 %v252, %v249
    %v346 = vpack.c.b16 %v253, %v250
    %v347 = vpack.c.b16 %v257, %v254
    %v348 = vpack.c.b16 %v258, %v255
    %v349 = vpack.c.b16 %v259, %v256
    %v350 = vpack.c.b16 %v263, %v260
    %v351 = vpack.c.b16 %v264, %v261
    %v352 = vpack.c.b16 %v265, %v262
    %v353 = vpack.c.b16 %v269, %v266
    %v354 = vpack.c.b16 %v270, %v267
    %v355 = vpack.c.b16 %v271, %v268
    %v356 = vpack.c.b16 %v275, %v272
    %v357 = vpack.c.b16 %v276, %v273
    %v358 = vpack.c.b16 %v277, %v274
    %v359 = vpack.c.b16 %v281, %v278
    %v360 = vpack.c.b16 %v282, %v279
    %v361 = vpack.c.b16 %v283, %v280
    %v362 = vpack.c.b16 %v287, %v284
    %v363 = vpack.c.b16 %v288, %v285
    %v364 = vpack.c.b16 %v289, %v286
    %v365 = vpack.c.b16 %v293, %v290
    %v366 = vpack.c.b16 %v294, %v291
    %v367 = vpack.c.b16 %v295, %v292
    %v368 = vpack.c.b16 %v299, %v296
    %v369 = vpack.c.b16 %v300, %v297
    %v370 = vpack.c.b16 %v301, %v298
    %v371 = vpack.c.b16 %v305, %v302
    %v372 = vpack.c.b16 %v306, %v303
    %v373 = vpack.c.b16 %v307, %v304
    %v374 = vpack.c.b16 %v311, %v308
    %v375 = vpack.c.b16 %v312, %v309
    %v376 = vpack.c.b16 %v313, %v310
    %v377 = vpack.c.b16 %v317, %v314
    %v378 = vpack.c.b16 %v318, %v315
    %v379 = vpack.c.b16 %v319, %v316
    %v380 = vpack.c.b16 %v323, %v320
    %v381 = vpack.c.b16 %v324, %v321
    %v382 = vpack.c.b16 %v325, %v322
    %v383 = vpack.c.b16 %v329, %v326
    %v384 = vpack.c.b16 %v330, %v327
    %v385 = vpack.c.b16 %v331, %v328
    %v386 = vpack.c.b16 %v335, %v332
    %v387 = vpack.c.b16 %v336, %v333
    %v388 = vpack.c.b16 %v337, %v334
    %v389 = vpack.c.b16 %v341, %v338
    %v390 = vpack.c.b16 %v342, %v339
    %v391 = vpack.c.b16 %v343, %v340
    %v496 = vunpack.c.l.b16 %v102
    %v497 = vunpack.c.h.b16 %v102
    %v498 = vunpack.c.l.b16 %v103
    %v499 = vunpack.c.h.b16 %v103
    %v500 = vunpack.c.l.b16 %v104
    %v501 = vunpack.c.h.b16 %v104
    %v502 = vunpack.c.l.b16 %v105
    %v503 = vunpack.c.h.b16 %v105
    %v504 = vunpack.c.l.b16 %v106
    %v505 = vunpack.c.h.b16 %v106
    %v506 = vunpack.c.l.b16 %v107
    %v507 = vunpack.c.h.b16 %v107
    %v508 = vunpack.c.l.b16 %v108
    %v509 = vunpack.c.h.b16 %v108
    %v510 = vunpack.c.l.b16 %v109
    %v511 = vunpack.c.h.b16 %v109
    %v512 = vunpack.c.l.b16 %v110
    %v513 = vunpack.c.h.b16 %v110
    %v514 = vunpack.c.l.b16 %v111
    %v515 = vunpack.c.h.b16 %v111
    %v516 = vunpack.c.l.b16 %v112
    %v517 = vunpack.c.h.b16 %v112
    %v518 = vunpack.c.l.b16 %v113
    %v519 = vunpack.c.h.b16 %v113
    %v520 = vunpack.c.l.b16 %v114
    %v521 = vunpack.c.h.b16 %v114
    %v522 = vunpack.c.l.b16 %v115
    %v523 = vunpack.c.h.b16 %v115
    %v524 = vunpack.c.l.b16 %v116
    %v525 = vunpack.c.h.b16 %v116
    %v526 = vunpack.c.l.b16 %v117
    %v527 = vunpack.c.h.b16 %v117
    %v528 = vunpack.c.l.b16 %v118
    %v529 = vunpack.c.h.b16 %v118
    %v530 = vunpack.c.l.b16 %v119
    %v531 = vunpack.c.h.b16 %v119
    %v532 = vunpack.c.l.b16 %v120
    %v533 = vunpack.c.h.b16 %v120
    %v534 = vunpack.c.l.b16 %v121
    %v535 = vunpack.c.h.b16 %v121
    %v536 = vunpack.c.l.b16 %v122
    %v537 = vunpack.c.h.b16 %v122
    %v538 = vunpack.c.l.b16 %v123
    %v539 = vunpack.c.h.b16 %v123
    %v540 = vunpack.c.l.b16 %v124
    %v541 = vunpack.c.h.b16 %v124
    %v542 = vunpack.c.l.b16 %v125
    %v543 = vunpack.c.h.b16 %v125
    %v544 = vunpack.c.l.b16 %v126
    %v545 = vunpack.c.h.b16 %v126
    %v546 = vunpack.c.l.b16 %v127
    %v547 = vunpack.c.h.b16 %v127
    %v548 = vunpack.c.l.b16 %v128
    %v549 = vunpack.c.h.b16 %v128
    %v550 = vunpack.c.l.b16 %v129
    %v551 = vunpack.c.h.b16 %v129
    %v552 = vunpack.c.l.b16 %v130
    %v553 = vunpack.c.h.b16 %v130
    %v554 = vunpack.c.l.b16 %v131
    %v555 = vunpack.c.h.b16 %v131
    %v556 = vunpack.c.l.b16 %v132
    %v557 = vunpack.c.h.b16 %v132
    %v558 = vunpack.c.l.b16 %v133
    %v559 = vunpack.c.h.b16 %v133
    %v560 = vunpack.c.l.b16 %v134
    %v561 = vunpack.c.h.b16 %v134
    %v562 = vunpack.c.l.b16 %v135
    %v563 = vunpack.c.h.b16 %v135
    %v564 = vunpack.c.l.b16 %v136
    %v565 = vunpack.c.h.b16 %v136
    %v566 = vunpack.c.l.b16 %v137
    %v567 = vunpack.c.h.b16 %v137
    %v568 = vunpack.c.l.b16 %v138
    %v569 = vunpack.c.h.b16 %v138
    %v570 = vunpack.c.l.b16 %v139
    %v571 = vunpack.c.h.b16 %v139
    %v572 = vunpack.c.l.b16 %v140
    %v573 = vunpack.c.h.b16 %v140
    %v574 = vunpack.c.l.b16 %v141
    %v575 = vunpack.c.h.b16 %v141
    %v576 = vunpack.c.l.b16 %v142
    %v577 = vunpack.c.h.b16 %v142
    %v578 = vunpack.c.l.b16 %v143
    %v579 = vunpack.c.h.b16 %v143
    %v580 = vunpack.c.l.b16 %v144
    %v581 = vunpack.c.h.b16 %v144
    %v582 = vunpack.c.l.b16 %v145
    %v583 = vunpack.c.h.b16 %v145
    %v584 = vunpack.c.l.b16 %v146
    %v585 = vunpack.c.h.b16 %v146
    %v586 = vunpack.c.l.b16 %v147
    %v587 = vunpack.c.h.b16 %v147
    %v588 = vunpack.c.l.b16 %v148
    %v589 = vunpack.c.h.b16 %v148
    %v590 = vunpack.c.l.b16 %v149
    %v591 = vunpack.c.h.b16 %v149
    %v592 = vunpack.c.l.b16 %v150
    %v593 = vunpack.c.h.b16 %v150
    %v594 = vunpack.c.l.b16 %v151
    %v595 = vunpack.c.h.b16 %v151
    %v596 = vunpack.c.l.b16 %v152
    %v597 = vunpack.c.h.b16 %v152
    %v598 = vunpack.c.l.b16 %v153
    %v599 = vunpack.c.h.b16 %v153
    %v600 = vunpack.c.l.b16 %v154
    %v601 = vunpack.c.h.b16 %v154
    %v602 = vunpack.c.l.b16 %v155
    %v603 = vunpack.c.h.b16 %v155
    %v604 = vunpack.c.l.b16 %v156
    %v605 = vunpack.c.h.b16 %v156
    %v606 = vunpack.c.l.b16 %v157
    %v607 = vunpack.c.h.b16 %v157
    %v608 = vunpack.c.l.b16 %v158
    %v609 = vunpack.c.h.b16 %v158
    %v610 = vunpack.c.l.b16 %v159
    %v611 = vunpack.c.h.b16 %v159
    %v612 = vunpack.c.l.b16 %v160
    %v613 = vunpack.c.h.b16 %v160
    %v614 = vunpack.c.l.b16 %v161
    %v615 = vunpack.c.h.b16 %v161
    %v616 = vunpack.c.l.b16 %v162
    %v617 = vunpack.c.h.b16 %v162
    %v618 = vunpack.c.l.b16 %v163
    %v619 = vunpack.c.h.b16 %v163
    %v620 = vunpack.c.l.b16 %v164
    %v621 = vunpack.c.h.b16 %v164
    %v622 = vunpack.c.l.b16 %v165
    %v623 = vunpack.c.h.b16 %v165
    %v624 = vunpack.c.l.b16 %v166
    %v625 = vunpack.c.h.b16 %v166
    %v626 = vunpack.c.l.b16 %v167
    %v627 = vunpack.c.h.b16 %v167
    %v628 = vunpack.c.l.b16 %v168
    %v629 = vunpack.c.h.b16 %v168
    %v630 = vunpack.c.l.b16 %v169
    %v631 = vunpack.c.h.b16 %v169
    %v632 = vunpack.c.l.b16 %v170
    %v633 = vunpack.c.h.b16 %v170
    %v634 = vunpack.c.l.b16 %v171
    %v635 = vunpack.c.h.b16 %v171
    %v636 = vunpack.c.l.b16 %v172
    %v637 = vunpack.c.h.b16 %v172
    %v638 = vunpack.c.l.b16 %v173
    %v639 = vunpack.c.h.b16 %v173
    %v640 = vpack.c.b16 %v500, %v496
    %v641 = vpack.c.b16 %v501, %v497
    %v642 = vpack.c.b16 %v502, %v498
    %v643 = vpack.c.b16 %v503, %v499
    %v644 = vpack.c.b16 %v508, %v504
    %v645 = vpack.c.b16 %v509, %v505
    %v646 = vpack.c.b16 %v510, %v506
    %v647 = vpack.c.b16 %v511, %v507
    %v648 = vpack.c.b16 %v516, %v512
    %v649 = vpack.c.b16 %v517, %v513
    %v650 = vpack.c.b16 %v518, %v514
    %v651 = vpack.c.b16 %v519, %v515
    %v652 = vpack.c.b16 %v524, %v520
    %v653 = vpack.c.b16 %v525, %v521
    %v654 = vpack.c.b16 %v526, %v522
    %v655 = vpack.c.b16 %v527, %v523
    %v656 = vpack.c.b16 %v532, %v528
    %v657 = vpack.c.b16 %v533, %v529
    %v658 = vpack.c.b16 %v534, %v530
    %v659 = vpack.c.b16 %v535, %v531
    %v660 = vpack.c.b16 %v540, %v536
    %v661 = vpack.c.b16 %v541, %v537
    %v662 = vpack.c.b16 %v542, %v538
    %v663 = vpack.c.b16 %v543, %v539
    %v664 = vpack.c.b16 %v548, %v544
    %v665 = vpack.c.b16 %v549, %v545
    %v666 = vpack.c.b16 %v550, %v546
    %v667 = vpack.c.b16 %v551, %v547
    %v668 = vpack.c.b16 %v556, %v552
    %v669 = vpack.c.b16 %v557, %v553
    %v670 = vpack.c.b16 %v558, %v554
    %v671 = vpack.c.b16 %v559, %v555
    %v672 = vpack.c.b16 %v564, %v560
    %v673 = vpack.c.b16 %v565, %v561
    %v674 = vpack.c.b16 %v566, %v562
    %v675 = vpack.c.b16 %v567, %v563
    %v676 = vpack.c.b16 %v572, %v568
    %v677 = vpack.c.b16 %v573, %v569
    %v678 = vpack.c.b16 %v574, %v570
    %v679 = vpack.c.b16 %v575, %v571
    %v680 = vpack.c.b16 %v580, %v576
    %v681 = vpack.c.b16 %v581, %v577
    %v682 = vpack.c.b16 %v582, %v578
    %v683 = vpack.c.b16 %v583, %v579
    %v684 = vpack.c.b16 %v588, %v584
    %v685 = vpack.c.b16 %v589, %v585
    %v686 = vpack.c.b16 %v590, %v586
    %v687 = vpack.c.b16 %v591, %v587
    %v688 = vpack.c.b16 %v596, %v592
    %v689 = vpack.c.b16 %v597, %v593
    %v690 = vpack.c.b16 %v598, %v594
    %v691 = vpack.c.b16 %v599, %v595
    %v692 = vpack.c.b16 %v604, %v600
    %v693 = vpack.c.b16 %v605, %v601
    %v694 = vpack.c.b16 %v606, %v602
    %v695 = vpack.c.b16 %v607, %v603
    %v696 = vpack.c.b16 %v612, %v608
    %v697 = vpack.c.b16 %v613, %v609
    %v698 = vpack.c.b16 %v614, %v610
    %v699 = vpack.c.b16 %v615, %v611
    %v700 = vpack.c.b16 %v620, %v616
    %v701 = vpack.c.b16 %v621, %v617
    %v702 = vpack.c.b16 %v622, %v618
    %v703 = vpack.c.b16 %v623, %v619
    %v704 = vpack.c.b16 %v628, %v624
    %v705 = vpack.c.b16 %v629, %v625
    %v706 = vpack.c.b16 %v630, %v626
    %v707 = vpack.c.b16 %v631, %v627
    %v708 = vpack.c.b16 %v636, %v632
    %v709 = vpack.c.b16 %v637, %v633
    %v710 = vpack.c.b16 %v638, %v634
    %v711 = vpack.c.b16 %v639, %v635
    %vm784 = vcmask 261120
    %v786 = vsel %vm784, %v346, 0
    %v789 = vsel %vm784, %v349, 0
    %v792 = vsel %vm784, %v352, 0
    %v795 = vsel %vm784, %v355, 0
    %v798 = vsel %vm784, %v358, 0
    %v801 = vsel %vm784, %v361, 0
    %v804 = vsel %vm784, %v364, 0
    %v807 = vsel %vm784, %v367, 0
    %v810 = vsel %vm784, %v370, 0
    %v813 = vsel %vm784, %v373, 0
    %v816 = vsel %vm784, %v376, 0
    %v819 = vsel %vm784, %v379, 0
    %v822 = vsel %vm784, %v382, 0
    %v825 = vsel %vm784, %v385, 0
    %v828 = vsel %vm784, %v388, 0
    %v831 = vsel %vm784, %v391, 0
    %833 = vmatpush.bf16.msra.mxu0 %v668
    %834 = vmatpush.bf16.msra.mxu0 %v664
    %835 = vmatpush.bf16.msra.mxu0 %v660
    %836 = vmatpush.bf16.msra.mxu0 %v656
    %837 = vmatpush.bf16.msra.mxu0 %v652
    %838 = vmatpush.bf16.msra.mxu0 %v648
    %839 = vmatpush.bf16.msra.mxu0 %v644
    %840 = vmatpush.bf16.msra.mxu0 %v640
    %841 = vmatmul.bf16.gmra.mxu0 %v344
    %v842 = vpop.f32.mrf.mxu0
    %v843 = vadd.f32 %v176, %v842
    %v844 = vpop.f32.mrf.mxu0
    %v845 = vadd.f32 %v176, %v844
    %846 = vmatmul.bf16.gmra.mxu0 %v347
    %v847 = vpop.f32.mrf.mxu0
    %v848 = vadd.f32 %v176, %v847
    %v849 = vpop.f32.mrf.mxu0
    %v850 = vadd.f32 %v176, %v849
    %851 = vmatmul.bf16.gmra.mxu0 %v350
    %v852 = vpop.f32.mrf.mxu0
    %v853 = vadd.f32 %v176, %v852
    %v854 = vpop.f32.mrf.mxu0
    %v855 = vadd.f32 %v176, %v854
    %856 = vmatmul.bf16.gmra.mxu0 %v353
    %v857 = vpop.f32.mrf.mxu0
    %v858 = vadd.f32 %v176, %v857
    %v859 = vpop.f32.mrf.mxu0
    %v860 = vadd.f32 %v176, %v859
    %861 = vmatmul.bf16.gmra.mxu0 %v356
    %v862 = vpop.f32.mrf.mxu0
    %v863 = vadd.f32 %v176, %v862
    %v864 = vpop.f32.mrf.mxu0
    %v865 = vadd.f32 %v176, %v864
    %866 = vmatmul.bf16.gmra.mxu0 %v359
    %v867 = vpop.f32.mrf.mxu0
    %v868 = vadd.f32 %v176, %v867
    %v869 = vpop.f32.mrf.mxu0
    %v870 = vadd.f32 %v176, %v869
    %871 = vmatmul.bf16.gmra.mxu0 %v362
    %v872 = vpop.f32.mrf.mxu0
    %v873 = vadd.f32 %v176, %v872
    %v874 = vpop.f32.mrf.mxu0
    %v875 = vadd.f32 %v176, %v874
    %876 = vmatmul.bf16.gmra.mxu0 %v365
    %v877 = vpop.f32.mrf.mxu0
    %v878 = vadd.f32 %v176, %v877
    %v879 = vpop.f32.mrf.mxu0
    %v880 = vadd.f32 %v176, %v879
    %881 = vmatmul.bf16.gmra.mxu0 %v368
    %v882 = vpop.f32.mrf.mxu0
    %v883 = vadd.f32 %v176, %v882
    %v884 = vpop.f32.mrf.mxu0
    %v885 = vadd.f32 %v176, %v884
    %886 = vmatmul.bf16.gmra.mxu0 %v371
    %v887 = vpop.f32.mrf.mxu0
    %v888 = vadd.f32 %v176, %v887
    %v889 = vpop.f32.mrf.mxu0
    %v890 = vadd.f32 %v176, %v889
    %891 = vmatmul.bf16.gmra.mxu0 %v374
    %v892 = vpop.f32.mrf.mxu0
    %v893 = vadd.f32 %v176, %v892
    %v894 = vpop.f32.mrf.mxu0
    %v895 = vadd.f32 %v176, %v894
    %896 = vmatmul.bf16.gmra.mxu0 %v377
    %v897 = vpop.f32.mrf.mxu0
    %v898 = vadd.f32 %v176, %v897
    %v899 = vpop.f32.mrf.mxu0
    %v900 = vadd.f32 %v176, %v899
    %901 = vmatmul.bf16.gmra.mxu0 %v380
    %v902 = vpop.f32.mrf.mxu0
    %v903 = vadd.f32 %v176, %v902
    %v904 = vpop.f32.mrf.mxu0
    %v905 = vadd.f32 %v176, %v904
    %906 = vmatmul.bf16.gmra.mxu0 %v383
    %v907 = vpop.f32.mrf.mxu0
    %v908 = vadd.f32 %v176, %v907
    %v909 = vpop.f32.mrf.mxu0
    %v910 = vadd.f32 %v176, %v909
    %911 = vmatmul.bf16.gmra.mxu0 %v386
    %v912 = vpop.f32.mrf.mxu0
    %v913 = vadd.f32 %v176, %v912
    %v914 = vpop.f32.mrf.mxu0
    %v915 = vadd.f32 %v176, %v914
    %916 = vmatmul.bf16.gmra.mxu0 %v389
    %v917 = vpop.f32.mrf.mxu0
    %v918 = vadd.f32 %v176, %v917
    %v919 = vpop.f32.mrf.mxu0
    %v920 = vadd.f32 %v176, %v919
    %921 = vdwg.mxu0
    %922 = vmatpush.bf16.msra.mxu0 %v700
    %923 = vmatpush.bf16.msra.mxu0 %v696
    %924 = vmatpush.bf16.msra.mxu0 %v692
    %925 = vmatpush.bf16.msra.mxu0 %v688
    %926 = vmatpush.bf16.msra.mxu0 %v684
    %927 = vmatpush.bf16.msra.mxu0 %v680
    %928 = vmatpush.bf16.msra.mxu0 %v676
    %929 = vmatpush.bf16.msra.mxu0 %v672
    %930 = vmatmul.bf16.gmra.mxu0 %v345
    %v931 = vpop.f32.mrf.mxu0
    %v932 = vadd.f32 %v843, %v931
    %v933 = vpop.f32.mrf.mxu0
    %v934 = vadd.f32 %v845, %v933
    %935 = vmatmul.bf16.gmra.mxu0 %v348
    %v936 = vpop.f32.mrf.mxu0
    %v937 = vadd.f32 %v848, %v936
    %v938 = vpop.f32.mrf.mxu0
    %v939 = vadd.f32 %v850, %v938
    %940 = vmatmul.bf16.gmra.mxu0 %v351
    %v941 = vpop.f32.mrf.mxu0
    %v942 = vadd.f32 %v853, %v941
    %v943 = vpop.f32.mrf.mxu0
    %v944 = vadd.f32 %v855, %v943
    %945 = vmatmul.bf16.gmra.mxu0 %v354
    %v946 = vpop.f32.mrf.mxu0
    %v947 = vadd.f32 %v858, %v946
    %v948 = vpop.f32.mrf.mxu0
    %v949 = vadd.f32 %v860, %v948
    %950 = vmatmul.bf16.gmra.mxu0 %v357
    %v951 = vpop.f32.mrf.mxu0
    %v952 = vadd.f32 %v863, %v951
    %v953 = vpop.f32.mrf.mxu0
    %v954 = vadd.f32 %v865, %v953
    %955 = vmatmul.bf16.gmra.mxu0 %v360
    %v956 = vpop.f32.mrf.mxu0
    %v957 = vadd.f32 %v868, %v956
    %v958 = vpop.f32.mrf.mxu0
    %v959 = vadd.f32 %v870, %v958
    %960 = vmatmul.bf16.gmra.mxu0 %v363
    %v961 = vpop.f32.mrf.mxu0
    %v962 = vadd.f32 %v873, %v961
    %v963 = vpop.f32.mrf.mxu0
    %v964 = vadd.f32 %v875, %v963
    %965 = vmatmul.bf16.gmra.mxu0 %v366
    %v966 = vpop.f32.mrf.mxu0
    %v967 = vadd.f32 %v878, %v966
    %v968 = vpop.f32.mrf.mxu0
    %v969 = vadd.f32 %v880, %v968
    %970 = vmatmul.bf16.gmra.mxu0 %v369
    %v971 = vpop.f32.mrf.mxu0
    %v972 = vadd.f32 %v883, %v971
    %v973 = vpop.f32.mrf.mxu0
    %v974 = vadd.f32 %v885, %v973
    %975 = vmatmul.bf16.gmra.mxu0 %v372
    %v976 = vpop.f32.mrf.mxu0
    %v977 = vadd.f32 %v888, %v976
    %v978 = vpop.f32.mrf.mxu0
    %v979 = vadd.f32 %v890, %v978
    %980 = vmatmul.bf16.gmra.mxu0 %v375
    %v981 = vpop.f32.mrf.mxu0
    %v982 = vadd.f32 %v893, %v981
    %v983 = vpop.f32.mrf.mxu0
    %v984 = vadd.f32 %v895, %v983
    %985 = vmatmul.bf16.gmra.mxu0 %v378
    %v986 = vpop.f32.mrf.mxu0
    %v987 = vadd.f32 %v898, %v986
    %v988 = vpop.f32.mrf.mxu0
    %v989 = vadd.f32 %v900, %v988
    %990 = vmatmul.bf16.gmra.mxu0 %v381
    %v991 = vpop.f32.mrf.mxu0
    %v992 = vadd.f32 %v903, %v991
    %v993 = vpop.f32.mrf.mxu0
    %v994 = vadd.f32 %v905, %v993
    %995 = vmatmul.bf16.gmra.mxu0 %v384
    %v996 = vpop.f32.mrf.mxu0
    %v997 = vadd.f32 %v908, %v996
    %v998 = vpop.f32.mrf.mxu0
    %v999 = vadd.f32 %v910, %v998
    %1000 = vmatmul.bf16.gmra.mxu0 %v387
    %v1001 = vpop.f32.mrf.mxu0
    %v1002 = vadd.f32 %v913, %v1001
    %v1003 = vpop.f32.mrf.mxu0
    %v1004 = vadd.f32 %v915, %v1003
    %1005 = vmatmul.bf16.gmra.mxu0 %v390
    %v1006 = vpop.f32.mrf.mxu0
    %v1007 = vadd.f32 %v918, %v1006
    %v1008 = vpop.f32.mrf.mxu0
    %v1009 = vadd.f32 %v920, %v1008
    %1010 = vdwg.mxu0
    %1011 = vmatpush.bf16.msra.mxu0 0
    %1012 = vmatpush.bf16.msra.mxu0 0
    %1013 = vmatpush.bf16.msra.mxu0 0
    %1014 = vmatpush.bf16.msra.mxu0 0
    %1015 = vmatpush.bf16.msra.mxu0 0
    %1016 = vmatpush.bf16.msra.mxu0 0
    %1017 = vmatpush.bf16.msra.mxu0 %v708
    %1018 = vmatpush.bf16.msra.mxu0 %v704
    %1019 = vmatmul.bf16.gmra.mxu0 %v786
    %v1020 = vpop.f32.mrf.mxu0
    %v1021 = vadd.f32 %v932, %v1020
    %v1022 = vpop.f32.mrf.mxu0
    %v1023 = vadd.f32 %v934, %v1022
    %1024 = vmatmul.bf16.gmra.mxu0 %v789
    %v1025 = vpop.f32.mrf.mxu0
    %v1026 = vadd.f32 %v937, %v1025
    %v1027 = vpop.f32.mrf.mxu0
    %v1028 = vadd.f32 %v939, %v1027
    %1029 = vmatmul.bf16.gmra.mxu0 %v792
    %v1030 = vpop.f32.mrf.mxu0
    %v1031 = vadd.f32 %v942, %v1030
    %v1032 = vpop.f32.mrf.mxu0
    %v1033 = vadd.f32 %v944, %v1032
    %1034 = vmatmul.bf16.gmra.mxu0 %v795
    %v1035 = vpop.f32.mrf.mxu0
    %v1036 = vadd.f32 %v947, %v1035
    %v1037 = vpop.f32.mrf.mxu0
    %v1038 = vadd.f32 %v949, %v1037
    %1039 = vmatmul.bf16.gmra.mxu0 %v798
    %v1040 = vpop.f32.mrf.mxu0
    %v1041 = vadd.f32 %v952, %v1040
    %v1042 = vpop.f32.mrf.mxu0
    %v1043 = vadd.f32 %v954, %v1042
    %1044 = vmatmul.bf16.gmra.mxu0 %v801
    %v1045 = vpop.f32.mrf.mxu0
    %v1046 = vadd.f32 %v957, %v1045
    %v1047 = vpop.f32.mrf.mxu0
    %v1048 = vadd.f32 %v959, %v1047
    %1049 = vmatmul.bf16.gmra.mxu0 %v804
    %v1050 = vpop.f32.mrf.mxu0
    %v1051 = vadd.f32 %v962, %v1050
    %v1052 = vpop.f32.mrf.mxu0
    %v1053 = vadd.f32 %v964, %v1052
    %1054 = vmatmul.bf16.gmra.mxu0 %v807
    %v1055 = vpop.f32.mrf.mxu0
    %v1056 = vadd.f32 %v967, %v1055
    %v1057 = vpop.f32.mrf.mxu0
    %v1058 = vadd.f32 %v969, %v1057
    %1059 = vmatmul.bf16.gmra.mxu0 %v810
    %v1060 = vpop.f32.mrf.mxu0
    %v1061 = vadd.f32 %v972, %v1060
    %v1062 = vpop.f32.mrf.mxu0
    %v1063 = vadd.f32 %v974, %v1062
    %1064 = vmatmul.bf16.gmra.mxu0 %v813
    %v1065 = vpop.f32.mrf.mxu0
    %v1066 = vadd.f32 %v977, %v1065
    %v1067 = vpop.f32.mrf.mxu0
    %v1068 = vadd.f32 %v979, %v1067
    %1069 = vmatmul.bf16.gmra.mxu0 %v816
    %v1070 = vpop.f32.mrf.mxu0
    %v1071 = vadd.f32 %v982, %v1070
    %v1072 = vpop.f32.mrf.mxu0
    %v1073 = vadd.f32 %v984, %v1072
    %1074 = vmatmul.bf16.gmra.mxu0 %v819
    %v1075 = vpop.f32.mrf.mxu0
    %v1076 = vadd.f32 %v987, %v1075
    %v1077 = vpop.f32.mrf.mxu0
    %v1078 = vadd.f32 %v989, %v1077
    %1079 = vmatmul.bf16.gmra.mxu0 %v822
    %v1080 = vpop.f32.mrf.mxu0
    %v1081 = vadd.f32 %v992, %v1080
    %v1082 = vpop.f32.mrf.mxu0
    %v1083 = vadd.f32 %v994, %v1082
    %1084 = vmatmul.bf16.gmra.mxu0 %v825
    %v1085 = vpop.f32.mrf.mxu0
    %v1086 = vadd.f32 %v997, %v1085
    %v1087 = vpop.f32.mrf.mxu0
    %v1088 = vadd.f32 %v999, %v1087
    %1089 = vmatmul.bf16.gmra.mxu0 %v828
    %v1090 = vpop.f32.mrf.mxu0
    %v1091 = vadd.f32 %v1002, %v1090
    %v1092 = vpop.f32.mrf.mxu0
    %v1093 = vadd.f32 %v1004, %v1092
    %1094 = vmatmul.bf16.gmra.mxu0 %v831
    %v1095 = vpop.f32.mrf.mxu0
    %v1096 = vadd.f32 %v1007, %v1095
    %v1097 = vpop.f32.mrf.mxu0
    %v1098 = vadd.f32 %v1009, %v1097
    %1099 = vdwg.mxu0
    %1100 = vmatpush.bf16.msra.mxu0 %v669
    %1101 = vmatpush.bf16.msra.mxu0 %v665
    %1102 = vmatpush.bf16.msra.mxu0 %v661
    %1103 = vmatpush.bf16.msra.mxu0 %v657
    %1104 = vmatpush.bf16.msra.mxu0 %v653
    %1105 = vmatpush.bf16.msra.mxu0 %v649
    %1106 = vmatpush.bf16.msra.mxu0 %v645
    %1107 = vmatpush.bf16.msra.mxu0 %v641
    %1108 = vmatmul.bf16.gmra.mxu0 %v344
    %v1109 = vpop.f32.mrf.mxu0
    %v1110 = vadd.f32 %v177, %v1109
    %v1111 = vpop.f32.mrf.mxu0
    %v1112 = vadd.f32 %v177, %v1111
    %1113 = vmatmul.bf16.gmra.mxu0 %v347
    %v1114 = vpop.f32.mrf.mxu0
    %v1115 = vadd.f32 %v177, %v1114
    %v1116 = vpop.f32.mrf.mxu0
    %v1117 = vadd.f32 %v177, %v1116
    %1118 = vmatmul.bf16.gmra.mxu0 %v350
    %v1119 = vpop.f32.mrf.mxu0
    %v1120 = vadd.f32 %v177, %v1119
    %v1121 = vpop.f32.mrf.mxu0
    %v1122 = vadd.f32 %v177, %v1121
    %1123 = vmatmul.bf16.gmra.mxu0 %v353
    %v1124 = vpop.f32.mrf.mxu0
    %v1125 = vadd.f32 %v177, %v1124
    %v1126 = vpop.f32.mrf.mxu0
    %v1127 = vadd.f32 %v177, %v1126
    %1128 = vmatmul.bf16.gmra.mxu0 %v356
    %v1129 = vpop.f32.mrf.mxu0
    %v1130 = vadd.f32 %v177, %v1129
    %v1131 = vpop.f32.mrf.mxu0
    %v1132 = vadd.f32 %v177, %v1131
    %1133 = vmatmul.bf16.gmra.mxu0 %v359
    %v1134 = vpop.f32.mrf.mxu0
    %v1135 = vadd.f32 %v177, %v1134
    %v1136 = vpop.f32.mrf.mxu0
    %v1137 = vadd.f32 %v177, %v1136
    %1138 = vmatmul.bf16.gmra.mxu0 %v362
    %v1139 = vpop.f32.mrf.mxu0
    %v1140 = vadd.f32 %v177, %v1139
    %v1141 = vpop.f32.mrf.mxu0
    %v1142 = vadd.f32 %v177, %v1141
    %1143 = vmatmul.bf16.gmra.mxu0 %v365
    %v1144 = vpop.f32.mrf.mxu0
    %v1145 = vadd.f32 %v177, %v1144
    %v1146 = vpop.f32.mrf.mxu0
    %v1147 = vadd.f32 %v177, %v1146
    %1148 = vmatmul.bf16.gmra.mxu0 %v368
    %v1149 = vpop.f32.mrf.mxu0
    %v1150 = vadd.f32 %v177, %v1149
    %v1151 = vpop.f32.mrf.mxu0
    %v1152 = vadd.f32 %v177, %v1151
    %1153 = vmatmul.bf16.gmra.mxu0 %v371
    %v1154 = vpop.f32.mrf.mxu0
    %v1155 = vadd.f32 %v177, %v1154
    %v1156 = vpop.f32.mrf.mxu0
    %v1157 = vadd.f32 %v177, %v1156
    %1158 = vmatmul.bf16.gmra.mxu0 %v374
    %v1159 = vpop.f32.mrf.mxu0
    %v1160 = vadd.f32 %v177, %v1159
    %v1161 = vpop.f32.mrf.mxu0
    %v1162 = vadd.f32 %v177, %v1161
    %1163 = vmatmul.bf16.gmra.mxu0 %v377
    %v1164 = vpop.f32.mrf.mxu0
    %v1165 = vadd.f32 %v177, %v1164
    %v1166 = vpop.f32.mrf.mxu0
    %v1167 = vadd.f32 %v177, %v1166
    %1168 = vmatmul.bf16.gmra.mxu0 %v380
    %v1169 = vpop.f32.mrf.mxu0
    %v1170 = vadd.f32 %v177, %v1169
    %v1171 = vpop.f32.mrf.mxu0
    %v1172 = vadd.f32 %v177, %v1171
    %1173 = vmatmul.bf16.gmra.mxu0 %v383
    %v1174 = vpop.f32.mrf.mxu0
    %v1175 = vadd.f32 %v177, %v1174
    %v1176 = vpop.f32.mrf.mxu0
    %v1177 = vadd.f32 %v177, %v1176
    %1178 = vmatmul.bf16.gmra.mxu0 %v386
    %v1179 = vpop.f32.mrf.mxu0
    %v1180 = vadd.f32 %v177, %v1179
    %v1181 = vpop.f32.mrf.mxu0
    %v1182 = vadd.f32 %v177, %v1181
    %1183 = vmatmul.bf16.gmra.mxu0 %v389
    %v1184 = vpop.f32.mrf.mxu0
    %v1185 = vadd.f32 %v177, %v1184
    %v1186 = vpop.f32.mrf.mxu0
    %v1187 = vadd.f32 %v177, %v1186
    %1188 = vdwg.mxu0
    %1189 = vmatpush.bf16.msra.mxu0 %v701
    %1190 = vmatpush.bf16.msra.mxu0 %v697
    %1191 = vmatpush.bf16.msra.mxu0 %v693
    %1192 = vmatpush.bf16.msra.mxu0 %v689
    %1193 = vmatpush.bf16.msra.mxu0 %v685
    %1194 = vmatpush.bf16.msra.mxu0 %v681
    %1195 = vmatpush.bf16.msra.mxu0 %v677
    %1196 = vmatpush.bf16.msra.mxu0 %v673
    %1197 = vmatmul.bf16.gmra.mxu0 %v345
    %v1198 = vpop.f32.mrf.mxu0
    %v1199 = vadd.f32 %v1110, %v1198
    %v1200 = vpop.f32.mrf.mxu0
    %v1201 = vadd.f32 %v1112, %v1200
    %1202 = vmatmul.bf16.gmra.mxu0 %v348
    %v1203 = vpop.f32.mrf.mxu0
    %v1204 = vadd.f32 %v1115, %v1203
    %v1205 = vpop.f32.mrf.mxu0
    %v1206 = vadd.f32 %v1117, %v1205
    %1207 = vmatmul.bf16.gmra.mxu0 %v351
    %v1208 = vpop.f32.mrf.mxu0
    %v1209 = vadd.f32 %v1120, %v1208
    %v1210 = vpop.f32.mrf.mxu0
    %v1211 = vadd.f32 %v1122, %v1210
    %1212 = vmatmul.bf16.gmra.mxu0 %v354
    %v1213 = vpop.f32.mrf.mxu0
    %v1214 = vadd.f32 %v1125, %v1213
    %v1215 = vpop.f32.mrf.mxu0
    %v1216 = vadd.f32 %v1127, %v1215
    %1217 = vmatmul.bf16.gmra.mxu0 %v357
    %v1218 = vpop.f32.mrf.mxu0
    %v1219 = vadd.f32 %v1130, %v1218
    %v1220 = vpop.f32.mrf.mxu0
    %v1221 = vadd.f32 %v1132, %v1220
    %1222 = vmatmul.bf16.gmra.mxu0 %v360
    %v1223 = vpop.f32.mrf.mxu0
    %v1224 = vadd.f32 %v1135, %v1223
    %v1225 = vpop.f32.mrf.mxu0
    %v1226 = vadd.f32 %v1137, %v1225
    %1227 = vmatmul.bf16.gmra.mxu0 %v363
    %v1228 = vpop.f32.mrf.mxu0
    %v1229 = vadd.f32 %v1140, %v1228
    %v1230 = vpop.f32.mrf.mxu0
    %v1231 = vadd.f32 %v1142, %v1230
    %1232 = vmatmul.bf16.gmra.mxu0 %v366
    %v1233 = vpop.f32.mrf.mxu0
    %v1234 = vadd.f32 %v1145, %v1233
    %v1235 = vpop.f32.mrf.mxu0
    %v1236 = vadd.f32 %v1147, %v1235
    %1237 = vmatmul.bf16.gmra.mxu0 %v369
    %v1238 = vpop.f32.mrf.mxu0
    %v1239 = vadd.f32 %v1150, %v1238
    %v1240 = vpop.f32.mrf.mxu0
    %v1241 = vadd.f32 %v1152, %v1240
    %1242 = vmatmul.bf16.gmra.mxu0 %v372
    %v1243 = vpop.f32.mrf.mxu0
    %v1244 = vadd.f32 %v1155, %v1243
    %v1245 = vpop.f32.mrf.mxu0
    %v1246 = vadd.f32 %v1157, %v1245
    %1247 = vmatmul.bf16.gmra.mxu0 %v375
    %v1248 = vpop.f32.mrf.mxu0
    %v1249 = vadd.f32 %v1160, %v1248
    %v1250 = vpop.f32.mrf.mxu0
    %v1251 = vadd.f32 %v1162, %v1250
    %1252 = vmatmul.bf16.gmra.mxu0 %v378
    %v1253 = vpop.f32.mrf.mxu0
    %v1254 = vadd.f32 %v1165, %v1253
    %v1255 = vpop.f32.mrf.mxu0
    %v1256 = vadd.f32 %v1167, %v1255
    %1257 = vmatmul.bf16.gmra.mxu0 %v381
    %v1258 = vpop.f32.mrf.mxu0
    %v1259 = vadd.f32 %v1170, %v1258
    %v1260 = vpop.f32.mrf.mxu0
    %v1261 = vadd.f32 %v1172, %v1260
    %1262 = vmatmul.bf16.gmra.mxu0 %v384
    %v1263 = vpop.f32.mrf.mxu0
    %v1264 = vadd.f32 %v1175, %v1263
    %v1265 = vpop.f32.mrf.mxu0
    %v1266 = vadd.f32 %v1177, %v1265
    %1267 = vmatmul.bf16.gmra.mxu0 %v387
    %v1268 = vpop.f32.mrf.mxu0
    %v1269 = vadd.f32 %v1180, %v1268
    %v1270 = vpop.f32.mrf.mxu0
    %v1271 = vadd.f32 %v1182, %v1270
    %1272 = vmatmul.bf16.gmra.mxu0 %v390
    %v1273 = vpop.f32.mrf.mxu0
    %v1274 = vadd.f32 %v1185, %v1273
    %v1275 = vpop.f32.mrf.mxu0
    %v1276 = vadd.f32 %v1187, %v1275
    %1277 = vdwg.mxu0
    %1278 = vmatpush.bf16.msra.mxu0 0
    %1279 = vmatpush.bf16.msra.mxu0 0
    %1280 = vmatpush.bf16.msra.mxu0 0
    %1281 = vmatpush.bf16.msra.mxu0 0
    %1282 = vmatpush.bf16.msra.mxu0 0
    %1283 = vmatpush.bf16.msra.mxu0 0
    %1284 = vmatpush.bf16.msra.mxu0 %v709
    %1285 = vmatpush.bf16.msra.mxu0 %v705
    %1286 = vmatmul.bf16.gmra.mxu0 %v786
    %v1287 = vpop.f32.mrf.mxu0
    %v1288 = vadd.f32 %v1199, %v1287
    %v1289 = vpop.f32.mrf.mxu0
    %v1290 = vadd.f32 %v1201, %v1289
    %1291 = vmatmul.bf16.gmra.mxu0 %v789
    %v1292 = vpop.f32.mrf.mxu0
    %v1293 = vadd.f32 %v1204, %v1292
    %v1294 = vpop.f32.mrf.mxu0
    %v1295 = vadd.f32 %v1206, %v1294
    %1296 = vmatmul.bf16.gmra.mxu0 %v792
    %v1297 = vpop.f32.mrf.mxu0
    %v1298 = vadd.f32 %v1209, %v1297
    %v1299 = vpop.f32.mrf.mxu0
    %v1300 = vadd.f32 %v1211, %v1299
    %1301 = vmatmul.bf16.gmra.mxu0 %v795
    %v1302 = vpop.f32.mrf.mxu0
    %v1303 = vadd.f32 %v1214, %v1302
    %v1304 = vpop.f32.mrf.mxu0
    %v1305 = vadd.f32 %v1216, %v1304
    %1306 = vmatmul.bf16.gmra.mxu0 %v798
    %v1307 = vpop.f32.mrf.mxu0
    %v1308 = vadd.f32 %v1219, %v1307
    %v1309 = vpop.f32.mrf.mxu0
    %v1310 = vadd.f32 %v1221, %v1309
    %1311 = vmatmul.bf16.gmra.mxu0 %v801
    %v1312 = vpop.f32.mrf.mxu0
    %v1313 = vadd.f32 %v1224, %v1312
    %v1314 = vpop.f32.mrf.mxu0
    %v1315 = vadd.f32 %v1226, %v1314
    %1316 = vmatmul.bf16.gmra.mxu0 %v804
    %v1317 = vpop.f32.mrf.mxu0
    %v1318 = vadd.f32 %v1229, %v1317
    %v1319 = vpop.f32.mrf.mxu0
    %v1320 = vadd.f32 %v1231, %v1319
    %1321 = vmatmul.bf16.gmra.mxu0 %v807
    %v1322 = vpop.f32.mrf.mxu0
    %v1323 = vadd.f32 %v1234, %v1322
    %v1324 = vpop.f32.mrf.mxu0
    %v1325 = vadd.f32 %v1236, %v1324
    %1326 = vmatmul.bf16.gmra.mxu0 %v810
    %v1327 = vpop.f32.mrf.mxu0
    %v1328 = vadd.f32 %v1239, %v1327
    %v1329 = vpop.f32.mrf.mxu0
    %v1330 = vadd.f32 %v1241, %v1329
    %1331 = vmatmul.bf16.gmra.mxu0 %v813
    %v1332 = vpop.f32.mrf.mxu0
    %v1333 = vadd.f32 %v1244, %v1332
    %v1334 = vpop.f32.mrf.mxu0
    %v1335 = vadd.f32 %v1246, %v1334
    %1336 = vmatmul.bf16.gmra.mxu0 %v816
    %v1337 = vpop.f32.mrf.mxu0
    %v1338 = vadd.f32 %v1249, %v1337
    %v1339 = vpop.f32.mrf.mxu0
    %v1340 = vadd.f32 %v1251, %v1339
    %1341 = vmatmul.bf16.gmra.mxu0 %v819
    %v1342 = vpop.f32.mrf.mxu0
    %v1343 = vadd.f32 %v1254, %v1342
    %v1344 = vpop.f32.mrf.mxu0
    %v1345 = vadd.f32 %v1256, %v1344
    %1346 = vmatmul.bf16.gmra.mxu0 %v822
    %v1347 = vpop.f32.mrf.mxu0
    %v1348 = vadd.f32 %v1259, %v1347
    %v1349 = vpop.f32.mrf.mxu0
    %v1350 = vadd.f32 %v1261, %v1349
    %1351 = vmatmul.bf16.gmra.mxu0 %v825
    %v1352 = vpop.f32.mrf.mxu0
    %v1353 = vadd.f32 %v1264, %v1352
    %v1354 = vpop.f32.mrf.mxu0
    %v1355 = vadd.f32 %v1266, %v1354
    %1356 = vmatmul.bf16.gmra.mxu0 %v828
    %v1357 = vpop.f32.mrf.mxu0
    %v1358 = vadd.f32 %v1269, %v1357
    %v1359 = vpop.f32.mrf.mxu0
    %v1360 = vadd.f32 %v1271, %v1359
    %1361 = vmatmul.bf16.gmra.mxu0 %v831
    %v1362 = vpop.f32.mrf.mxu0
    %v1363 = vadd.f32 %v1274, %v1362
    %v1364 = vpop.f32.mrf.mxu0
    %v1365 = vadd.f32 %v1276, %v1364
    %1366 = vdwg.mxu0
    %1367 = vmatpush.bf16.msra.mxu0 %v670
    %1368 = vmatpush.bf16.msra.mxu0 %v666
    %1369 = vmatpush.bf16.msra.mxu0 %v662
    %1370 = vmatpush.bf16.msra.mxu0 %v658
    %1371 = vmatpush.bf16.msra.mxu0 %v654
    %1372 = vmatpush.bf16.msra.mxu0 %v650
    %1373 = vmatpush.bf16.msra.mxu0 %v646
    %1374 = vmatpush.bf16.msra.mxu0 %v642
    %1375 = vmatmul.bf16.gmra.mxu0 %v344
    %v1376 = vpop.f32.mrf.mxu0
    %v1377 = vadd.f32 %v178, %v1376
    %v1378 = vpop.f32.mrf.mxu0
    %v1379 = vadd.f32 %v178, %v1378
    %1380 = vmatmul.bf16.gmra.mxu0 %v347
    %v1381 = vpop.f32.mrf.mxu0
    %v1382 = vadd.f32 %v178, %v1381
    %v1383 = vpop.f32.mrf.mxu0
    %v1384 = vadd.f32 %v178, %v1383
    %1385 = vmatmul.bf16.gmra.mxu0 %v350
    %v1386 = vpop.f32.mrf.mxu0
    %v1387 = vadd.f32 %v178, %v1386
    %v1388 = vpop.f32.mrf.mxu0
    %v1389 = vadd.f32 %v178, %v1388
    %1390 = vmatmul.bf16.gmra.mxu0 %v353
    %v1391 = vpop.f32.mrf.mxu0
    %v1392 = vadd.f32 %v178, %v1391
    %v1393 = vpop.f32.mrf.mxu0
    %v1394 = vadd.f32 %v178, %v1393
    %1395 = vmatmul.bf16.gmra.mxu0 %v356
    %v1396 = vpop.f32.mrf.mxu0
    %v1397 = vadd.f32 %v178, %v1396
    %v1398 = vpop.f32.mrf.mxu0
    %v1399 = vadd.f32 %v178, %v1398
    %1400 = vmatmul.bf16.gmra.mxu0 %v359
    %v1401 = vpop.f32.mrf.mxu0
    %v1402 = vadd.f32 %v178, %v1401
    %v1403 = vpop.f32.mrf.mxu0
    %v1404 = vadd.f32 %v178, %v1403
    %1405 = vmatmul.bf16.gmra.mxu0 %v362
    %v1406 = vpop.f32.mrf.mxu0
    %v1407 = vadd.f32 %v178, %v1406
    %v1408 = vpop.f32.mrf.mxu0
    %v1409 = vadd.f32 %v178, %v1408
    %1410 = vmatmul.bf16.gmra.mxu0 %v365
    %v1411 = vpop.f32.mrf.mxu0
    %v1412 = vadd.f32 %v178, %v1411
    %v1413 = vpop.f32.mrf.mxu0
    %v1414 = vadd.f32 %v178, %v1413
    %1415 = vmatmul.bf16.gmra.mxu0 %v368
    %v1416 = vpop.f32.mrf.mxu0
    %v1417 = vadd.f32 %v178, %v1416
    %v1418 = vpop.f32.mrf.mxu0
    %v1419 = vadd.f32 %v178, %v1418
    %1420 = vmatmul.bf16.gmra.mxu0 %v371
    %v1421 = vpop.f32.mrf.mxu0
    %v1422 = vadd.f32 %v178, %v1421
    %v1423 = vpop.f32.mrf.mxu0
    %v1424 = vadd.f32 %v178, %v1423
    %1425 = vmatmul.bf16.gmra.mxu0 %v374
    %v1426 = vpop.f32.mrf.mxu0
    %v1427 = vadd.f32 %v178, %v1426
    %v1428 = vpop.f32.mrf.mxu0
    %v1429 = vadd.f32 %v178, %v1428
    %1430 = vmatmul.bf16.gmra.mxu0 %v377
    %v1431 = vpop.f32.mrf.mxu0
    %v1432 = vadd.f32 %v178, %v1431
    %v1433 = vpop.f32.mrf.mxu0
    %v1434 = vadd.f32 %v178, %v1433
    %1435 = vmatmul.bf16.gmra.mxu0 %v380
    %v1436 = vpop.f32.mrf.mxu0
    %v1437 = vadd.f32 %v178, %v1436
    %v1438 = vpop.f32.mrf.mxu0
    %v1439 = vadd.f32 %v178, %v1438
    %1440 = vmatmul.bf16.gmra.mxu0 %v383
    %v1441 = vpop.f32.mrf.mxu0
    %v1442 = vadd.f32 %v178, %v1441
    %v1443 = vpop.f32.mrf.mxu0
    %v1444 = vadd.f32 %v178, %v1443
    %1445 = vmatmul.bf16.gmra.mxu0 %v386
    %v1446 = vpop.f32.mrf.mxu0
    %v1447 = vadd.f32 %v178, %v1446
    %v1448 = vpop.f32.mrf.mxu0
    %v1449 = vadd.f32 %v178, %v1448
    %1450 = vmatmul.bf16.gmra.mxu0 %v389
    %v1451 = vpop.f32.mrf.mxu0
    %v1452 = vadd.f32 %v178, %v1451
    %v1453 = vpop.f32.mrf.mxu0
    %v1454 = vadd.f32 %v178, %v1453
    %1455 = vdwg.mxu0
    %1456 = vmatpush.bf16.msra.mxu0 %v702
    %1457 = vmatpush.bf16.msra.mxu0 %v698
    %1458 = vmatpush.bf16.msra.mxu0 %v694
    %1459 = vmatpush.bf16.msra.mxu0 %v690
    %1460 = vmatpush.bf16.msra.mxu0 %v686
    %1461 = vmatpush.bf16.msra.mxu0 %v682
    %1462 = vmatpush.bf16.msra.mxu0 %v678
    %1463 = vmatpush.bf16.msra.mxu0 %v674
    %1464 = vmatmul.bf16.gmra.mxu0 %v345
    %v1465 = vpop.f32.mrf.mxu0
    %v1466 = vadd.f32 %v1377, %v1465
    %v1467 = vpop.f32.mrf.mxu0
    %v1468 = vadd.f32 %v1379, %v1467
    %1469 = vmatmul.bf16.gmra.mxu0 %v348
    %v1470 = vpop.f32.mrf.mxu0
    %v1471 = vadd.f32 %v1382, %v1470
    %v1472 = vpop.f32.mrf.mxu0
    %v1473 = vadd.f32 %v1384, %v1472
    %1474 = vmatmul.bf16.gmra.mxu0 %v351
    %v1475 = vpop.f32.mrf.mxu0
    %v1476 = vadd.f32 %v1387, %v1475
    %v1477 = vpop.f32.mrf.mxu0
    %v1478 = vadd.f32 %v1389, %v1477
    %1479 = vmatmul.bf16.gmra.mxu0 %v354
    %v1480 = vpop.f32.mrf.mxu0
    %v1481 = vadd.f32 %v1392, %v1480
    %v1482 = vpop.f32.mrf.mxu0
    %v1483 = vadd.f32 %v1394, %v1482
    %1484 = vmatmul.bf16.gmra.mxu0 %v357
    %v1485 = vpop.f32.mrf.mxu0
    %v1486 = vadd.f32 %v1397, %v1485
    %v1487 = vpop.f32.mrf.mxu0
    %v1488 = vadd.f32 %v1399, %v1487
    %1489 = vmatmul.bf16.gmra.mxu0 %v360
    %v1490 = vpop.f32.mrf.mxu0
    %v1491 = vadd.f32 %v1402, %v1490
    %v1492 = vpop.f32.mrf.mxu0
    %v1493 = vadd.f32 %v1404, %v1492
    %1494 = vmatmul.bf16.gmra.mxu0 %v363
    %v1495 = vpop.f32.mrf.mxu0
    %v1496 = vadd.f32 %v1407, %v1495
    %v1497 = vpop.f32.mrf.mxu0
    %v1498 = vadd.f32 %v1409, %v1497
    %1499 = vmatmul.bf16.gmra.mxu0 %v366
    %v1500 = vpop.f32.mrf.mxu0
    %v1501 = vadd.f32 %v1412, %v1500
    %v1502 = vpop.f32.mrf.mxu0
    %v1503 = vadd.f32 %v1414, %v1502
    %1504 = vmatmul.bf16.gmra.mxu0 %v369
    %v1505 = vpop.f32.mrf.mxu0
    %v1506 = vadd.f32 %v1417, %v1505
    %v1507 = vpop.f32.mrf.mxu0
    %v1508 = vadd.f32 %v1419, %v1507
    %1509 = vmatmul.bf16.gmra.mxu0 %v372
    %v1510 = vpop.f32.mrf.mxu0
    %v1511 = vadd.f32 %v1422, %v1510
    %v1512 = vpop.f32.mrf.mxu0
    %v1513 = vadd.f32 %v1424, %v1512
    %1514 = vmatmul.bf16.gmra.mxu0 %v375
    %v1515 = vpop.f32.mrf.mxu0
    %v1516 = vadd.f32 %v1427, %v1515
    %v1517 = vpop.f32.mrf.mxu0
    %v1518 = vadd.f32 %v1429, %v1517
    %1519 = vmatmul.bf16.gmra.mxu0 %v378
    %v1520 = vpop.f32.mrf.mxu0
    %v1521 = vadd.f32 %v1432, %v1520
    %v1522 = vpop.f32.mrf.mxu0
    %v1523 = vadd.f32 %v1434, %v1522
    %1524 = vmatmul.bf16.gmra.mxu0 %v381
    %v1525 = vpop.f32.mrf.mxu0
    %v1526 = vadd.f32 %v1437, %v1525
    %v1527 = vpop.f32.mrf.mxu0
    %v1528 = vadd.f32 %v1439, %v1527
    %1529 = vmatmul.bf16.gmra.mxu0 %v384
    %v1530 = vpop.f32.mrf.mxu0
    %v1531 = vadd.f32 %v1442, %v1530
    %v1532 = vpop.f32.mrf.mxu0
    %v1533 = vadd.f32 %v1444, %v1532
    %1534 = vmatmul.bf16.gmra.mxu0 %v387
    %v1535 = vpop.f32.mrf.mxu0
    %v1536 = vadd.f32 %v1447, %v1535
    %v1537 = vpop.f32.mrf.mxu0
    %v1538 = vadd.f32 %v1449, %v1537
    %1539 = vmatmul.bf16.gmra.mxu0 %v390
    %v1540 = vpop.f32.mrf.mxu0
    %v1541 = vadd.f32 %v1452, %v1540
    %v1542 = vpop.f32.mrf.mxu0
    %v1543 = vadd.f32 %v1454, %v1542
    %1544 = vdwg.mxu0
    %1545 = vmatpush.bf16.msra.mxu0 0
    %1546 = vmatpush.bf16.msra.mxu0 0
    %1547 = vmatpush.bf16.msra.mxu0 0
    %1548 = vmatpush.bf16.msra.mxu0 0
    %1549 = vmatpush.bf16.msra.mxu0 0
    %1550 = vmatpush.bf16.msra.mxu0 0
    %1551 = vmatpush.bf16.msra.mxu0 %v710
    %1552 = vmatpush.bf16.msra.mxu0 %v706
    %1553 = vmatmul.bf16.gmra.mxu0 %v786
    %v1554 = vpop.f32.mrf.mxu0
    %v1555 = vadd.f32 %v1466, %v1554
    %v1556 = vpop.f32.mrf.mxu0
    %v1557 = vadd.f32 %v1468, %v1556
    %1558 = vmatmul.bf16.gmra.mxu0 %v789
    %v1559 = vpop.f32.mrf.mxu0
    %v1560 = vadd.f32 %v1471, %v1559
    %v1561 = vpop.f32.mrf.mxu0
    %v1562 = vadd.f32 %v1473, %v1561
    %1563 = vmatmul.bf16.gmra.mxu0 %v792
    %v1564 = vpop.f32.mrf.mxu0
    %v1565 = vadd.f32 %v1476, %v1564
    %v1566 = vpop.f32.mrf.mxu0
    %v1567 = vadd.f32 %v1478, %v1566
    %1568 = vmatmul.bf16.gmra.mxu0 %v795
    %v1569 = vpop.f32.mrf.mxu0
    %v1570 = vadd.f32 %v1481, %v1569
    %v1571 = vpop.f32.mrf.mxu0
    %v1572 = vadd.f32 %v1483, %v1571
    %1573 = vmatmul.bf16.gmra.mxu0 %v798
    %v1574 = vpop.f32.mrf.mxu0
    %v1575 = vadd.f32 %v1486, %v1574
    %v1576 = vpop.f32.mrf.mxu0
    %v1577 = vadd.f32 %v1488, %v1576
    %1578 = vmatmul.bf16.gmra.mxu0 %v801
    %v1579 = vpop.f32.mrf.mxu0
    %v1580 = vadd.f32 %v1491, %v1579
    %v1581 = vpop.f32.mrf.mxu0
    %v1582 = vadd.f32 %v1493, %v1581
    %1583 = vmatmul.bf16.gmra.mxu0 %v804
    %v1584 = vpop.f32.mrf.mxu0
    %v1585 = vadd.f32 %v1496, %v1584
    %v1586 = vpop.f32.mrf.mxu0
    %v1587 = vadd.f32 %v1498, %v1586
    %1588 = vmatmul.bf16.gmra.mxu0 %v807
    %v1589 = vpop.f32.mrf.mxu0
    %v1590 = vadd.f32 %v1501, %v1589
    %v1591 = vpop.f32.mrf.mxu0
    %v1592 = vadd.f32 %v1503, %v1591
    %1593 = vmatmul.bf16.gmra.mxu0 %v810
    %v1594 = vpop.f32.mrf.mxu0
    %v1595 = vadd.f32 %v1506, %v1594
    %v1596 = vpop.f32.mrf.mxu0
    %v1597 = vadd.f32 %v1508, %v1596
    %1598 = vmatmul.bf16.gmra.mxu0 %v813
    %v1599 = vpop.f32.mrf.mxu0
    %v1600 = vadd.f32 %v1511, %v1599
    %v1601 = vpop.f32.mrf.mxu0
    %v1602 = vadd.f32 %v1513, %v1601
    %1603 = vmatmul.bf16.gmra.mxu0 %v816
    %v1604 = vpop.f32.mrf.mxu0
    %v1605 = vadd.f32 %v1516, %v1604
    %v1606 = vpop.f32.mrf.mxu0
    %v1607 = vadd.f32 %v1518, %v1606
    %1608 = vmatmul.bf16.gmra.mxu0 %v819
    %v1609 = vpop.f32.mrf.mxu0
    %v1610 = vadd.f32 %v1521, %v1609
    %v1611 = vpop.f32.mrf.mxu0
    %v1612 = vadd.f32 %v1523, %v1611
    %1613 = vmatmul.bf16.gmra.mxu0 %v822
    %v1614 = vpop.f32.mrf.mxu0
    %v1615 = vadd.f32 %v1526, %v1614
    %v1616 = vpop.f32.mrf.mxu0
    %v1617 = vadd.f32 %v1528, %v1616
    %1618 = vmatmul.bf16.gmra.mxu0 %v825
    %v1619 = vpop.f32.mrf.mxu0
    %v1620 = vadd.f32 %v1531, %v1619
    %v1621 = vpop.f32.mrf.mxu0
    %v1622 = vadd.f32 %v1533, %v1621
    %1623 = vmatmul.bf16.gmra.mxu0 %v828
    %v1624 = vpop.f32.mrf.mxu0
    %v1625 = vadd.f32 %v1536, %v1624
    %v1626 = vpop.f32.mrf.mxu0
    %v1627 = vadd.f32 %v1538, %v1626
    %1628 = vmatmul.bf16.gmra.mxu0 %v831
    %v1629 = vpop.f32.mrf.mxu0
    %v1630 = vadd.f32 %v1541, %v1629
    %v1631 = vpop.f32.mrf.mxu0
    %v1632 = vadd.f32 %v1543, %v1631
    %1633 = vdwg.mxu0
    %1634 = vmatpush.bf16.msra.mxu0 %v671
    %1635 = vmatpush.bf16.msra.mxu0 %v667
    %1636 = vmatpush.bf16.msra.mxu0 %v663
    %1637 = vmatpush.bf16.msra.mxu0 %v659
    %1638 = vmatpush.bf16.msra.mxu0 %v655
    %1639 = vmatpush.bf16.msra.mxu0 %v651
    %1640 = vmatpush.bf16.msra.mxu0 %v647
    %1641 = vmatpush.bf16.msra.mxu0 %v643
    %1642 = vmatmul.bf16.gmra.mxu0 %v344
    %v1643 = vpop.f32.mrf.mxu0
    %v1644 = vadd.f32 %v179, %v1643
    %v1645 = vpop.f32.mrf.mxu0
    %v1646 = vadd.f32 %v179, %v1645
    %1647 = vmatmul.bf16.gmra.mxu0 %v347
    %v1648 = vpop.f32.mrf.mxu0
    %v1649 = vadd.f32 %v179, %v1648
    %v1650 = vpop.f32.mrf.mxu0
    %v1651 = vadd.f32 %v179, %v1650
    %1652 = vmatmul.bf16.gmra.mxu0 %v350
    %v1653 = vpop.f32.mrf.mxu0
    %v1654 = vadd.f32 %v179, %v1653
    %v1655 = vpop.f32.mrf.mxu0
    %v1656 = vadd.f32 %v179, %v1655
    %1657 = vmatmul.bf16.gmra.mxu0 %v353
    %v1658 = vpop.f32.mrf.mxu0
    %v1659 = vadd.f32 %v179, %v1658
    %v1660 = vpop.f32.mrf.mxu0
    %v1661 = vadd.f32 %v179, %v1660
    %1662 = vmatmul.bf16.gmra.mxu0 %v356
    %v1663 = vpop.f32.mrf.mxu0
    %v1664 = vadd.f32 %v179, %v1663
    %v1665 = vpop.f32.mrf.mxu0
    %v1666 = vadd.f32 %v179, %v1665
    %1667 = vmatmul.bf16.gmra.mxu0 %v359
    %v1668 = vpop.f32.mrf.mxu0
    %v1669 = vadd.f32 %v179, %v1668
    %v1670 = vpop.f32.mrf.mxu0
    %v1671 = vadd.f32 %v179, %v1670
    %1672 = vmatmul.bf16.gmra.mxu0 %v362
    %v1673 = vpop.f32.mrf.mxu0
    %v1674 = vadd.f32 %v179, %v1673
    %v1675 = vpop.f32.mrf.mxu0
    %v1676 = vadd.f32 %v179, %v1675
    %1677 = vmatmul.bf16.gmra.mxu0 %v365
    %v1678 = vpop.f32.mrf.mxu0
    %v1679 = vadd.f32 %v179, %v1678
    %v1680 = vpop.f32.mrf.mxu0
    %v1681 = vadd.f32 %v179, %v1680
    %1682 = vmatmul.bf16.gmra.mxu0 %v368
    %v1683 = vpop.f32.mrf.mxu0
    %v1684 = vadd.f32 %v179, %v1683
    %v1685 = vpop.f32.mrf.mxu0
    %v1686 = vadd.f32 %v179, %v1685
    %1687 = vmatmul.bf16.gmra.mxu0 %v371
    %v1688 = vpop.f32.mrf.mxu0
    %v1689 = vadd.f32 %v179, %v1688
    %v1690 = vpop.f32.mrf.mxu0
    %v1691 = vadd.f32 %v179, %v1690
    %1692 = vmatmul.bf16.gmra.mxu0 %v374
    %v1693 = vpop.f32.mrf.mxu0
    %v1694 = vadd.f32 %v179, %v1693
    %v1695 = vpop.f32.mrf.mxu0
    %v1696 = vadd.f32 %v179, %v1695
    %1697 = vmatmul.bf16.gmra.mxu0 %v377
    %v1698 = vpop.f32.mrf.mxu0
    %v1699 = vadd.f32 %v179, %v1698
    %v1700 = vpop.f32.mrf.mxu0
    %v1701 = vadd.f32 %v179, %v1700
    %1702 = vmatmul.bf16.gmra.mxu0 %v380
    %v1703 = vpop.f32.mrf.mxu0
    %v1704 = vadd.f32 %v179, %v1703
    %v1705 = vpop.f32.mrf.mxu0
    %v1706 = vadd.f32 %v179, %v1705
    %1707 = vmatmul.bf16.gmra.mxu0 %v383
    %v1708 = vpop.f32.mrf.mxu0
    %v1709 = vadd.f32 %v179, %v1708
    %v1710 = vpop.f32.mrf.mxu0
    %v1711 = vadd.f32 %v179, %v1710
    %1712 = vmatmul.bf16.gmra.mxu0 %v386
    %v1713 = vpop.f32.mrf.mxu0
    %v1714 = vadd.f32 %v179, %v1713
    %v1715 = vpop.f32.mrf.mxu0
    %v1716 = vadd.f32 %v179, %v1715
    %1717 = vmatmul.bf16.gmra.mxu0 %v389
    %v1718 = vpop.f32.mrf.mxu0
    %v1719 = vadd.f32 %v179, %v1718
    %v1720 = vpop.f32.mrf.mxu0
    %v1721 = vadd.f32 %v179, %v1720
    %1722 = vdwg.mxu0
    %1723 = vmatpush.bf16.msra.mxu0 %v703
    %1724 = vmatpush.bf16.msra.mxu0 %v699
    %1725 = vmatpush.bf16.msra.mxu0 %v695
    %1726 = vmatpush.bf16.msra.mxu0 %v691
    %1727 = vmatpush.bf16.msra.mxu0 %v687
    %1728 = vmatpush.bf16.msra.mxu0 %v683
    %1729 = vmatpush.bf16.msra.mxu0 %v679
    %1730 = vmatpush.bf16.msra.mxu0 %v675
    %1731 = vmatmul.bf16.gmra.mxu0 %v345
    %v1732 = vpop.f32.mrf.mxu0
    %v1733 = vadd.f32 %v1644, %v1732
    %v1734 = vpop.f32.mrf.mxu0
    %v1735 = vadd.f32 %v1646, %v1734
    %1736 = vmatmul.bf16.gmra.mxu0 %v348
    %v1737 = vpop.f32.mrf.mxu0
    %v1738 = vadd.f32 %v1649, %v1737
    %v1739 = vpop.f32.mrf.mxu0
    %v1740 = vadd.f32 %v1651, %v1739
    %1741 = vmatmul.bf16.gmra.mxu0 %v351
    %v1742 = vpop.f32.mrf.mxu0
    %v1743 = vadd.f32 %v1654, %v1742
    %v1744 = vpop.f32.mrf.mxu0
    %v1745 = vadd.f32 %v1656, %v1744
    %1746 = vmatmul.bf16.gmra.mxu0 %v354
    %v1747 = vpop.f32.mrf.mxu0
    %v1748 = vadd.f32 %v1659, %v1747
    %v1749 = vpop.f32.mrf.mxu0
    %v1750 = vadd.f32 %v1661, %v1749
    %1751 = vmatmul.bf16.gmra.mxu0 %v357
    %v1752 = vpop.f32.mrf.mxu0
    %v1753 = vadd.f32 %v1664, %v1752
    %v1754 = vpop.f32.mrf.mxu0
    %v1755 = vadd.f32 %v1666, %v1754
    %1756 = vmatmul.bf16.gmra.mxu0 %v360
    %v1757 = vpop.f32.mrf.mxu0
    %v1758 = vadd.f32 %v1669, %v1757
    %v1759 = vpop.f32.mrf.mxu0
    %v1760 = vadd.f32 %v1671, %v1759
    %1761 = vmatmul.bf16.gmra.mxu0 %v363
    %v1762 = vpop.f32.mrf.mxu0
    %v1763 = vadd.f32 %v1674, %v1762
    %v1764 = vpop.f32.mrf.mxu0
    %v1765 = vadd.f32 %v1676, %v1764
    %1766 = vmatmul.bf16.gmra.mxu0 %v366
    %v1767 = vpop.f32.mrf.mxu0
    %v1768 = vadd.f32 %v1679, %v1767
    %v1769 = vpop.f32.mrf.mxu0
    %v1770 = vadd.f32 %v1681, %v1769
    %1771 = vmatmul.bf16.gmra.mxu0 %v369
    %v1772 = vpop.f32.mrf.mxu0
    %v1773 = vadd.f32 %v1684, %v1772
    %v1774 = vpop.f32.mrf.mxu0
    %v1775 = vadd.f32 %v1686, %v1774
    %1776 = vmatmul.bf16.gmra.mxu0 %v372
    %v1777 = vpop.f32.mrf.mxu0
    %v1778 = vadd.f32 %v1689, %v1777
    %v1779 = vpop.f32.mrf.mxu0
    %v1780 = vadd.f32 %v1691, %v1779
    %1781 = vmatmul.bf16.gmra.mxu0 %v375
    %v1782 = vpop.f32.mrf.mxu0
    %v1783 = vadd.f32 %v1694, %v1782
    %v1784 = vpop.f32.mrf.mxu0
    %v1785 = vadd.f32 %v1696, %v1784
    %1786 = vmatmul.bf16.gmra.mxu0 %v378
    %v1787 = vpop.f32.mrf.mxu0
    %v1788 = vadd.f32 %v1699, %v1787
    %v1789 = vpop.f32.mrf.mxu0
    %v1790 = vadd.f32 %v1701, %v1789
    %1791 = vmatmul.bf16.gmra.mxu0 %v381
    %v1792 = vpop.f32.mrf.mxu0
    %v1793 = vadd.f32 %v1704, %v1792
    %v1794 = vpop.f32.mrf.mxu0
    %v1795 = vadd.f32 %v1706, %v1794
    %1796 = vmatmul.bf16.gmra.mxu0 %v384
    %v1797 = vpop.f32.mrf.mxu0
    %v1798 = vadd.f32 %v1709, %v1797
    %v1799 = vpop.f32.mrf.mxu0
    %v1800 = vadd.f32 %v1711, %v1799
    %1801 = vmatmul.bf16.gmra.mxu0 %v387
    %v1802 = vpop.f32.mrf.mxu0
    %v1803 = vadd.f32 %v1714, %v1802
    %v1804 = vpop.f32.mrf.mxu0
    %v1805 = vadd.f32 %v1716, %v1804
    %1806 = vmatmul.bf16.gmra.mxu0 %v390
    %v1807 = vpop.f32.mrf.mxu0
    %v1808 = vadd.f32 %v1719, %v1807
    %v1809 = vpop.f32.mrf.mxu0
    %v1810 = vadd.f32 %v1721, %v1809
    %1811 = vdwg.mxu0
    %1812 = vmatpush.bf16.msra.mxu0 0
    %1813 = vmatpush.bf16.msra.mxu0 0
    %1814 = vmatpush.bf16.msra.mxu0 0
    %1815 = vmatpush.bf16.msra.mxu0 0
    %1816 = vmatpush.bf16.msra.mxu0 0
    %1817 = vmatpush.bf16.msra.mxu0 0
    %1818 = vmatpush.bf16.msra.mxu0 %v711
    %1819 = vmatpush.bf16.msra.mxu0 %v707
    %1820 = vmatmul.bf16.gmra.mxu0 %v786
    %v1821 = vpop.f32.mrf.mxu0
    %v1822 = vadd.f32 %v1733, %v1821
    %v1823 = vpop.f32.mrf.mxu0
    %v1824 = vadd.f32 %v1735, %v1823
    %1825 = vmatmul.bf16.gmra.mxu0 %v789
    %v1826 = vpop.f32.mrf.mxu0
    %v1827 = vadd.f32 %v1738, %v1826
    %v1828 = vpop.f32.mrf.mxu0
    %v1829 = vadd.f32 %v1740, %v1828
    %1830 = vmatmul.bf16.gmra.mxu0 %v792
    %v1831 = vpop.f32.mrf.mxu0
    %v1832 = vadd.f32 %v1743, %v1831
    %v1833 = vpop.f32.mrf.mxu0
    %v1834 = vadd.f32 %v1745, %v1833
    %1835 = vmatmul.bf16.gmra.mxu0 %v795
    %v1836 = vpop.f32.mrf.mxu0
    %v1837 = vadd.f32 %v1748, %v1836
    %v1838 = vpop.f32.mrf.mxu0
    %v1839 = vadd.f32 %v1750, %v1838
    %1840 = vmatmul.bf16.gmra.mxu0 %v798
    %v1841 = vpop.f32.mrf.mxu0
    %v1842 = vadd.f32 %v1753, %v1841
    %v1843 = vpop.f32.mrf.mxu0
    %v1844 = vadd.f32 %v1755, %v1843
    %1845 = vmatmul.bf16.gmra.mxu0 %v801
    %v1846 = vpop.f32.mrf.mxu0
    %v1847 = vadd.f32 %v1758, %v1846
    %v1848 = vpop.f32.mrf.mxu0
    %v1849 = vadd.f32 %v1760, %v1848
    %1850 = vmatmul.bf16.gmra.mxu0 %v804
    %v1851 = vpop.f32.mrf.mxu0
    %v1852 = vadd.f32 %v1763, %v1851
    %v1853 = vpop.f32.mrf.mxu0
    %v1854 = vadd.f32 %v1765, %v1853
    %1855 = vmatmul.bf16.gmra.mxu0 %v807
    %v1856 = vpop.f32.mrf.mxu0
    %v1857 = vadd.f32 %v1768, %v1856
    %v1858 = vpop.f32.mrf.mxu0
    %v1859 = vadd.f32 %v1770, %v1858
    %1860 = vmatmul.bf16.gmra.mxu0 %v810
    %v1861 = vpop.f32.mrf.mxu0
    %v1862 = vadd.f32 %v1773, %v1861
    %v1863 = vpop.f32.mrf.mxu0
    %v1864 = vadd.f32 %v1775, %v1863
    %1865 = vmatmul.bf16.gmra.mxu0 %v813
    %v1866 = vpop.f32.mrf.mxu0
    %v1867 = vadd.f32 %v1778, %v1866
    %v1868 = vpop.f32.mrf.mxu0
    %v1869 = vadd.f32 %v1780, %v1868
    %1870 = vmatmul.bf16.gmra.mxu0 %v816
    %v1871 = vpop.f32.mrf.mxu0
    %v1872 = vadd.f32 %v1783, %v1871
    %v1873 = vpop.f32.mrf.mxu0
    %v1874 = vadd.f32 %v1785, %v1873
    %1875 = vmatmul.bf16.gmra.mxu0 %v819
    %v1876 = vpop.f32.mrf.mxu0
    %v1877 = vadd.f32 %v1788, %v1876
    %v1878 = vpop.f32.mrf.mxu0
    %v1879 = vadd.f32 %v1790, %v1878
    %1880 = vmatmul.bf16.gmra.mxu0 %v822
    %v1881 = vpop.f32.mrf.mxu0
    %v1882 = vadd.f32 %v1793, %v1881
    %v1883 = vpop.f32.mrf.mxu0
    %v1884 = vadd.f32 %v1795, %v1883
    %1885 = vmatmul.bf16.gmra.mxu0 %v825
    %v1886 = vpop.f32.mrf.mxu0
    %v1887 = vadd.f32 %v1798, %v1886
    %v1888 = vpop.f32.mrf.mxu0
    %v1889 = vadd.f32 %v1800, %v1888
    %1890 = vmatmul.bf16.gmra.mxu0 %v828
    %v1891 = vpop.f32.mrf.mxu0
    %v1892 = vadd.f32 %v1803, %v1891
    %v1893 = vpop.f32.mrf.mxu0
    %v1894 = vadd.f32 %v1805, %v1893
    %1895 = vmatmul.bf16.gmra.mxu0 %v831
    %v1896 = vpop.f32.mrf.mxu0
    %v1897 = vadd.f32 %v1808, %v1896
    %v1898 = vpop.f32.mrf.mxu0
    %v1899 = vadd.f32 %v1810, %v1898
    %1900 = vdwg.mxu0
    %v1901 = vmax.f32 %v1021, 0.0
    %v1902 = vmax.f32 %v1288, 0.0
    %v1903 = vmax.f32 %v1555, 0.0
    %v1904 = vmax.f32 %v1822, 0.0
    %v1905 = vmax.f32 %v1023, 0.0
    %v1906 = vmax.f32 %v1290, 0.0
    %v1907 = vmax.f32 %v1557, 0.0
    %v1908 = vmax.f32 %v1824, 0.0
    %v1909 = vmax.f32 %v1026, 0.0
    %v1910 = vmax.f32 %v1293, 0.0
    %v1911 = vmax.f32 %v1560, 0.0
    %v1912 = vmax.f32 %v1827, 0.0
    %v1913 = vmax.f32 %v1028, 0.0
    %v1914 = vmax.f32 %v1295, 0.0
    %v1915 = vmax.f32 %v1562, 0.0
    %v1916 = vmax.f32 %v1829, 0.0
    %v1917 = vmax.f32 %v1031, 0.0
    %v1918 = vmax.f32 %v1298, 0.0
    %v1919 = vmax.f32 %v1565, 0.0
    %v1920 = vmax.f32 %v1832, 0.0
    %v1921 = vmax.f32 %v1033, 0.0
    %v1922 = vmax.f32 %v1300, 0.0
    %v1923 = vmax.f32 %v1567, 0.0
    %v1924 = vmax.f32 %v1834, 0.0
    %v1925 = vmax.f32 %v1036, 0.0
    %v1926 = vmax.f32 %v1303, 0.0
    %v1927 = vmax.f32 %v1570, 0.0
    %v1928 = vmax.f32 %v1837, 0.0
    %v1929 = vmax.f32 %v1038, 0.0
    %v1930 = vmax.f32 %v1305, 0.0
    %v1931 = vmax.f32 %v1572, 0.0
    %v1932 = vmax.f32 %v1839, 0.0
    %v1933 = vmax.f32 %v1041, 0.0
    %v1934 = vmax.f32 %v1308, 0.0
    %v1935 = vmax.f32 %v1575, 0.0
    %v1936 = vmax.f32 %v1842, 0.0
    %v1937 = vmax.f32 %v1043, 0.0
    %v1938 = vmax.f32 %v1310, 0.0
    %v1939 = vmax.f32 %v1577, 0.0
    %v1940 = vmax.f32 %v1844, 0.0
    %v1941 = vmax.f32 %v1046, 0.0
    %v1942 = vmax.f32 %v1313, 0.0
    %v1943 = vmax.f32 %v1580, 0.0
    %v1944 = vmax.f32 %v1847, 0.0
    %v1945 = vmax.f32 %v1048, 0.0
    %v1946 = vmax.f32 %v1315, 0.0
    %v1947 = vmax.f32 %v1582, 0.0
    %v1948 = vmax.f32 %v1849, 0.0
    %v1949 = vmax.f32 %v1051, 0.0
    %v1950 = vmax.f32 %v1318, 0.0
    %v1951 = vmax.f32 %v1585, 0.0
    %v1952 = vmax.f32 %v1852, 0.0
    %v1953 = vmax.f32 %v1053, 0.0
    %v1954 = vmax.f32 %v1320, 0.0
    %v1955 = vmax.f32 %v1587, 0.0
    %v1956 = vmax.f32 %v1854, 0.0
    %v1957 = vmax.f32 %v1056, 0.0
    %v1958 = vmax.f32 %v1323, 0.0
    %v1959 = vmax.f32 %v1590, 0.0
    %v1960 = vmax.f32 %v1857, 0.0
    %v1961 = vmax.f32 %v1058, 0.0
    %v1962 = vmax.f32 %v1325, 0.0
    %v1963 = vmax.f32 %v1592, 0.0
    %v1964 = vmax.f32 %v1859, 0.0
    %v1965 = vmax.f32 %v1061, 0.0
    %v1966 = vmax.f32 %v1328, 0.0
    %v1967 = vmax.f32 %v1595, 0.0
    %v1968 = vmax.f32 %v1862, 0.0
    %v1969 = vmax.f32 %v1063, 0.0
    %v1970 = vmax.f32 %v1330, 0.0
    %v1971 = vmax.f32 %v1597, 0.0
    %v1972 = vmax.f32 %v1864, 0.0
    %v1973 = vmax.f32 %v1066, 0.0
    %v1974 = vmax.f32 %v1333, 0.0
    %v1975 = vmax.f32 %v1600, 0.0
    %v1976 = vmax.f32 %v1867, 0.0
    %v1977 = vmax.f32 %v1068, 0.0
    %v1978 = vmax.f32 %v1335, 0.0
    %v1979 = vmax.f32 %v1602, 0.0
    %v1980 = vmax.f32 %v1869, 0.0
    %v1981 = vmax.f32 %v1071, 0.0
    %v1982 = vmax.f32 %v1338, 0.0
    %v1983 = vmax.f32 %v1605, 0.0
    %v1984 = vmax.f32 %v1872, 0.0
    %v1985 = vmax.f32 %v1073, 0.0
    %v1986 = vmax.f32 %v1340, 0.0
    %v1987 = vmax.f32 %v1607, 0.0
    %v1988 = vmax.f32 %v1874, 0.0
    %v1989 = vmax.f32 %v1076, 0.0
    %v1990 = vmax.f32 %v1343, 0.0
    %v1991 = vmax.f32 %v1610, 0.0
    %v1992 = vmax.f32 %v1877, 0.0
    %v1993 = vmax.f32 %v1078, 0.0
    %v1994 = vmax.f32 %v1345, 0.0
    %v1995 = vmax.f32 %v1612, 0.0
    %v1996 = vmax.f32 %v1879, 0.0
    %v1997 = vmax.f32 %v1081, 0.0
    %v1998 = vmax.f32 %v1348, 0.0
    %v1999 = vmax.f32 %v1615, 0.0
    %v2000 = vmax.f32 %v1882, 0.0
    %v2001 = vmax.f32 %v1083, 0.0
    %v2002 = vmax.f32 %v1350, 0.0
    %v2003 = vmax.f32 %v1617, 0.0
    %v2004 = vmax.f32 %v1884, 0.0
    %v2005 = vmax.f32 %v1086, 0.0
    %v2006 = vmax.f32 %v1353, 0.0
    %v2007 = vmax.f32 %v1620, 0.0
    %v2008 = vmax.f32 %v1887, 0.0
    %v2009 = vmax.f32 %v1088, 0.0
    %v2010 = vmax.f32 %v1355, 0.0
    %v2011 = vmax.f32 %v1622, 0.0
    %v2012 = vmax.f32 %v1889, 0.0
    %v2013 = vmax.f32 %v1091, 0.0
    %v2014 = vmax.f32 %v1358, 0.0
    %v2015 = vmax.f32 %v1625, 0.0
    %v2016 = vmax.f32 %v1892, 0.0
    %v2017 = vmax.f32 %v1093, 0.0
    %v2018 = vmax.f32 %v1360, 0.0
    %v2019 = vmax.f32 %v1627, 0.0
    %v2020 = vmax.f32 %v1894, 0.0
    %v2021 = vmax.f32 %v1096, 0.0
    %v2022 = vmax.f32 %v1363, 0.0
    %v2023 = vmax.f32 %v1630, 0.0
    %v2024 = vmax.f32 %v1897, 0.0
    %v2025 = vmax.f32 %v1098, 0.0
    %v2026 = vmax.f32 %v1365, 0.0
    %v2027 = vmax.f32 %v1632, 0.0
    %v2028 = vmax.f32 %v1899, 0.0
    %v2029 = vpack.c.bf16 %v1905, %v1901
    %v2030 = vpack.c.bf16 %v1906, %v1902
    %v2031 = vpack.c.bf16 %v1907, %v1903
    %v2032 = vpack.c.bf16 %v1908, %v1904
    %v2033 = vpack.c.bf16 %v1913, %v1909
    %v2034 = vpack.c.bf16 %v1914, %v1910
    %v2035 = vpack.c.bf16 %v1915, %v1911
    %v2036 = vpack.c.bf16 %v1916, %v1912
    %v2037 = vpack.c.bf16 %v1921, %v1917
    %v2038 = vpack.c.bf16 %v1922, %v1918
    %v2039 = vpack.c.bf16 %v1923, %v1919
    %v2040 = vpack.c.bf16 %v1924, %v1920
    %v2041 = vpack.c.bf16 %v1929, %v1925
    %v2042 = vpack.c.bf16 %v1930, %v1926
    %v2043 = vpack.c.bf16 %v1931, %v1927
    %v2044 = vpack.c.bf16 %v1932, %v1928
    %v2045 = vpack.c.bf16 %v1937, %v1933
    %v2046 = vpack.c.bf16 %v1938, %v1934
    %v2047 = vpack.c.bf16 %v1939, %v1935
    %v2048 = vpack.c.bf16 %v1940, %v1936
    %v2049 = vpack.c.bf16 %v1945, %v1941
    %v2050 = vpack.c.bf16 %v1946, %v1942
    %v2051 = vpack.c.bf16 %v1947, %v1943
    %v2052 = vpack.c.bf16 %v1948, %v1944
    %v2053 = vpack.c.bf16 %v1953, %v1949
    %v2054 = vpack.c.bf16 %v1954, %v1950
    %v2055 = vpack.c.bf16 %v1955, %v1951
    %v2056 = vpack.c.bf16 %v1956, %v1952
    %v2057 = vpack.c.bf16 %v1961, %v1957
    %v2058 = vpack.c.bf16 %v1962, %v1958
    %v2059 = vpack.c.bf16 %v1963, %v1959
    %v2060 = vpack.c.bf16 %v1964, %v1960
    %v2061 = vpack.c.bf16 %v1969, %v1965
    %v2062 = vpack.c.bf16 %v1970, %v1966
    %v2063 = vpack.c.bf16 %v1971, %v1967
    %v2064 = vpack.c.bf16 %v1972, %v1968
    %v2065 = vpack.c.bf16 %v1977, %v1973
    %v2066 = vpack.c.bf16 %v1978, %v1974
    %v2067 = vpack.c.bf16 %v1979, %v1975
    %v2068 = vpack.c.bf16 %v1980, %v1976
    %v2069 = vpack.c.bf16 %v1985, %v1981
    %v2070 = vpack.c.bf16 %v1986, %v1982
    %v2071 = vpack.c.bf16 %v1987, %v1983
    %v2072 = vpack.c.bf16 %v1988, %v1984
    %v2073 = vpack.c.bf16 %v1993, %v1989
    %v2074 = vpack.c.bf16 %v1994, %v1990
    %v2075 = vpack.c.bf16 %v1995, %v1991
    %v2076 = vpack.c.bf16 %v1996, %v1992
    %v2077 = vpack.c.bf16 %v2001, %v1997
    %v2078 = vpack.c.bf16 %v2002, %v1998
    %v2079 = vpack.c.bf16 %v2003, %v1999
    %v2080 = vpack.c.bf16 %v2004, %v2000
    %v2081 = vpack.c.bf16 %v2009, %v2005
    %v2082 = vpack.c.bf16 %v2010, %v2006
    %v2083 = vpack.c.bf16 %v2011, %v2007
    %v2084 = vpack.c.bf16 %v2012, %v2008
    %v2085 = vpack.c.bf16 %v2017, %v2013
    %v2086 = vpack.c.bf16 %v2018, %v2014
    %v2087 = vpack.c.bf16 %v2019, %v2015
    %v2088 = vpack.c.bf16 %v2020, %v2016
    %v2089 = vpack.c.bf16 %v2025, %v2021
    %v2090 = vpack.c.bf16 %v2026, %v2022
    %v2091 = vpack.c.bf16 %v2027, %v2023
    %v2092 = vpack.c.bf16 %v2028, %v2024
    %v2093 = vld [vmem:[#allocation2] sm:$0xf]
    %v2094 = vld [vmem:[#allocation2 + $0x4] sm:$0xf]
    %v2095 = vld [vmem:[#allocation2 + $0x8] sm:$0xf]
    %v2096 = vld [vmem:[#allocation2 + $0xc] sm:$0xf]
    %v2097 = vld [vmem:[#allocation2 + $0x10] sm:$0xf]
    %v2098 = vld [vmem:[#allocation2 + $0x14] sm:$0xf]
    %v2099 = vld [vmem:[#allocation2 + $0x18] sm:$0xf]
    %v2100 = vld [vmem:[#allocation2 + $0x1c] sm:$0xf]
    %v2101 = vld [vmem:[#allocation2 + $0x20] sm:$0xf]
    %v2102 = vld [vmem:[#allocation2 + $0x24] sm:$0xf]
    %v2103 = vld [vmem:[#allocation2 + $0x28] sm:$0xf]
    %v2104 = vld [vmem:[#allocation2 + $0x2c] sm:$0xf]
    %v2105 = vld [vmem:[#allocation2 + $0x30] sm:$0xf]
    %v2106 = vld [vmem:[#allocation2 + $0x34] sm:$0xf]
    %v2107 = vld [vmem:[#allocation2 + $0x38] sm:$0xf]
    %v2108 = vld [vmem:[#allocation2 + $0x3c] sm:$0xf]
    %v2109 = vld [vmem:[#allocation2 + $0x40] sm:$0xf]
    %v2110 = vld [vmem:[#allocation2 + $0x44] sm:$0xf]
    %v2111 = vld [vmem:[#allocation2 + $0x48] sm:$0xf]
    %v2112 = vld [vmem:[#allocation2 + $0x4c] sm:$0xf]
    %v2113 = vld [vmem:[#allocation2 + $0x50] sm:$0xf]
    %v2114 = vld [vmem:[#allocation2 + $0x54] sm:$0xf]
    %v2115 = vld [vmem:[#allocation2 + $0x58] sm:$0xf]
    %v2116 = vld [vmem:[#allocation2 + $0x5c] sm:$0xf]
    %v2117 = vld [vmem:[#allocation2 + $0x60] sm:$0xf]
    %v2118 = vld [vmem:[#allocation2 + $0x64] sm:$0xf]
    %v2119 = vld [vmem:[#allocation2 + $0x68] sm:$0xf]
    %v2120 = vld [vmem:[#allocation2 + $0x6c] sm:$0xf]
    %v2121 = vld [vmem:[#allocation2 + $0x70] sm:$0xf]
    %v2122 = vld [vmem:[#allocation2 + $0x74] sm:$0xf]
    %v2123 = vld [vmem:[#allocation2 + $0x78] sm:$0xf]
    %v2124 = vld [vmem:[#allocation2 + $0x7c] sm:$0xf]
    %v2125 = vld [vmem:[#allocation2 + $0x80] sm:$0xf]
    %v2126 = vld [vmem:[#allocation2 + $0x84] sm:$0xf]
    %v2127 = vld [vmem:[#allocation2 + $0x88] sm:$0xf]
    %v2128 = vld [vmem:[#allocation2 + $0x8c] sm:$0xf]
    %v2129 = vld [vmem:[#allocation2 + $0x90] sm:$0xf]
    %v2130 = vld [vmem:[#allocation2 + $0x94] sm:$0xf]
    %v2131 = vld [vmem:[#allocation2 + $0x98] sm:$0xf]
    %v2132 = vld [vmem:[#allocation2 + $0x9c] sm:$0xf]
    %v2133 = vld [vmem:[#allocation2 + $0xa0] sm:$0xf]
    %v2134 = vld [vmem:[#allocation2 + $0xa4] sm:$0xf]
    %v2135 = vld [vmem:[#allocation2 + $0xa8] sm:$0xf]
    %v2136 = vld [vmem:[#allocation2 + $0xac] sm:$0xf]
    %v2137 = vld [vmem:[#allocation2 + $0xb0] sm:$0xf]
    %v2138 = vld [vmem:[#allocation2 + $0xb4] sm:$0xf]
    %v2139 = vld [vmem:[#allocation2 + $0xb8] sm:$0xf]
    %v2140 = vld [vmem:[#allocation2 + $0xbc] sm:$0xf]
    %v2141 = vld [vmem:[#allocation2 + $0xc0] sm:$0xf]
    %v2142 = vld [vmem:[#allocation2 + $0xc4] sm:$0xf]
    %v2143 = vld [vmem:[#allocation2 + $0xc8] sm:$0xf]
    %v2144 = vld [vmem:[#allocation2 + $0xcc] sm:$0xf]
    %v2145 = vld [vmem:[#allocation2 + $0xd0] sm:$0xf]
    %v2146 = vld [vmem:[#allocation2 + $0xd4] sm:$0xf]
    %v2147 = vld [vmem:[#allocation2 + $0xd8] sm:$0xf]
    %v2148 = vld [vmem:[#allocation2 + $0xdc] sm:$0xf]
    %v2149 = vld [vmem:[#allocation2 + $0xe0] sm:$0xf]
    %v2150 = vld [vmem:[#allocation2 + $0xe4] sm:$0xf]
    %v2151 = vld [vmem:[#allocation2 + $0xe8] sm:$0xf]
    %v2152 = vld [vmem:[#allocation2 + $0xec] sm:$0xf]
    %v2153 = vld [vmem:[#allocation2 + $0xf0] sm:$0xf]
    %v2154 = vld [vmem:[#allocation2 + $0xf4] sm:$0xf]
    %v2155 = vld [vmem:[#allocation2 + $0xf8] sm:$0xf]
    %v2156 = vld [vmem:[#allocation2 + $0xfc] sm:$0xf]
    %v2157 = vld [vmem:[%s4] sm:$0x1]
    %v2159 = vperm.slane %v2157, 0
    %v2225 = vunpack.c.l.b16 %v2093
    %v2226 = vunpack.c.l.b16 %v2094
    %v2227 = vunpack.c.l.b16 %v2095
    %v2228 = vunpack.c.l.b16 %v2096
    %v2229 = vunpack.c.l.b16 %v2097
    %v2230 = vunpack.c.l.b16 %v2098
    %v2231 = vunpack.c.l.b16 %v2099
    %v2232 = vunpack.c.l.b16 %v2100
    %v2233 = vunpack.c.l.b16 %v2101
    %v2234 = vunpack.c.l.b16 %v2102
    %v2235 = vunpack.c.l.b16 %v2103
    %v2236 = vunpack.c.l.b16 %v2104
    %v2237 = vunpack.c.l.b16 %v2105
    %v2238 = vunpack.c.l.b16 %v2106
    %v2239 = vunpack.c.l.b16 %v2107
    %v2240 = vunpack.c.l.b16 %v2108
    %v2241 = vunpack.c.l.b16 %v2109
    %v2242 = vunpack.c.l.b16 %v2110
    %v2243 = vunpack.c.l.b16 %v2111
    %v2244 = vunpack.c.l.b16 %v2112
    %v2245 = vunpack.c.l.b16 %v2113
    %v2246 = vunpack.c.l.b16 %v2114
    %v2247 = vunpack.c.l.b16 %v2115
    %v2248 = vunpack.c.l.b16 %v2116
    %v2249 = vunpack.c.l.b16 %v2117
    %v2250 = vunpack.c.l.b16 %v2118
    %v2251 = vunpack.c.l.b16 %v2119
    %v2252 = vunpack.c.l.b16 %v2120
    %v2253 = vunpack.c.l.b16 %v2121
    %v2254 = vunpack.c.l.b16 %v2122
    %v2255 = vunpack.c.l.b16 %v2123
    %v2256 = vunpack.c.l.b16 %v2124
    %v2257 = vunpack.c.l.b16 %v2125
    %v2258 = vunpack.c.l.b16 %v2126
    %v2259 = vunpack.c.l.b16 %v2127
    %v2260 = vunpack.c.l.b16 %v2128
    %v2261 = vunpack.c.l.b16 %v2129
    %v2262 = vunpack.c.l.b16 %v2130
    %v2263 = vunpack.c.l.b16 %v2131
    %v2264 = vunpack.c.l.b16 %v2132
    %v2265 = vunpack.c.l.b16 %v2133
    %v2266 = vunpack.c.l.b16 %v2134
    %v2267 = vunpack.c.l.b16 %v2135
    %v2268 = vunpack.c.l.b16 %v2136
    %v2269 = vunpack.c.l.b16 %v2137
    %v2270 = vunpack.c.l.b16 %v2138
    %v2271 = vunpack.c.l.b16 %v2139
    %v2272 = vunpack.c.l.b16 %v2140
    %v2273 = vunpack.c.l.b16 %v2141
    %v2274 = vunpack.c.l.b16 %v2142
    %v2275 = vunpack.c.l.b16 %v2143
    %v2276 = vunpack.c.l.b16 %v2144
    %v2277 = vunpack.c.l.b16 %v2145
    %v2278 = vunpack.c.l.b16 %v2146
    %v2279 = vunpack.c.l.b16 %v2147
    %v2280 = vunpack.c.l.b16 %v2148
    %v2281 = vunpack.c.l.b16 %v2149
    %v2282 = vunpack.c.l.b16 %v2150
    %v2283 = vunpack.c.l.b16 %v2151
    %v2284 = vunpack.c.l.b16 %v2152
    %v2285 = vunpack.c.l.b16 %v2153
    %v2286 = vunpack.c.l.b16 %v2154
    %v2287 = vunpack.c.l.b16 %v2155
    %v2288 = vunpack.c.l.b16 %v2156
    %v2289 = vpack.c.b16 %v2226, %v2225
    %v2290 = vpack.c.b16 %v2228, %v2227
    %v2291 = vpack.c.b16 %v2230, %v2229
    %v2292 = vpack.c.b16 %v2232, %v2231
    %v2293 = vpack.c.b16 %v2234, %v2233
    %v2294 = vpack.c.b16 %v2236, %v2235
    %v2295 = vpack.c.b16 %v2238, %v2237
    %v2296 = vpack.c.b16 %v2240, %v2239
    %v2297 = vpack.c.b16 %v2242, %v2241
    %v2298 = vpack.c.b16 %v2244, %v2243
    %v2299 = vpack.c.b16 %v2246, %v2245
    %v2300 = vpack.c.b16 %v2248, %v2247
    %v2301 = vpack.c.b16 %v2250, %v2249
    %v2302 = vpack.c.b16 %v2252, %v2251
    %v2303 = vpack.c.b16 %v2254, %v2253
    %v2304 = vpack.c.b16 %v2256, %v2255
    %v2305 = vpack.c.b16 %v2258, %v2257
    %v2306 = vpack.c.b16 %v2260, %v2259
    %v2307 = vpack.c.b16 %v2262, %v2261
    %v2308 = vpack.c.b16 %v2264, %v2263
    %v2309 = vpack.c.b16 %v2266, %v2265
    %v2310 = vpack.c.b16 %v2268, %v2267
    %v2311 = vpack.c.b16 %v2270, %v2269
    %v2312 = vpack.c.b16 %v2272, %v2271
    %v2313 = vpack.c.b16 %v2274, %v2273
    %v2314 = vpack.c.b16 %v2276, %v2275
    %v2315 = vpack.c.b16 %v2278, %v2277
    %v2316 = vpack.c.b16 %v2280, %v2279
    %v2317 = vpack.c.b16 %v2282, %v2281
    %v2318 = vpack.c.b16 %v2284, %v2283
    %v2319 = vpack.c.b16 %v2286, %v2285
    %v2320 = vpack.c.b16 %v2288, %v2287
    %2353 = vmatpush.bf16.msra.mxu0 %v2296
    %2354 = vmatpush.bf16.msra.mxu0 %v2295
    %2355 = vmatpush.bf16.msra.mxu0 %v2294
    %2356 = vmatpush.bf16.msra.mxu0 %v2293
    %2357 = vmatpush.bf16.msra.mxu0 %v2292
    %2358 = vmatpush.bf16.msra.mxu0 %v2291
    %2359 = vmatpush.bf16.msra.mxu0 %v2290
    %2360 = vmatpush.bf16.msra.mxu0 %v2289
    %2361 = vmatmul.bf16.gmra.mxu0 %v2029
    %v2362 = vpop.f32.mrf.mxu0
    %v2363 = vadd.f32 %v2159, %v2362
    %v2364 = vpop.f32.mrf.mxu0
    %v2365 = vadd.f32 %v2159, %v2364
    %2366 = vmatmul.bf16.gmra.mxu0 %v2033
    %v2367 = vpop.f32.mrf.mxu0
    %v2368 = vadd.f32 %v2159, %v2367
    %v2369 = vpop.f32.mrf.mxu0
    %v2370 = vadd.f32 %v2159, %v2369
    %2371 = vmatmul.bf16.gmra.mxu0 %v2037
    %v2372 = vpop.f32.mrf.mxu0
    %v2373 = vadd.f32 %v2159, %v2372
    %v2374 = vpop.f32.mrf.mxu0
    %v2375 = vadd.f32 %v2159, %v2374
    %2376 = vmatmul.bf16.gmra.mxu0 %v2041
    %v2377 = vpop.f32.mrf.mxu0
    %v2378 = vadd.f32 %v2159, %v2377
    %v2379 = vpop.f32.mrf.mxu0
    %v2380 = vadd.f32 %v2159, %v2379
    %2381 = vmatmul.bf16.gmra.mxu0 %v2045
    %v2382 = vpop.f32.mrf.mxu0
    %v2383 = vadd.f32 %v2159, %v2382
    %v2384 = vpop.f32.mrf.mxu0
    %v2385 = vadd.f32 %v2159, %v2384
    %2386 = vmatmul.bf16.gmra.mxu0 %v2049
    %v2387 = vpop.f32.mrf.mxu0
    %v2388 = vadd.f32 %v2159, %v2387
    %v2389 = vpop.f32.mrf.mxu0
    %v2390 = vadd.f32 %v2159, %v2389
    %2391 = vmatmul.bf16.gmra.mxu0 %v2053
    %v2392 = vpop.f32.mrf.mxu0
    %v2393 = vadd.f32 %v2159, %v2392
    %v2394 = vpop.f32.mrf.mxu0
    %v2395 = vadd.f32 %v2159, %v2394
    %2396 = vmatmul.bf16.gmra.mxu0 %v2057
    %v2397 = vpop.f32.mrf.mxu0
    %v2398 = vadd.f32 %v2159, %v2397
    %v2399 = vpop.f32.mrf.mxu0
    %v2400 = vadd.f32 %v2159, %v2399
    %2401 = vmatmul.bf16.gmra.mxu0 %v2061
    %v2402 = vpop.f32.mrf.mxu0
    %v2403 = vadd.f32 %v2159, %v2402
    %v2404 = vpop.f32.mrf.mxu0
    %v2405 = vadd.f32 %v2159, %v2404
    %2406 = vmatmul.bf16.gmra.mxu0 %v2065
    %v2407 = vpop.f32.mrf.mxu0
    %v2408 = vadd.f32 %v2159, %v2407
    %v2409 = vpop.f32.mrf.mxu0
    %v2410 = vadd.f32 %v2159, %v2409
    %2411 = vmatmul.bf16.gmra.mxu0 %v2069
    %v2412 = vpop.f32.mrf.mxu0
    %v2413 = vadd.f32 %v2159, %v2412
    %v2414 = vpop.f32.mrf.mxu0
    %v2415 = vadd.f32 %v2159, %v2414
    %2416 = vmatmul.bf16.gmra.mxu0 %v2073
    %v2417 = vpop.f32.mrf.mxu0
    %v2418 = vadd.f32 %v2159, %v2417
    %v2419 = vpop.f32.mrf.mxu0
    %v2420 = vadd.f32 %v2159, %v2419
    %2421 = vmatmul.bf16.gmra.mxu0 %v2077
    %v2422 = vpop.f32.mrf.mxu0
    %v2423 = vadd.f32 %v2159, %v2422
    %v2424 = vpop.f32.mrf.mxu0
    %v2425 = vadd.f32 %v2159, %v2424
    %2426 = vmatmul.bf16.gmra.mxu0 %v2081
    %v2427 = vpop.f32.mrf.mxu0
    %v2428 = vadd.f32 %v2159, %v2427
    %v2429 = vpop.f32.mrf.mxu0
    %v2430 = vadd.f32 %v2159, %v2429
    %2431 = vmatmul.bf16.gmra.mxu0 %v2085
    %v2432 = vpop.f32.mrf.mxu0
    %v2433 = vadd.f32 %v2159, %v2432
    %v2434 = vpop.f32.mrf.mxu0
    %v2435 = vadd.f32 %v2159, %v2434
    %2436 = vmatmul.bf16.gmra.mxu0 %v2089
    %v2437 = vpop.f32.mrf.mxu0
    %v2438 = vadd.f32 %v2159, %v2437
    %v2439 = vpop.f32.mrf.mxu0
    %v2440 = vadd.f32 %v2159, %v2439
    %2441 = vdwg.mxu0
    %2442 = vmatpush.bf16.msra.mxu0 %v2304
    %2443 = vmatpush.bf16.msra.mxu0 %v2303
    %2444 = vmatpush.bf16.msra.mxu0 %v2302
    %2445 = vmatpush.bf16.msra.mxu0 %v2301
    %2446 = vmatpush.bf16.msra.mxu0 %v2300
    %2447 = vmatpush.bf16.msra.mxu0 %v2299
    %2448 = vmatpush.bf16.msra.mxu0 %v2298
    %2449 = vmatpush.bf16.msra.mxu0 %v2297
    %2450 = vmatmul.bf16.gmra.mxu0 %v2030
    %v2451 = vpop.f32.mrf.mxu0
    %v2452 = vadd.f32 %v2363, %v2451
    %v2453 = vpop.f32.mrf.mxu0
    %v2454 = vadd.f32 %v2365, %v2453
    %2455 = vmatmul.bf16.gmra.mxu0 %v2034
    %v2456 = vpop.f32.mrf.mxu0
    %v2457 = vadd.f32 %v2368, %v2456
    %v2458 = vpop.f32.mrf.mxu0
    %v2459 = vadd.f32 %v2370, %v2458
    %2460 = vmatmul.bf16.gmra.mxu0 %v2038
    %v2461 = vpop.f32.mrf.mxu0
    %v2462 = vadd.f32 %v2373, %v2461
    %v2463 = vpop.f32.mrf.mxu0
    %v2464 = vadd.f32 %v2375, %v2463
    %2465 = vmatmul.bf16.gmra.mxu0 %v2042
    %v2466 = vpop.f32.mrf.mxu0
    %v2467 = vadd.f32 %v2378, %v2466
    %v2468 = vpop.f32.mrf.mxu0
    %v2469 = vadd.f32 %v2380, %v2468
    %2470 = vmatmul.bf16.gmra.mxu0 %v2046
    %v2471 = vpop.f32.mrf.mxu0
    %v2472 = vadd.f32 %v2383, %v2471
    %v2473 = vpop.f32.mrf.mxu0
    %v2474 = vadd.f32 %v2385, %v2473
    %2475 = vmatmul.bf16.gmra.mxu0 %v2050
    %v2476 = vpop.f32.mrf.mxu0
    %v2477 = vadd.f32 %v2388, %v2476
    %v2478 = vpop.f32.mrf.mxu0
    %v2479 = vadd.f32 %v2390, %v2478
    %2480 = vmatmul.bf16.gmra.mxu0 %v2054
    %v2481 = vpop.f32.mrf.mxu0
    %v2482 = vadd.f32 %v2393, %v2481
    %v2483 = vpop.f32.mrf.mxu0
    %v2484 = vadd.f32 %v2395, %v2483
    %2485 = vmatmul.bf16.gmra.mxu0 %v2058
    %v2486 = vpop.f32.mrf.mxu0
    %v2487 = vadd.f32 %v2398, %v2486
    %v2488 = vpop.f32.mrf.mxu0
    %v2489 = vadd.f32 %v2400, %v2488
    %2490 = vmatmul.bf16.gmra.mxu0 %v2062
    %v2491 = vpop.f32.mrf.mxu0
    %v2492 = vadd.f32 %v2403, %v2491
    %v2493 = vpop.f32.mrf.mxu0
    %v2494 = vadd.f32 %v2405, %v2493
    %2495 = vmatmul.bf16.gmra.mxu0 %v2066
    %v2496 = vpop.f32.mrf.mxu0
    %v2497 = vadd.f32 %v2408, %v2496
    %v2498 = vpop.f32.mrf.mxu0
    %v2499 = vadd.f32 %v2410, %v2498
    %2500 = vmatmul.bf16.gmra.mxu0 %v2070
    %v2501 = vpop.f32.mrf.mxu0
    %v2502 = vadd.f32 %v2413, %v2501
    %v2503 = vpop.f32.mrf.mxu0
    %v2504 = vadd.f32 %v2415, %v2503
    %2505 = vmatmul.bf16.gmra.mxu0 %v2074
    %v2506 = vpop.f32.mrf.mxu0
    %v2507 = vadd.f32 %v2418, %v2506
    %v2508 = vpop.f32.mrf.mxu0
    %v2509 = vadd.f32 %v2420, %v2508
    %2510 = vmatmul.bf16.gmra.mxu0 %v2078
    %v2511 = vpop.f32.mrf.mxu0
    %v2512 = vadd.f32 %v2423, %v2511
    %v2513 = vpop.f32.mrf.mxu0
    %v2514 = vadd.f32 %v2425, %v2513
    %2515 = vmatmul.bf16.gmra.mxu0 %v2082
    %v2516 = vpop.f32.mrf.mxu0
    %v2517 = vadd.f32 %v2428, %v2516
    %v2518 = vpop.f32.mrf.mxu0
    %v2519 = vadd.f32 %v2430, %v2518
    %2520 = vmatmul.bf16.gmra.mxu0 %v2086
    %v2521 = vpop.f32.mrf.mxu0
    %v2522 = vadd.f32 %v2433, %v2521
    %v2523 = vpop.f32.mrf.mxu0
    %v2524 = vadd.f32 %v2435, %v2523
    %2525 = vmatmul.bf16.gmra.mxu0 %v2090
    %v2526 = vpop.f32.mrf.mxu0
    %v2527 = vadd.f32 %v2438, %v2526
    %v2528 = vpop.f32.mrf.mxu0
    %v2529 = vadd.f32 %v2440, %v2528
    %2530 = vdwg.mxu0
    %2531 = vmatpush.bf16.msra.mxu0 %v2312
    %2532 = vmatpush.bf16.msra.mxu0 %v2311
    %2533 = vmatpush.bf16.msra.mxu0 %v2310
    %2534 = vmatpush.bf16.msra.mxu0 %v2309
    %2535 = vmatpush.bf16.msra.mxu0 %v2308
    %2536 = vmatpush.bf16.msra.mxu0 %v2307
    %2537 = vmatpush.bf16.msra.mxu0 %v2306
    %2538 = vmatpush.bf16.msra.mxu0 %v2305
    %2539 = vmatmul.bf16.gmra.mxu0 %v2031
    %v2540 = vpop.f32.mrf.mxu0
    %v2541 = vadd.f32 %v2452, %v2540
    %v2542 = vpop.f32.mrf.mxu0
    %v2543 = vadd.f32 %v2454, %v2542
    %2544 = vmatmul.bf16.gmra.mxu0 %v2035
    %v2545 = vpop.f32.mrf.mxu0
    %v2546 = vadd.f32 %v2457, %v2545
    %v2547 = vpop.f32.mrf.mxu0
    %v2548 = vadd.f32 %v2459, %v2547
    %2549 = vmatmul.bf16.gmra.mxu0 %v2039
    %v2550 = vpop.f32.mrf.mxu0
    %v2551 = vadd.f32 %v2462, %v2550
    %v2552 = vpop.f32.mrf.mxu0
    %v2553 = vadd.f32 %v2464, %v2552
    %2554 = vmatmul.bf16.gmra.mxu0 %v2043
    %v2555 = vpop.f32.mrf.mxu0
    %v2556 = vadd.f32 %v2467, %v2555
    %v2557 = vpop.f32.mrf.mxu0
    %v2558 = vadd.f32 %v2469, %v2557
    %2559 = vmatmul.bf16.gmra.mxu0 %v2047
    %v2560 = vpop.f32.mrf.mxu0
    %v2561 = vadd.f32 %v2472, %v2560
    %v2562 = vpop.f32.mrf.mxu0
    %v2563 = vadd.f32 %v2474, %v2562
    %2564 = vmatmul.bf16.gmra.mxu0 %v2051
    %v2565 = vpop.f32.mrf.mxu0
    %v2566 = vadd.f32 %v2477, %v2565
    %v2567 = vpop.f32.mrf.mxu0
    %v2568 = vadd.f32 %v2479, %v2567
    %2569 = vmatmul.bf16.gmra.mxu0 %v2055
    %v2570 = vpop.f32.mrf.mxu0
    %v2571 = vadd.f32 %v2482, %v2570
    %v2572 = vpop.f32.mrf.mxu0
    %v2573 = vadd.f32 %v2484, %v2572
    %2574 = vmatmul.bf16.gmra.mxu0 %v2059
    %v2575 = vpop.f32.mrf.mxu0
    %v2576 = vadd.f32 %v2487, %v2575
    %v2577 = vpop.f32.mrf.mxu0
    %v2578 = vadd.f32 %v2489, %v2577
    %2579 = vmatmul.bf16.gmra.mxu0 %v2063
    %v2580 = vpop.f32.mrf.mxu0
    %v2581 = vadd.f32 %v2492, %v2580
    %v2582 = vpop.f32.mrf.mxu0
    %v2583 = vadd.f32 %v2494, %v2582
    %2584 = vmatmul.bf16.gmra.mxu0 %v2067
    %v2585 = vpop.f32.mrf.mxu0
    %v2586 = vadd.f32 %v2497, %v2585
    %v2587 = vpop.f32.mrf.mxu0
    %v2588 = vadd.f32 %v2499, %v2587
    %2589 = vmatmul.bf16.gmra.mxu0 %v2071
    %v2590 = vpop.f32.mrf.mxu0
    %v2591 = vadd.f32 %v2502, %v2590
    %v2592 = vpop.f32.mrf.mxu0
    %v2593 = vadd.f32 %v2504, %v2592
    %2594 = vmatmul.bf16.gmra.mxu0 %v2075
    %v2595 = vpop.f32.mrf.mxu0
    %v2596 = vadd.f32 %v2507, %v2595
    %v2597 = vpop.f32.mrf.mxu0
    %v2598 = vadd.f32 %v2509, %v2597
    %2599 = vmatmul.bf16.gmra.mxu0 %v2079
    %v2600 = vpop.f32.mrf.mxu0
    %v2601 = vadd.f32 %v2512, %v2600
    %v2602 = vpop.f32.mrf.mxu0
    %v2603 = vadd.f32 %v2514, %v2602
    %2604 = vmatmul.bf16.gmra.mxu0 %v2083
    %v2605 = vpop.f32.mrf.mxu0
    %v2606 = vadd.f32 %v2517, %v2605
    %v2607 = vpop.f32.mrf.mxu0
    %v2608 = vadd.f32 %v2519, %v2607
    %2609 = vmatmul.bf16.gmra.mxu0 %v2087
    %v2610 = vpop.f32.mrf.mxu0
    %v2611 = vadd.f32 %v2522, %v2610
    %v2612 = vpop.f32.mrf.mxu0
    %v2613 = vadd.f32 %v2524, %v2612
    %2614 = vmatmul.bf16.gmra.mxu0 %v2091
    %v2615 = vpop.f32.mrf.mxu0
    %v2616 = vadd.f32 %v2527, %v2615
    %v2617 = vpop.f32.mrf.mxu0
    %v2618 = vadd.f32 %v2529, %v2617
    %2619 = vdwg.mxu0
    %2620 = vmatpush.bf16.msra.mxu0 %v2320
    %2621 = vmatpush.bf16.msra.mxu0 %v2319
    %2622 = vmatpush.bf16.msra.mxu0 %v2318
    %2623 = vmatpush.bf16.msra.mxu0 %v2317
    %2624 = vmatpush.bf16.msra.mxu0 %v2316
    %2625 = vmatpush.bf16.msra.mxu0 %v2315
    %2626 = vmatpush.bf16.msra.mxu0 %v2314
    %2627 = vmatpush.bf16.msra.mxu0 %v2313
    %2628 = vmatmul.bf16.gmra.mxu0 %v2032
    %v2629 = vpop.f32.mrf.mxu0
    %v2630 = vadd.f32 %v2541, %v2629
    %v2631 = vpop.f32.mrf.mxu0
    %v2632 = vadd.f32 %v2543, %v2631
    %2633 = vmatmul.bf16.gmra.mxu0 %v2036
    %v2634 = vpop.f32.mrf.mxu0
    %v2635 = vadd.f32 %v2546, %v2634
    %v2636 = vpop.f32.mrf.mxu0
    %v2637 = vadd.f32 %v2548, %v2636
    %2638 = vmatmul.bf16.gmra.mxu0 %v2040
    %v2639 = vpop.f32.mrf.mxu0
    %v2640 = vadd.f32 %v2551, %v2639
    %v2641 = vpop.f32.mrf.mxu0
    %v2642 = vadd.f32 %v2553, %v2641
    %2643 = vmatmul.bf16.gmra.mxu0 %v2044
    %v2644 = vpop.f32.mrf.mxu0
    %v2645 = vadd.f32 %v2556, %v2644
    %v2646 = vpop.f32.mrf.mxu0
    %v2647 = vadd.f32 %v2558, %v2646
    %2648 = vmatmul.bf16.gmra.mxu0 %v2048
    %v2649 = vpop.f32.mrf.mxu0
    %v2650 = vadd.f32 %v2561, %v2649
    %v2651 = vpop.f32.mrf.mxu0
    %v2652 = vadd.f32 %v2563, %v2651
    %2653 = vmatmul.bf16.gmra.mxu0 %v2052
    %v2654 = vpop.f32.mrf.mxu0
    %v2655 = vadd.f32 %v2566, %v2654
    %v2656 = vpop.f32.mrf.mxu0
    %v2657 = vadd.f32 %v2568, %v2656
    %2658 = vmatmul.bf16.gmra.mxu0 %v2056
    %v2659 = vpop.f32.mrf.mxu0
    %v2660 = vadd.f32 %v2571, %v2659
    %v2661 = vpop.f32.mrf.mxu0
    %v2662 = vadd.f32 %v2573, %v2661
    %2663 = vmatmul.bf16.gmra.mxu0 %v2060
    %v2664 = vpop.f32.mrf.mxu0
    %v2665 = vadd.f32 %v2576, %v2664
    %v2666 = vpop.f32.mrf.mxu0
    %v2667 = vadd.f32 %v2578, %v2666
    %2668 = vmatmul.bf16.gmra.mxu0 %v2064
    %v2669 = vpop.f32.mrf.mxu0
    %v2670 = vadd.f32 %v2581, %v2669
    %v2671 = vpop.f32.mrf.mxu0
    %v2672 = vadd.f32 %v2583, %v2671
    %2673 = vmatmul.bf16.gmra.mxu0 %v2068
    %v2674 = vpop.f32.mrf.mxu0
    %v2675 = vadd.f32 %v2586, %v2674
    %v2676 = vpop.f32.mrf.mxu0
    %v2677 = vadd.f32 %v2588, %v2676
    %2678 = vmatmul.bf16.gmra.mxu0 %v2072
    %v2679 = vpop.f32.mrf.mxu0
    %v2680 = vadd.f32 %v2591, %v2679
    %v2681 = vpop.f32.mrf.mxu0
    %v2682 = vadd.f32 %v2593, %v2681
    %2683 = vmatmul.bf16.gmra.mxu0 %v2076
    %v2684 = vpop.f32.mrf.mxu0
    %v2685 = vadd.f32 %v2596, %v2684
    %v2686 = vpop.f32.mrf.mxu0
    %v2687 = vadd.f32 %v2598, %v2686
    %2688 = vmatmul.bf16.gmra.mxu0 %v2080
    %v2689 = vpop.f32.mrf.mxu0
    %v2690 = vadd.f32 %v2601, %v2689
    %v2691 = vpop.f32.mrf.mxu0
    %v2692 = vadd.f32 %v2603, %v2691
    %2693 = vmatmul.bf16.gmra.mxu0 %v2084
    %v2694 = vpop.f32.mrf.mxu0
    %v2695 = vadd.f32 %v2606, %v2694
    %v2696 = vpop.f32.mrf.mxu0
    %v2697 = vadd.f32 %v2608, %v2696
    %2698 = vmatmul.bf16.gmra.mxu0 %v2088
    %v2699 = vpop.f32.mrf.mxu0
    %v2700 = vadd.f32 %v2611, %v2699
    %v2701 = vpop.f32.mrf.mxu0
    %v2702 = vadd.f32 %v2613, %v2701
    %2703 = vmatmul.bf16.gmra.mxu0 %v2092
    %v2704 = vpop.f32.mrf.mxu0
    %v2705 = vadd.f32 %v2616, %v2704
    %v2706 = vpop.f32.mrf.mxu0
    %v2707 = vadd.f32 %v2618, %v2706
    %2708 = vdwg.mxu0
    %2741 = vrot.lane.b32.xlu0 %v2630, 119
    %v2742 = vpop.permute.xlu0 %2741
    %2743 = vrot.lane.b32.xlu0 %v2632, 119
    %v2744 = vpop.permute.xlu0 %2743
    %2745 = vrot.lane.b32.xlu0 %v2635, 119
    %v2746 = vpop.permute.xlu0 %2745
    %2747 = vrot.lane.b32.xlu0 %v2637, 119
    %v2748 = vpop.permute.xlu0 %2747
    %2749 = vrot.lane.b32.xlu0 %v2640, 119
    %v2750 = vpop.permute.xlu0 %2749
    %2751 = vrot.lane.b32.xlu0 %v2642, 119
    %v2752 = vpop.permute.xlu0 %2751
    %2753 = vrot.lane.b32.xlu0 %v2645, 119
    %v2754 = vpop.permute.xlu0 %2753
    %2755 = vrot.lane.b32.xlu0 %v2647, 119
    %v2756 = vpop.permute.xlu0 %2755
    %2757 = vrot.lane.b32.xlu0 %v2650, 119
    %v2758 = vpop.permute.xlu0 %2757
    %2759 = vrot.lane.b32.xlu0 %v2652, 119
    %v2760 = vpop.permute.xlu0 %2759
    %2761 = vrot.lane.b32.xlu0 %v2655, 119
    %v2762 = vpop.permute.xlu0 %2761
    %2763 = vrot.lane.b32.xlu0 %v2657, 119
    %v2764 = vpop.permute.xlu0 %2763
    %2765 = vrot.lane.b32.xlu0 %v2660, 119
    %v2766 = vpop.permute.xlu0 %2765
    %2767 = vrot.lane.b32.xlu0 %v2662, 119
    %v2768 = vpop.permute.xlu0 %2767
    %2769 = vrot.lane.b32.xlu0 %v2665, 119
    %v2770 = vpop.permute.xlu0 %2769
    %2771 = vrot.lane.b32.xlu0 %v2667, 119
    %v2772 = vpop.permute.xlu0 %2771
    %2773 = vrot.lane.b32.xlu0 %v2670, 119
    %v2774 = vpop.permute.xlu0 %2773
    %2775 = vrot.lane.b32.xlu0 %v2672, 119
    %v2776 = vpop.permute.xlu0 %2775
    %2777 = vrot.lane.b32.xlu0 %v2675, 119
    %v2778 = vpop.permute.xlu0 %2777
    %2779 = vrot.lane.b32.xlu0 %v2677, 119
    %v2780 = vpop.permute.xlu0 %2779
    %2781 = vrot.lane.b32.xlu0 %v2680, 119
    %v2782 = vpop.permute.xlu0 %2781
    %2783 = vrot.lane.b32.xlu0 %v2682, 119
    %v2784 = vpop.permute.xlu0 %2783
    %2785 = vrot.lane.b32.xlu0 %v2685, 119
    %v2786 = vpop.permute.xlu0 %2785
    %2787 = vrot.lane.b32.xlu0 %v2687, 119
    %v2788 = vpop.permute.xlu0 %2787
    %2789 = vrot.lane.b32.xlu0 %v2690, 119
    %v2790 = vpop.permute.xlu0 %2789
    %2791 = vrot.lane.b32.xlu0 %v2692, 119
    %v2792 = vpop.permute.xlu0 %2791
    %2793 = vrot.lane.b32.xlu0 %v2695, 119
    %v2794 = vpop.permute.xlu0 %2793
    %2795 = vrot.lane.b32.xlu0 %v2697, 119
    %v2796 = vpop.permute.xlu0 %2795
    %2797 = vrot.lane.b32.xlu0 %v2700, 119
    %v2798 = vpop.permute.xlu0 %2797
    %2799 = vrot.lane.b32.xlu0 %v2702, 119
    %v2800 = vpop.permute.xlu0 %2799
    %2801 = vrot.lane.b32.xlu0 %v2705, 119
    %v2802 = vpop.permute.xlu0 %2801
    %2803 = vrot.lane.b32.xlu0 %v2707, 119
    %v2804 = vpop.permute.xlu0 %2803
    %v2837 = vmax.f32 %v2630, %v2742
    %v2838 = vmax.f32 %v2632, %v2744
    %v2839 = vmax.f32 %v2635, %v2746
    %v2840 = vmax.f32 %v2637, %v2748
    %v2841 = vmax.f32 %v2640, %v2750
    %v2842 = vmax.f32 %v2642, %v2752
    %v2843 = vmax.f32 %v2645, %v2754
    %v2844 = vmax.f32 %v2647, %v2756
    %v2845 = vmax.f32 %v2650, %v2758
    %v2846 = vmax.f32 %v2652, %v2760
    %v2847 = vmax.f32 %v2655, %v2762
    %v2848 = vmax.f32 %v2657, %v2764
    %v2849 = vmax.f32 %v2660, %v2766
    %v2850 = vmax.f32 %v2662, %v2768
    %v2851 = vmax.f32 %v2665, %v2770
    %v2852 = vmax.f32 %v2667, %v2772
    %v2853 = vmax.f32 %v2670, %v2774
    %v2854 = vmax.f32 %v2672, %v2776
    %v2855 = vmax.f32 %v2675, %v2778
    %v2856 = vmax.f32 %v2677, %v2780
    %v2857 = vmax.f32 %v2680, %v2782
    %v2858 = vmax.f32 %v2682, %v2784
    %v2859 = vmax.f32 %v2685, %v2786
    %v2860 = vmax.f32 %v2687, %v2788
    %v2861 = vmax.f32 %v2690, %v2790
    %v2862 = vmax.f32 %v2692, %v2792
    %v2863 = vmax.f32 %v2695, %v2794
    %v2864 = vmax.f32 %v2697, %v2796
    %v2865 = vmax.f32 %v2700, %v2798
    %v2866 = vmax.f32 %v2702, %v2800
    %v2867 = vmax.f32 %v2705, %v2802
    %v2868 = vmax.f32 %v2707, %v2804
    %v2869 = vsub.f32 %v2630, %v2837
    %v2870 = vsub.f32 %v2632, %v2838
    %v2871 = vsub.f32 %v2635, %v2839
    %v2872 = vsub.f32 %v2637, %v2840
    %v2873 = vsub.f32 %v2640, %v2841
    %v2874 = vsub.f32 %v2642, %v2842
    %v2875 = vsub.f32 %v2645, %v2843
    %v2876 = vsub.f32 %v2647, %v2844
    %v2877 = vsub.f32 %v2650, %v2845
    %v2878 = vsub.f32 %v2652, %v2846
    %v2879 = vsub.f32 %v2655, %v2847
    %v2880 = vsub.f32 %v2657, %v2848
    %v2881 = vsub.f32 %v2660, %v2849
    %v2882 = vsub.f32 %v2662, %v2850
    %v2883 = vsub.f32 %v2665, %v2851
    %v2884 = vsub.f32 %v2667, %v2852
    %v2885 = vsub.f32 %v2670, %v2853
    %v2886 = vsub.f32 %v2672, %v2854
    %v2887 = vsub.f32 %v2675, %v2855
    %v2888 = vsub.f32 %v2677, %v2856
    %v2889 = vsub.f32 %v2680, %v2857
    %v2890 = vsub.f32 %v2682, %v2858
    %v2891 = vsub.f32 %v2685, %v2859
    %v2892 = vsub.f32 %v2687, %v2860
    %v2893 = vsub.f32 %v2690, %v2861
    %v2894 = vsub.f32 %v2692, %v2862
    %v2895 = vsub.f32 %v2695, %v2863
    %v2896 = vsub.f32 %v2697, %v2864
    %v2897 = vsub.f32 %v2700, %v2865
    %v2898 = vsub.f32 %v2702, %v2866
    %v2899 = vsub.f32 %v2705, %v2867
    %v2900 = vsub.f32 %v2707, %v2868
    %v2901 = vmul.f32 %v2869, 1.442695
    %v2902 = vpow.pop %v2901
    %v2903 = vmul.f32 %v2870, 1.442695
    %v2904 = vpow.pop %v2903
    %v2905 = vmul.f32 %v2871, 1.442695
    %v2906 = vpow.pop %v2905
    %v2907 = vmul.f32 %v2872, 1.442695
    %v2908 = vpow.pop %v2907
    %v2909 = vmul.f32 %v2873, 1.442695
    %v2910 = vpow.pop %v2909
    %v2911 = vmul.f32 %v2874, 1.442695
    %v2912 = vpow.pop %v2911
    %v2913 = vmul.f32 %v2875, 1.442695
    %v2914 = vpow.pop %v2913
    %v2915 = vmul.f32 %v2876, 1.442695
    %v2916 = vpow.pop %v2915
    %v2917 = vmul.f32 %v2877, 1.442695
    %v2918 = vpow.pop %v2917
    %v2919 = vmul.f32 %v2878, 1.442695
    %v2920 = vpow.pop %v2919
    %v2921 = vmul.f32 %v2879, 1.442695
    %v2922 = vpow.pop %v2921
    %v2923 = vmul.f32 %v2880, 1.442695
    %v2924 = vpow.pop %v2923
    %v2925 = vmul.f32 %v2881, 1.442695
    %v2926 = vpow.pop %v2925
    %v2927 = vmul.f32 %v2882, 1.442695
    %v2928 = vpow.pop %v2927
    %v2929 = vmul.f32 %v2883, 1.442695
    %v2930 = vpow.pop %v2929
    %v2931 = vmul.f32 %v2884, 1.442695
    %v2932 = vpow.pop %v2931
    %v2933 = vmul.f32 %v2885, 1.442695
    %v2934 = vpow.pop %v2933
    %v2935 = vmul.f32 %v2886, 1.442695
    %v2936 = vpow.pop %v2935
    %v2937 = vmul.f32 %v2887, 1.442695
    %v2938 = vpow.pop %v2937
    %v2939 = vmul.f32 %v2888, 1.442695
    %v2940 = vpow.pop %v2939
    %v2941 = vmul.f32 %v2889, 1.442695
    %v2942 = vpow.pop %v2941
    %v2943 = vmul.f32 %v2890, 1.442695
    %v2944 = vpow.pop %v2943
    %v2945 = vmul.f32 %v2891, 1.442695
    %v2946 = vpow.pop %v2945
    %v2947 = vmul.f32 %v2892, 1.442695
    %v2948 = vpow.pop %v2947
    %v2949 = vmul.f32 %v2893, 1.442695
    %v2950 = vpow.pop %v2949
    %v2951 = vmul.f32 %v2894, 1.442695
    %v2952 = vpow.pop %v2951
    %v2953 = vmul.f32 %v2895, 1.442695
    %v2954 = vpow.pop %v2953
    %v2955 = vmul.f32 %v2896, 1.442695
    %v2956 = vpow.pop %v2955
    %v2957 = vmul.f32 %v2897, 1.442695
    %v2958 = vpow.pop %v2957
    %v2959 = vmul.f32 %v2898, 1.442695
    %v2960 = vpow.pop %v2959
    %v2961 = vmul.f32 %v2899, 1.442695
    %v2962 = vpow.pop %v2961
    %v2963 = vmul.f32 %v2900, 1.442695
    %v2964 = vpow.pop %v2963
    %2997 = vrot.lane.b32.xlu0 %v2837, 9
    %v2998 = vpop.permute.xlu0 %2997
    %2999 = vrot.lane.b32.xlu0 %v2838, 9
    %v3000 = vpop.permute.xlu0 %2999
    %3001 = vrot.lane.b32.xlu0 %v2839, 9
    %v3002 = vpop.permute.xlu0 %3001
    %3003 = vrot.lane.b32.xlu0 %v2840, 9
    %v3004 = vpop.permute.xlu0 %3003
    %3005 = vrot.lane.b32.xlu0 %v2841, 9
    %v3006 = vpop.permute.xlu0 %3005
    %3007 = vrot.lane.b32.xlu0 %v2842, 9
    %v3008 = vpop.permute.xlu0 %3007
    %3009 = vrot.lane.b32.xlu0 %v2843, 9
    %v3010 = vpop.permute.xlu0 %3009
    %3011 = vrot.lane.b32.xlu0 %v2844, 9
    %v3012 = vpop.permute.xlu0 %3011
    %3013 = vrot.lane.b32.xlu0 %v2845, 9
    %v3014 = vpop.permute.xlu0 %3013
    %3015 = vrot.lane.b32.xlu0 %v2846, 9
    %v3016 = vpop.permute.xlu0 %3015
    %3017 = vrot.lane.b32.xlu0 %v2847, 9
    %v3018 = vpop.permute.xlu0 %3017
    %3019 = vrot.lane.b32.xlu0 %v2848, 9
    %v3020 = vpop.permute.xlu0 %3019
    %3021 = vrot.lane.b32.xlu0 %v2849, 9
    %v3022 = vpop.permute.xlu0 %3021
    %3023 = vrot.lane.b32.xlu0 %v2850, 9
    %v3024 = vpop.permute.xlu0 %3023
    %3025 = vrot.lane.b32.xlu0 %v2851, 9
    %v3026 = vpop.permute.xlu0 %3025
    %3027 = vrot.lane.b32.xlu0 %v2852, 9
    %v3028 = vpop.permute.xlu0 %3027
    %3029 = vrot.lane.b32.xlu0 %v2853, 9
    %v3030 = vpop.permute.xlu0 %3029
    %3031 = vrot.lane.b32.xlu0 %v2854, 9
    %v3032 = vpop.permute.xlu0 %3031
    %3033 = vrot.lane.b32.xlu0 %v2855, 9
    %v3034 = vpop.permute.xlu0 %3033
    %3035 = vrot.lane.b32.xlu0 %v2856, 9
    %v3036 = vpop.permute.xlu0 %3035
    %3037 = vrot.lane.b32.xlu0 %v2857, 9
    %v3038 = vpop.permute.xlu0 %3037
    %3039 = vrot.lane.b32.xlu0 %v2858, 9
    %v3040 = vpop.permute.xlu0 %3039
    %3041 = vrot.lane.b32.xlu0 %v2859, 9
    %v3042 = vpop.permute.xlu0 %3041
    %3043 = vrot.lane.b32.xlu0 %v2860, 9
    %v3044 = vpop.permute.xlu0 %3043
    %3045 = vrot.lane.b32.xlu0 %v2861, 9
    %v3046 = vpop.permute.xlu0 %3045
    %3047 = vrot.lane.b32.xlu0 %v2862, 9
    %v3048 = vpop.permute.xlu0 %3047
    %3049 = vrot.lane.b32.xlu0 %v2863, 9
    %v3050 = vpop.permute.xlu0 %3049
    %3051 = vrot.lane.b32.xlu0 %v2864, 9
    %v3052 = vpop.permute.xlu0 %3051
    %3053 = vrot.lane.b32.xlu0 %v2865, 9
    %v3054 = vpop.permute.xlu0 %3053
    %3055 = vrot.lane.b32.xlu0 %v2866, 9
    %v3056 = vpop.permute.xlu0 %3055
    %3057 = vrot.lane.b32.xlu0 %v2867, 9
    %v3058 = vpop.permute.xlu0 %3057
    %3059 = vrot.lane.b32.xlu0 %v2868, 9
    %v3060 = vpop.permute.xlu0 %3059
    %v3093 = vsub.f32 %v2630, %v2998
    %v3094 = vsub.f32 %v2632, %v3000
    %v3095 = vsub.f32 %v2635, %v3002
    %v3096 = vsub.f32 %v2637, %v3004
    %v3097 = vsub.f32 %v2640, %v3006
    %v3098 = vsub.f32 %v2642, %v3008
    %v3099 = vsub.f32 %v2645, %v3010
    %v3100 = vsub.f32 %v2647, %v3012
    %v3101 = vsub.f32 %v2650, %v3014
    %v3102 = vsub.f32 %v2652, %v3016
    %v3103 = vsub.f32 %v2655, %v3018
    %v3104 = vsub.f32 %v2657, %v3020
    %v3105 = vsub.f32 %v2660, %v3022
    %v3106 = vsub.f32 %v2662, %v3024
    %v3107 = vsub.f32 %v2665, %v3026
    %v3108 = vsub.f32 %v2667, %v3028
    %v3109 = vsub.f32 %v2670, %v3030
    %v3110 = vsub.f32 %v2672, %v3032
    %v3111 = vsub.f32 %v2675, %v3034
    %v3112 = vsub.f32 %v2677, %v3036
    %v3113 = vsub.f32 %v2680, %v3038
    %v3114 = vsub.f32 %v2682, %v3040
    %v3115 = vsub.f32 %v2685, %v3042
    %v3116 = vsub.f32 %v2687, %v3044
    %v3117 = vsub.f32 %v2690, %v3046
    %v3118 = vsub.f32 %v2692, %v3048
    %v3119 = vsub.f32 %v2695, %v3050
    %v3120 = vsub.f32 %v2697, %v3052
    %v3121 = vsub.f32 %v2700, %v3054
    %v3122 = vsub.f32 %v2702, %v3056
    %v3123 = vsub.f32 %v2705, %v3058
    %v3124 = vsub.f32 %v2707, %v3060
    %v3125 = vmul.f32 %v3093, 1.442695
    %v3126 = vpow.pop %v3125
    %v3127 = vmul.f32 %v3094, 1.442695
    %v3128 = vpow.pop %v3127
    %v3129 = vmul.f32 %v3095, 1.442695
    %v3130 = vpow.pop %v3129
    %v3131 = vmul.f32 %v3096, 1.442695
    %v3132 = vpow.pop %v3131
    %v3133 = vmul.f32 %v3097, 1.442695
    %v3134 = vpow.pop %v3133
    %v3135 = vmul.f32 %v3098, 1.442695
    %v3136 = vpow.pop %v3135
    %v3137 = vmul.f32 %v3099, 1.442695
    %v3138 = vpow.pop %v3137
    %v3139 = vmul.f32 %v3100, 1.442695
    %v3140 = vpow.pop %v3139
    %v3141 = vmul.f32 %v3101, 1.442695
    %v3142 = vpow.pop %v3141
    %v3143 = vmul.f32 %v3102, 1.442695
    %v3144 = vpow.pop %v3143
    %v3145 = vmul.f32 %v3103, 1.442695
    %v3146 = vpow.pop %v3145
    %v3147 = vmul.f32 %v3104, 1.442695
    %v3148 = vpow.pop %v3147
    %v3149 = vmul.f32 %v3105, 1.442695
    %v3150 = vpow.pop %v3149
    %v3151 = vmul.f32 %v3106, 1.442695
    %v3152 = vpow.pop %v3151
    %v3153 = vmul.f32 %v3107, 1.442695
    %v3154 = vpow.pop %v3153
    %v3155 = vmul.f32 %v3108, 1.442695
    %v3156 = vpow.pop %v3155
    %v3157 = vmul.f32 %v3109, 1.442695
    %v3158 = vpow.pop %v3157
    %v3159 = vmul.f32 %v3110, 1.442695
    %v3160 = vpow.pop %v3159
    %v3161 = vmul.f32 %v3111, 1.442695
    %v3162 = vpow.pop %v3161
    %v3163 = vmul.f32 %v3112, 1.442695
    %v3164 = vpow.pop %v3163
    %v3165 = vmul.f32 %v3113, 1.442695
    %v3166 = vpow.pop %v3165
    %v3167 = vmul.f32 %v3114, 1.442695
    %v3168 = vpow.pop %v3167
    %v3169 = vmul.f32 %v3115, 1.442695
    %v3170 = vpow.pop %v3169
    %v3171 = vmul.f32 %v3116, 1.442695
    %v3172 = vpow.pop %v3171
    %v3173 = vmul.f32 %v3117, 1.442695
    %v3174 = vpow.pop %v3173
    %v3175 = vmul.f32 %v3118, 1.442695
    %v3176 = vpow.pop %v3175
    %v3177 = vmul.f32 %v3119, 1.442695
    %v3178 = vpow.pop %v3177
    %v3179 = vmul.f32 %v3120, 1.442695
    %v3180 = vpow.pop %v3179
    %v3181 = vmul.f32 %v3121, 1.442695
    %v3182 = vpow.pop %v3181
    %v3183 = vmul.f32 %v3122, 1.442695
    %v3184 = vpow.pop %v3183
    %v3185 = vmul.f32 %v3123, 1.442695
    %v3186 = vpow.pop %v3185
    %v3187 = vmul.f32 %v3124, 1.442695
    %v3188 = vpow.pop %v3187
    %3221 = vrot.lane.b32.xlu0 %v3126, 119
    %v3222 = vpop.permute.xlu0 %3221
    %3223 = vrot.lane.b32.xlu0 %v3128, 119
    %v3224 = vpop.permute.xlu0 %3223
    %3225 = vrot.lane.b32.xlu0 %v3130, 119
    %v3226 = vpop.permute.xlu0 %3225
    %3227 = vrot.lane.b32.xlu0 %v3132, 119
    %v3228 = vpop.permute.xlu0 %3227
    %3229 = vrot.lane.b32.xlu0 %v3134, 119
    %v3230 = vpop.permute.xlu0 %3229
    %3231 = vrot.lane.b32.xlu0 %v3136, 119
    %v3232 = vpop.permute.xlu0 %3231
    %3233 = vrot.lane.b32.xlu0 %v3138, 119
    %v3234 = vpop.permute.xlu0 %3233
    %3235 = vrot.lane.b32.xlu0 %v3140, 119
    %v3236 = vpop.permute.xlu0 %3235
    %3237 = vrot.lane.b32.xlu0 %v3142, 119
    %v3238 = vpop.permute.xlu0 %3237
    %3239 = vrot.lane.b32.xlu0 %v3144, 119
    %v3240 = vpop.permute.xlu0 %3239
    %3241 = vrot.lane.b32.xlu0 %v3146, 119
    %v3242 = vpop.permute.xlu0 %3241
    %3243 = vrot.lane.b32.xlu0 %v3148, 119
    %v3244 = vpop.permute.xlu0 %3243
    %3245 = vrot.lane.b32.xlu0 %v3150, 119
    %v3246 = vpop.permute.xlu0 %3245
    %3247 = vrot.lane.b32.xlu0 %v3152, 119
    %v3248 = vpop.permute.xlu0 %3247
    %3249 = vrot.lane.b32.xlu0 %v3154, 119
    %v3250 = vpop.permute.xlu0 %3249
    %3251 = vrot.lane.b32.xlu0 %v3156, 119
    %v3252 = vpop.permute.xlu0 %3251
    %3253 = vrot.lane.b32.xlu0 %v3158, 119
    %v3254 = vpop.permute.xlu0 %3253
    %3255 = vrot.lane.b32.xlu0 %v3160, 119
    %v3256 = vpop.permute.xlu0 %3255
    %3257 = vrot.lane.b32.xlu0 %v3162, 119
    %v3258 = vpop.permute.xlu0 %3257
    %3259 = vrot.lane.b32.xlu0 %v3164, 119
    %v3260 = vpop.permute.xlu0 %3259
    %3261 = vrot.lane.b32.xlu0 %v3166, 119
    %v3262 = vpop.permute.xlu0 %3261
    %3263 = vrot.lane.b32.xlu0 %v3168, 119
    %v3264 = vpop.permute.xlu0 %3263
    %3265 = vrot.lane.b32.xlu0 %v3170, 119
    %v3266 = vpop.permute.xlu0 %3265
    %3267 = vrot.lane.b32.xlu0 %v3172, 119
    %v3268 = vpop.permute.xlu0 %3267
    %3269 = vrot.lane.b32.xlu0 %v3174, 119
    %v3270 = vpop.permute.xlu0 %3269
    %3271 = vrot.lane.b32.xlu0 %v3176, 119
    %v3272 = vpop.permute.xlu0 %3271
    %3273 = vrot.lane.b32.xlu0 %v3178, 119
    %v3274 = vpop.permute.xlu0 %3273
    %3275 = vrot.lane.b32.xlu0 %v3180, 119
    %v3276 = vpop.permute.xlu0 %3275
    %3277 = vrot.lane.b32.xlu0 %v3182, 119
    %v3278 = vpop.permute.xlu0 %3277
    %3279 = vrot.lane.b32.xlu0 %v3184, 119
    %v3280 = vpop.permute.xlu0 %3279
    %3281 = vrot.lane.b32.xlu0 %v3186, 119
    %v3282 = vpop.permute.xlu0 %3281
    %3283 = vrot.lane.b32.xlu0 %v3188, 119
    %v3284 = vpop.permute.xlu0 %3283
    %v3317 = vadd.f32 %v2902, %v3222
    %v3318 = vadd.f32 %v2904, %v3224
    %v3319 = vadd.f32 %v2906, %v3226
    %v3320 = vadd.f32 %v2908, %v3228
    %v3321 = vadd.f32 %v2910, %v3230
    %v3322 = vadd.f32 %v2912, %v3232
    %v3323 = vadd.f32 %v2914, %v3234
    %v3324 = vadd.f32 %v2916, %v3236
    %v3325 = vadd.f32 %v2918, %v3238
    %v3326 = vadd.f32 %v2920, %v3240
    %v3327 = vadd.f32 %v2922, %v3242
    %v3328 = vadd.f32 %v2924, %v3244
    %v3329 = vadd.f32 %v2926, %v3246
    %v3330 = vadd.f32 %v2928, %v3248
    %v3331 = vadd.f32 %v2930, %v3250
    %v3332 = vadd.f32 %v2932, %v3252
    %v3333 = vadd.f32 %v2934, %v3254
    %v3334 = vadd.f32 %v2936, %v3256
    %v3335 = vadd.f32 %v2938, %v3258
    %v3336 = vadd.f32 %v2940, %v3260
    %v3337 = vadd.f32 %v2942, %v3262
    %v3338 = vadd.f32 %v2944, %v3264
    %v3339 = vadd.f32 %v2946, %v3266
    %v3340 = vadd.f32 %v2948, %v3268
    %v3341 = vadd.f32 %v2950, %v3270
    %v3342 = vadd.f32 %v2952, %v3272
    %v3343 = vadd.f32 %v2954, %v3274
    %v3344 = vadd.f32 %v2956, %v3276
    %v3345 = vadd.f32 %v2958, %v3278
    %v3346 = vadd.f32 %v2960, %v3280
    %v3347 = vadd.f32 %v2962, %v3282
    %v3348 = vadd.f32 %v2964, %v3284
    %v3349 = vrcp.pop %v3317
    %v3350 = vrcp.pop %v3318
    %v3351 = vrcp.pop %v3319
    %v3352 = vrcp.pop %v3320
    %v3353 = vrcp.pop %v3321
    %v3354 = vrcp.pop %v3322
    %v3355 = vrcp.pop %v3323
    %v3356 = vrcp.pop %v3324
    %v3357 = vrcp.pop %v3325
    %v3358 = vrcp.pop %v3326
    %v3359 = vrcp.pop %v3327
    %v3360 = vrcp.pop %v3328
    %v3361 = vrcp.pop %v3329
    %v3362 = vrcp.pop %v3330
    %v3363 = vrcp.pop %v3331
    %v3364 = vrcp.pop %v3332
    %v3365 = vrcp.pop %v3333
    %v3366 = vrcp.pop %v3334
    %v3367 = vrcp.pop %v3335
    %v3368 = vrcp.pop %v3336
    %v3369 = vrcp.pop %v3337
    %v3370 = vrcp.pop %v3338
    %v3371 = vrcp.pop %v3339
    %v3372 = vrcp.pop %v3340
    %v3373 = vrcp.pop %v3341
    %v3374 = vrcp.pop %v3342
    %v3375 = vrcp.pop %v3343
    %v3376 = vrcp.pop %v3344
    %v3377 = vrcp.pop %v3345
    %v3378 = vrcp.pop %v3346
    %v3379 = vrcp.pop %v3347
    %v3380 = vrcp.pop %v3348
    %v3381 = vmul.f32 %v2902, %v3349
    %v3382 = vmul.f32 %v2904, %v3350
    %v3383 = vmul.f32 %v2906, %v3351
    %v3384 = vmul.f32 %v2908, %v3352
    %v3385 = vmul.f32 %v2910, %v3353
    %v3386 = vmul.f32 %v2912, %v3354
    %v3387 = vmul.f32 %v2914, %v3355
    %v3388 = vmul.f32 %v2916, %v3356
    %v3389 = vmul.f32 %v2918, %v3357
    %v3390 = vmul.f32 %v2920, %v3358
    %v3391 = vmul.f32 %v2922, %v3359
    %v3392 = vmul.f32 %v2924, %v3360
    %v3393 = vmul.f32 %v2926, %v3361
    %v3394 = vmul.f32 %v2928, %v3362
    %v3395 = vmul.f32 %v2930, %v3363
    %v3396 = vmul.f32 %v2932, %v3364
    %v3397 = vmul.f32 %v2934, %v3365
    %v3398 = vmul.f32 %v2936, %v3366
    %v3399 = vmul.f32 %v2938, %v3367
    %v3400 = vmul.f32 %v2940, %v3368
    %v3401 = vmul.f32 %v2942, %v3369
    %v3402 = vmul.f32 %v2944, %v3370
    %v3403 = vmul.f32 %v2946, %v3371
    %v3404 = vmul.f32 %v2948, %v3372
    %v3405 = vmul.f32 %v2950, %v3373
    %v3406 = vmul.f32 %v2952, %v3374
    %v3407 = vmul.f32 %v2954, %v3375
    %v3408 = vmul.f32 %v2956, %v3376
    %v3409 = vmul.f32 %v2958, %v3377
    %v3410 = vmul.f32 %v2960, %v3378
    %v3411 = vmul.f32 %v2962, %v3379
    %v3412 = vmul.f32 %v2964, %v3380
    %3445 = vrot.lane.b32.xlu0 %v3349, 9
    %v3446 = vpop.permute.xlu0 %3445
    %3447 = vrot.lane.b32.xlu0 %v3350, 9
    %v3448 = vpop.permute.xlu0 %3447
    %3449 = vrot.lane.b32.xlu0 %v3351, 9
    %v3450 = vpop.permute.xlu0 %3449
    %3451 = vrot.lane.b32.xlu0 %v3352, 9
    %v3452 = vpop.permute.xlu0 %3451
    %3453 = vrot.lane.b32.xlu0 %v3353, 9
    %v3454 = vpop.permute.xlu0 %3453
    %3455 = vrot.lane.b32.xlu0 %v3354, 9
    %v3456 = vpop.permute.xlu0 %3455
    %3457 = vrot.lane.b32.xlu0 %v3355, 9
    %v3458 = vpop.permute.xlu0 %3457
    %3459 = vrot.lane.b32.xlu0 %v3356, 9
    %v3460 = vpop.permute.xlu0 %3459
    %3461 = vrot.lane.b32.xlu0 %v3357, 9
    %v3462 = vpop.permute.xlu0 %3461
    %3463 = vrot.lane.b32.xlu0 %v3358, 9
    %v3464 = vpop.permute.xlu0 %3463
    %3465 = vrot.lane.b32.xlu0 %v3359, 9
    %v3466 = vpop.permute.xlu0 %3465
    %3467 = vrot.lane.b32.xlu0 %v3360, 9
    %v3468 = vpop.permute.xlu0 %3467
    %3469 = vrot.lane.b32.xlu0 %v3361, 9
    %v3470 = vpop.permute.xlu0 %3469
    %3471 = vrot.lane.b32.xlu0 %v3362, 9
    %v3472 = vpop.permute.xlu0 %3471
    %3473 = vrot.lane.b32.xlu0 %v3363, 9
    %v3474 = vpop.permute.xlu0 %3473
    %3475 = vrot.lane.b32.xlu0 %v3364, 9
    %v3476 = vpop.permute.xlu0 %3475
    %3477 = vrot.lane.b32.xlu0 %v3365, 9
    %v3478 = vpop.permute.xlu0 %3477
    %3479 = vrot.lane.b32.xlu0 %v3366, 9
    %v3480 = vpop.permute.xlu0 %3479
    %3481 = vrot.lane.b32.xlu0 %v3367, 9
    %v3482 = vpop.permute.xlu0 %3481
    %3483 = vrot.lane.b32.xlu0 %v3368, 9
    %v3484 = vpop.permute.xlu0 %3483
    %3485 = vrot.lane.b32.xlu0 %v3369, 9
    %v3486 = vpop.permute.xlu0 %3485
    %3487 = vrot.lane.b32.xlu0 %v3370, 9
    %v3488 = vpop.permute.xlu0 %3487
    %3489 = vrot.lane.b32.xlu0 %v3371, 9
    %v3490 = vpop.permute.xlu0 %3489
    %3491 = vrot.lane.b32.xlu0 %v3372, 9
    %v3492 = vpop.permute.xlu0 %3491
    %3493 = vrot.lane.b32.xlu0 %v3373, 9
    %v3494 = vpop.permute.xlu0 %3493
    %3495 = vrot.lane.b32.xlu0 %v3374, 9
    %v3496 = vpop.permute.xlu0 %3495
    %3497 = vrot.lane.b32.xlu0 %v3375, 9
    %v3498 = vpop.permute.xlu0 %3497
    %3499 = vrot.lane.b32.xlu0 %v3376, 9
    %v3500 = vpop.permute.xlu0 %3499
    %3501 = vrot.lane.b32.xlu0 %v3377, 9
    %v3502 = vpop.permute.xlu0 %3501
    %3503 = vrot.lane.b32.xlu0 %v3378, 9
    %v3504 = vpop.permute.xlu0 %3503
    %3505 = vrot.lane.b32.xlu0 %v3379, 9
    %v3506 = vpop.permute.xlu0 %3505
    %3507 = vrot.lane.b32.xlu0 %v3380, 9
    %v3508 = vpop.permute.xlu0 %3507
    %v3541 = vmul.f32 %v3126, %v3446
    %v3542 = vmul.f32 %v3128, %v3448
    %v3543 = vmul.f32 %v3130, %v3450
    %v3544 = vmul.f32 %v3132, %v3452
    %v3545 = vmul.f32 %v3134, %v3454
    %v3546 = vmul.f32 %v3136, %v3456
    %v3547 = vmul.f32 %v3138, %v3458
    %v3548 = vmul.f32 %v3140, %v3460
    %v3549 = vmul.f32 %v3142, %v3462
    %v3550 = vmul.f32 %v3144, %v3464
    %v3551 = vmul.f32 %v3146, %v3466
    %v3552 = vmul.f32 %v3148, %v3468
    %v3553 = vmul.f32 %v3150, %v3470
    %v3554 = vmul.f32 %v3152, %v3472
    %v3555 = vmul.f32 %v3154, %v3474
    %v3556 = vmul.f32 %v3156, %v3476
    %v3557 = vmul.f32 %v3158, %v3478
    %v3558 = vmul.f32 %v3160, %v3480
    %v3559 = vmul.f32 %v3162, %v3482
    %v3560 = vmul.f32 %v3164, %v3484
    %v3561 = vmul.f32 %v3166, %v3486
    %v3562 = vmul.f32 %v3168, %v3488
    %v3563 = vmul.f32 %v3170, %v3490
    %v3564 = vmul.f32 %v3172, %v3492
    %v3565 = vmul.f32 %v3174, %v3494
    %v3566 = vmul.f32 %v3176, %v3496
    %v3567 = vmul.f32 %v3178, %v3498
    %v3568 = vmul.f32 %v3180, %v3500
    %v3569 = vmul.f32 %v3182, %v3502
    %v3570 = vmul.f32 %v3184, %v3504
    %v3571 = vmul.f32 %v3186, %v3506
    %v3572 = vmul.f32 %v3188, %v3508
    %vm3573 = vcmask 72704
    %v3574 = vsel %vm3573, %v3381, %v3541
    %v3575 = vsel %vm3573, %v3382, %v3542
    %v3576 = vsel %vm3573, %v3383, %v3543
    %v3577 = vsel %vm3573, %v3384, %v3544
    %v3578 = vsel %vm3573, %v3385, %v3545
    %v3579 = vsel %vm3573, %v3386, %v3546
    %v3580 = vsel %vm3573, %v3387, %v3547
    %v3581 = vsel %vm3573, %v3388, %v3548
    %v3582 = vsel %vm3573, %v3389, %v3549
    %v3583 = vsel %vm3573, %v3390, %v3550
    %v3584 = vsel %vm3573, %v3391, %v3551
    %v3585 = vsel %vm3573, %v3392, %v3552
    %v3586 = vsel %vm3573, %v3393, %v3553
    %v3587 = vsel %vm3573, %v3394, %v3554
    %v3588 = vsel %vm3573, %v3395, %v3555
    %v3589 = vsel %vm3573, %v3396, %v3556
    %v3590 = vsel %vm3573, %v3397, %v3557
    %v3591 = vsel %vm3573, %v3398, %v3558
    %v3592 = vsel %vm3573, %v3399, %v3559
    %v3593 = vsel %vm3573, %v3400, %v3560
    %v3594 = vsel %vm3573, %v3401, %v3561
    %v3595 = vsel %vm3573, %v3402, %v3562
    %v3596 = vsel %vm3573, %v3403, %v3563
    %v3597 = vsel %vm3573, %v3404, %v3564
    %v3598 = vsel %vm3573, %v3405, %v3565
    %v3599 = vsel %vm3573, %v3406, %v3566
    %v3600 = vsel %vm3573, %v3407, %v3567
    %v3601 = vsel %vm3573, %v3408, %v3568
    %v3602 = vsel %vm3573, %v3409, %v3569
    %v3603 = vsel %vm3573, %v3410, %v3570
    %v3604 = vsel %vm3573, %v3411, %v3571
    %v3605 = vsel %vm3573, %v3412, %v3572
    %vm3606 = vcmask 146432
    %v3607 = vsel %vm3606, %v3574, %v2630
    %v3608 = vsel %vm3606, %v3575, %v2632
    %v3609 = vsel %vm3606, %v3576, %v2635
    %v3610 = vsel %vm3606, %v3577, %v2637
    %v3611 = vsel %vm3606, %v3578, %v2640
    %v3612 = vsel %vm3606, %v3579, %v2642
    %v3613 = vsel %vm3606, %v3580, %v2645
    %v3614 = vsel %vm3606, %v3581, %v2647
    %v3615 = vsel %vm3606, %v3582, %v2650
    %v3616 = vsel %vm3606, %v3583, %v2652
    %v3617 = vsel %vm3606, %v3584, %v2655
    %v3618 = vsel %vm3606, %v3585, %v2657
    %v3619 = vsel %vm3606, %v3586, %v2660
    %v3620 = vsel %vm3606, %v3587, %v2662
    %v3621 = vsel %vm3606, %v3588, %v2665
    %v3622 = vsel %vm3606, %v3589, %v2667
    %v3623 = vsel %vm3606, %v3590, %v2670
    %v3624 = vsel %vm3606, %v3591, %v2672
    %v3625 = vsel %vm3606, %v3592, %v2675
    %v3626 = vsel %vm3606, %v3593, %v2677
    %v3627 = vsel %vm3606, %v3594, %v2680
    %v3628 = vsel %vm3606, %v3595, %v2682
    %v3629 = vsel %vm3606, %v3596, %v2685
    %v3630 = vsel %vm3606, %v3597, %v2687
    %v3631 = vsel %vm3606, %v3598, %v2690
    %v3632 = vsel %vm3606, %v3599, %v2692
    %v3633 = vsel %vm3606, %v3600, %v2695
    %v3634 = vsel %vm3606, %v3601, %v2697
    %v3635 = vsel %vm3606, %v3602, %v2700
    %v3636 = vsel %vm3606, %v3603, %v2702
    %v3637 = vsel %vm3606, %v3604, %v2705
    %v3638 = vsel %vm3606, %v3605, %v2707
    %3639 = vst [vmem:[#allocation5] sm:$0xff] %v3607
    %3640 = vst [vmem:[#allocation5 + $0x8] sm:$0xff] %v3608
    %3641 = vst [vmem:[#allocation5 + $0x10] sm:$0xff] %v3609
    %3642 = vst [vmem:[#allocation5 + $0x18] sm:$0xff] %v3610
    %3643 = vst [vmem:[#allocation5 + $0x20] sm:$0xff] %v3611
    %3644 = vst [vmem:[#allocation5 + $0x28] sm:$0xff] %v3612
    %3645 = vst [vmem:[#allocation5 + $0x30] sm:$0xff] %v3613
    %3646 = vst [vmem:[#allocation5 + $0x38] sm:$0xff] %v3614
    %3647 = vst [vmem:[#allocation5 + $0x40] sm:$0xff] %v3615
    %3648 = vst [vmem:[#allocation5 + $0x48] sm:$0xff] %v3616
    %3649 = vst [vmem:[#allocation5 + $0x50] sm:$0xff] %v3617
    %3650 = vst [vmem:[#allocation5 + $0x58] sm:$0xff] %v3618
    %3651 = vst [vmem:[#allocation5 + $0x60] sm:$0xff] %v3619
    %3652 = vst [vmem:[#allocation5 + $0x68] sm:$0xff] %v3620
    %3653 = vst [vmem:[#allocation5 + $0x70] sm:$0xff] %v3621
    %3654 = vst [vmem:[#allocation5 + $0x78] sm:$0xff] %v3622
    %3655 = vst [vmem:[#allocation5 + $0x80] sm:$0xff] %v3623
    %3656 = vst [vmem:[#allocation5 + $0x88] sm:$0xff] %v3624
    %3657 = vst [vmem:[#allocation5 + $0x90] sm:$0xff] %v3625
    %3658 = vst [vmem:[#allocation5 + $0x98] sm:$0xff] %v3626
    %3659 = vst [vmem:[#allocation5 + $0xa0] sm:$0xff] %v3627
    %3660 = vst [vmem:[#allocation5 + $0xa8] sm:$0xff] %v3628
    %3661 = vst [vmem:[#allocation5 + $0xb0] sm:$0xff] %v3629
    %3662 = vst [vmem:[#allocation5 + $0xb8] sm:$0xff] %v3630
    %3663 = vst [vmem:[#allocation5 + $0xc0] sm:$0xff] %v3631
    %3664 = vst [vmem:[#allocation5 + $0xc8] sm:$0xff] %v3632
    %3665 = vst [vmem:[#allocation5 + $0xd0] sm:$0xff] %v3633
    %3666 = vst [vmem:[#allocation5 + $0xd8] sm:$0xff] %v3634
    %3667 = vst [vmem:[#allocation5 + $0xe0] sm:$0xff] %v3635
    %3668 = vst [vmem:[#allocation5 + $0xe8] sm:$0xff] %v3636
    %3669 = vst [vmem:[#allocation5 + $0xf0] sm:$0xff] %v3637
    %3670 = vst [vmem:[#allocation5 + $0xf8] sm:$0xff] %v3638
    // Predicated region
    $region26: #{tpu_custom_call.1} parent=1 // pred_check
      _
    $region27: #{tpu_custom_call.1} parent=1 // pred_check_branch
      %3672 = sbr.rel (0) target = $region29
    $region28: #{tpu_custom_call.1} parent=1 // pred_region
      %3674 = vsyncadd [#allocation4], 0
      %s3675 = sshll.u32 [#allocation5], 4
      %s3676 = int_to_ptr.vmem [resolvable:$true] %s3675
      %s3677 = sshll.u32 %s5, 4
      %s3678 = int_to_ptr.hbm [resolvable:$true] %s3677
      %3683 = dma.vmem_to_hbm [thread:$0]  %s3676, 4096, %s3678, [#allocation4], 128, 128, 8
    $region29: #{tpu_custom_call.1} parent=1 // pred_fallthru
      _
    // Predicated region
    $region30: #{tpu_custom_call.1} parent=1 // pred_check
      _
    $region31: #{tpu_custom_call.1} parent=1 // pred_check_branch
      %3685 = sbr.rel (0) target = $region33
    $region32: #{tpu_custom_call.1} parent=1 // pred_region
      %3687 = dma.done [#allocation4], 4096
    $region33: #{tpu_custom_call.1} parent=1 // pred_fallthru
      _
    %3688 = vsyncpa [#allocation3], 1
    %3689 = vsyncpa [#allocation4], 1

</llo_original>
